<compile_context>
chip_gen: v7x
topology: tpu7x:2x2x1
jax: 0.10.0
libtpu: 0.0.40
codegen_flags: <defaults>
</compile_context>

<pallas_src>
import functools
import math

import jax
import jax.numpy as jnp
import numpy as np
from jax.experimental import pallas as pl
from jax.experimental.pallas import tpu as pltpu


def _ceil_to(x, m):
    return ((x + m - 1) // m) * m


# ---------------------------------------------------------------------------
# Glue: repack weights into banded / selection matrices (O(params), runs on the
# XLA side; no activation traffic).
# ---------------------------------------------------------------------------
def _make_wbig(w_hwio, w_out):
    """HWIO (3,3,Ci,Co) -> (3, (w_out+2)*Ci, w_out*Co) banded matrices.

    wbig[dy][xp*Ci + ci, x*Co + co] = w[dy, xp - x, ci, co] when 0 <= xp-x <= 2.
    Right-multiplying the padded activation slab by wbig[dy] performs all three
    dx taps and the channel contraction of one kernel row in a single matmul.
    """
    ci, co = w_hwio.shape[2], w_hwio.shape[3]
    xp_lane = w_out + 2
    xs = jnp.arange(w_out)
    mats = []
    for dy in range(3):
        t = jnp.zeros((xp_lane, w_out, ci, co), jnp.float32)
        for dx in range(3):
            t = t.at[xs + dx, xs].set(w_hwio[dy, dx])
        mats.append(jnp.transpose(t, (0, 2, 1, 3)).reshape(xp_lane * ci, w_out * co))
    return jnp.stack(mats)


def _make_sy(n, hp_out, hp_in, h_out):
    """Row repack: sy[n*hp_out + (y+1), n*hp_in + 2*y] = 1 for y in [0, h_out).

    Gathers the pooled rows of the previous layer into the zero-padded row slab
    of the next layer (pad rows come out as exact zeros)."""
    s = jnp.zeros((n * hp_out, n * hp_in), jnp.float32)
    ni = jnp.arange(n)[:, None]
    y = jnp.arange(h_out)[None, :]
    rows = (ni * hp_out + y + 1).reshape(-1)
    cols = (ni * hp_in + 2 * y).reshape(-1)
    return s.at[rows, cols].set(1.0)


def _make_sx(w_in, c, w_out):
    """Lane repack: sx[2*x*c + k, (x+1)*c + k] = 1 for x in [0, w_out), k < c."""
    s = jnp.zeros((w_in * c, (w_out + 2) * c), jnp.float32)
    x = jnp.arange(w_out)[:, None]
    k = jnp.arange(c)[None, :]
    rows = (2 * x * c + k).reshape(-1)
    cols = ((x + 1) * c + k).reshape(-1)
    return s.at[rows, cols].set(1.0)


def _make_head_mats(fw1, n, hp_in, h_pool, w_pool, c):
    """Fold the NCHW flatten + fc1 into (row-select, permuted-fc1) pairs."""
    hidden = fw1.shape[1]
    f = fw1.reshape(c, h_pool, w_pool, hidden)        # torch flatten order (C,H,W)
    sy_all, g_all = [], []
    for yo in range(h_pool):
        sy = jnp.zeros((n, n * hp_in), jnp.float32)
        sy = sy.at[jnp.arange(n), jnp.arange(n) * hp_in + 2 * yo].set(1.0)
        g = jnp.zeros((2 * w_pool, c, hidden), jnp.float32)
        for xo in range(w_pool):
            g = g.at[2 * xo].set(f[:, yo, xo, :])
        sy_all.append(sy)
        g_all.append(g.reshape(2 * w_pool * c, hidden))
    return jnp.stack(sy_all), jnp.stack(g_all)


def _prepare_operands(params, x_nchw):
    n, c0, height, width = x_nchw.shape
    conv_w = [params["cw1"], params["cw2"], params["cw3"]]
    conv_b = [params["cb1"], params["cb2"], params["cb3"]]

    hs, ws, cis, cos, hps = [], [], [], [], []
    h, w, ci = height, width, c0
    for wk in conv_w:
        co = wk.shape[-1]
        hs.append(h), ws.append(w), cis.append(ci), cos.append(co)
        hps.append(_ceil_to(h + 2, 8))                 # padded rows per image (mult. of 8)
        h, w, ci = h // 2, w // 2, co

    # Layer-1 slab: rows = n*hp1 + (y+1), lanes = (x+1)*c0 + c, zero padded.
    x_nhwc = jnp.transpose(x_nchw, (0, 2, 3, 1)).astype(jnp.float32)
    a1 = jnp.pad(x_nhwc, ((0, 0), (1, hps[0] - hs[0] - 1), (1, 1), (0, 0)))
    a1 = a1.reshape(n * hps[0], (ws[0] + 2) * cis[0])

    wbs = [_make_wbig(conv_w[l], ws[l]) for l in range(3)]
    bts = jnp.stack([jnp.tile(conv_b[l], (ws[l],)).reshape(1, ws[l] * cos[l])
                     for l in range(3)])               # (3, 1, W*Co)  -- all equal size
    ds = [jnp.eye(n * hps[l], k=1, dtype=jnp.float32) for l in range(3)]   # shift rows by +1
    esh = jnp.stack([jnp.eye(ws[l] * cos[l], k=-cos[l], dtype=jnp.float32)
                     for l in range(3)])               # shift lanes by +Co
    sy2 = _make_sy(n, hps[1], hps[0], hs[1])
    sx2 = _make_sx(ws[0], cos[0], ws[1])
    sy3 = _make_sy(n, hps[2], hps[1], hs[2])
    sx3 = _make_sx(ws[1], cos[1], ws[2])
    syh, gh = _make_head_mats(params["fw1"], n, hps[2], hs[2] // 2, ws[2] // 2, cos[2])

    return [a1, wbs[0], wbs[1], wbs[2], bts, ds[0], ds[1], ds[2], esh,
            sy2, sx2, sy3, sx3, syh, gh,
            params["fb1"].reshape(1, -1), params["fw2"], params["fb2"].reshape(1, -1)]


# ---------------------------------------------------------------------------
# The single fused kernel: 3x (conv3x3 + bias + ReLU + maxpool2) + FC head.
# ---------------------------------------------------------------------------
def _fused_cnn_kernel(a1_ref, wb1_ref, wb2_ref, wb3_ref, bts_ref,
                      d1_ref, d2_ref, d3_ref, esh_ref,
                      sy2_ref, sx2_ref, sy3_ref, sx3_ref,
                      syh_ref, gh_ref, fb1_ref, fw2_ref, fb2_ref, out_ref):
    def mm(a, b):
        return jnp.dot(a, b, preferred_element_type=jnp.float32)

    def conv_relu_pool(a, wb_ref, bias, dshift, eshift):
        # a:      (R, (W+2)*Ci)  zero-padded slab, rows = n*Hp + y_pad
        # wb_ref: (3, (W+2)*Ci, W*Co) banded conv weights, one per dy
        # bias:   (1, W*Co); dshift: (R, R) row+1 shift; eshift: (W*Co, W*Co) lane+Co shift
        a_dy1 = mm(dshift, a)                    # a_dy1[r] = a[r + 1]
        a_dy2 = mm(dshift, a_dy1)                # a_dy2[r] = a[r + 2]
        acc = mm(a, wb_ref[0]) + mm(a_dy1, wb_ref[1]) + mm(a_dy2, wb_ref[2])
        act = jnp.maximum(acc + bias, 0.0)       # single bias broadcast + ReLU
        # 2x2 max-pool: max over adjacent row pairs, then adjacent Co lane blocks.
        p = jnp.maximum(act, mm(dshift, act))
        p = jnp.maximum(p, mm(p, eshift))
        # pooled (n, yo, xo, co) now lives at [n*Hp + 2*yo, 2*xo*Co + co]
        return p

    p1 = conv_relu_pool(a1_ref[...], wb1_ref, bts_ref[0], d1_ref[...], esh_ref[0])
    a2 = mm(sy2_ref[...], mm(p1, sx2_ref[...]))          # repack -> padded layer-2 slab
    p2 = conv_relu_pool(a2, wb2_ref, bts_ref[1], d2_ref[...], esh_ref[1])
    a3 = mm(sy3_ref[...], mm(p2, sx3_ref[...]))          # repack -> padded layer-3 slab
    p3 = conv_relu_pool(a3, wb3_ref, bts_ref[2], d3_ref[...], esh_ref[2])

    # FC head: NCHW flatten + fc1 folded into per-pooled-row (select, weight) pairs.
    h = mm(mm(syh_ref[0], p3), gh_ref[0])
    for yo in range(1, syh_ref.shape[0]):
        h = h + mm(mm(syh_ref[yo], p3), gh_ref[yo])
    h = jnp.maximum(h + fb1_ref[...], 0.0)
    out_ref[...] = mm(h, fw2_ref[...]) + fb2_ref[...]    # (N, OC*H*W), lane dense (768)


def simple_cnn_forward(params, x_nchw, *, output_channels):
    n, _, height, width = x_nchw.shape
    ops = _prepare_operands(params, x_nchw)
    out = pl.pallas_call(
        _fused_cnn_kernel,
        out_shape=jax.ShapeDtypeStruct((n, params["fw2"].shape[1]), jnp.float32),
        # No grid: single invocation, every operand is a whole-array VMEM block.
        compiler_params=pltpu.CompilerParams(vmem_limit_bytes=16 * 1024 * 1024),
    )(*ops)
    return out.reshape(n, output_channels, height, width)


# ---------------------------------------------------------------------------
# Parameter init (deterministic, PyTorch-style uniform(-1/sqrt(fan_in), ...))
# ---------------------------------------------------------------------------
def init_params(key, in_channels, H, W, output_channels):
    def u(k, shape, fan_in):
        bound = 1.0 / math.sqrt(fan_in)
        return jax.random.uniform(k, shape, jnp.float32, -bound, bound)

    ks = jax.random.split(key, 10)
    p = {}
    p["cw1"] = u(ks[0], (3, 3, in_channels, 16), 9 * in_channels)   # HWIO
    p["cb1"] = u(ks[1], (16,), 9 * in_channels)
    p["cw2"] = u(ks[2], (3, 3, 16, 32), 9 * 16)
    p["cb2"] = u(ks[3], (32,), 9 * 16)
    p["cw3"] = u(ks[4], (3, 3, 32, 64), 9 * 32)
    p["cb3"] = u(ks[5], (64,), 9 * 32)
    fc1_in = 64 * (H // 8) * (W // 8)
    p["fw1"] = u(ks[6], (fc1_in, 128), fc1_in)
    p["fb1"] = u(ks[7], (128,), fc1_in)
    fc2_out = output_channels * H * W
    p["fw2"] = u(ks[8], (128, fc2_out), 128)
    p["fb2"] = u(ks[9], (fc2_out,), 128)
    return p


# ---------------------------------------------------------------------------
# Plain-JAX reference of the same forward pass (used only for validation).
# ---------------------------------------------------------------------------
def _reference_forward(params, x_nchw, *, output_channels):
    n, _, height, width = x_nchw.shape
    x = jnp.transpose(x_nchw, (0, 2, 3, 1))
    for wk, bk in (("cw1", "cb1"), ("cw2", "cb2"), ("cw3", "cb3")):
        w, b = params[wk], params[bk]
        cin, cout = w.shape[2], w.shape[3]
        _, h, wd, _ = x.shape
        xp = jnp.pad(x, ((0, 0), (1, 1), (1, 1), (0, 0)))
        taps = [xp[:, dy:dy + h, dx:dx + wd, :] for dy in range(3) for dx in range(3)]
        patches = jnp.concatenate(taps, axis=-1).reshape(n, h * wd, 9 * cin)
        y = patches @ w.reshape(9 * cin, cout) + b
        y = jnp.maximum(y, 0.0).reshape(n, h, wd, cout)
        x = y.reshape(n, h // 2, 2, wd // 2, 2, cout).max(axis=(2, 4))
    feat = jnp.transpose(x, (0, 3, 1, 2)).reshape(n, -1)        # NCHW flatten order
    h1 = jnp.maximum(feat @ params["fw1"] + params["fb1"], 0.0)
    out = h1 @ params["fw2"] + params["fb2"]
    return out.reshape(n, output_channels, height, width)


if __name__ == "__main__":
    N, C, H, W, OC = 2, 4, 16, 16, 3
    key = jax.random.PRNGKey(0)
    kx, kp = jax.random.split(key)
    x = jax.random.normal(kx, (N, C, H, W), jnp.float32)        # NCHW, like PyTorch
    params = init_params(kp, C, H, W, OC)

    fwd = jax.jit(functools.partial(simple_cnn_forward, output_channels=OC))
    out = fwd(params, x)
    jax.block_until_ready(out)
    assert out.shape == (N, OC, H, W), out.shape

    # Validate against the plain-JAX reference (tolerance covers MXU f32
    # pass-decomposition differences; an indexing bug would be O(1) off).
    ref = _reference_forward(params, x, output_channels=OC)
    np.testing.assert_allclose(np.asarray(out), np.asarray(ref), rtol=2e-2, atol=2e-2)
    print("KERNEL_OK")
</pallas_src>

<mosaic_0001>
module attributes {stable_mosaic.version = 11 : i64} {
  func.func @_fused_cnn_kernel(%arg0: memref<48x72xf32, #tpu.memory_space<vmem>>, %arg1: memref<3x72x256xf32, #tpu.memory_space<vmem>>, %arg2: memref<3x160x256xf32, #tpu.memory_space<vmem>>, %arg3: memref<3x192x256xf32, #tpu.memory_space<vmem>>, %arg4: memref<3x1x256xf32, #tpu.memory_space<vmem>>, %arg5: memref<48x48xf32, #tpu.memory_space<vmem>>, %arg6: memref<32x32xf32, #tpu.memory_space<vmem>>, %arg7: memref<16x16xf32, #tpu.memory_space<vmem>>, %arg8: memref<3x256x256xf32, #tpu.memory_space<vmem>>, %arg9: memref<32x48xf32, #tpu.memory_space<vmem>>, %arg10: memref<256x160xf32, #tpu.memory_space<vmem>>, %arg11: memref<16x32xf32, #tpu.memory_space<vmem>>, %arg12: memref<256x192xf32, #tpu.memory_space<vmem>>, %arg13: memref<2x2x16xf32, #tpu.memory_space<vmem>>, %arg14: memref<2x256x128xf32, #tpu.memory_space<vmem>>, %arg15: memref<1x128xf32, #tpu.memory_space<vmem>>, %arg16: memref<128x768xf32, #tpu.memory_space<vmem>>, %arg17: memref<1x768xf32, #tpu.memory_space<vmem>>, %arg18: memref<2x768xf32, #tpu.memory_space<vmem>>) attributes {dimension_semantics = [], scalar_prefetch = 0 : i64, scratch_operands = 0 : i64, tpu.core_type = #tpu.core_type<tc>} {
    %c0 = arith.constant 0 : index
    %c0_0 = arith.constant 0 : index
    %0 = vector.load %arg0[%c0, %c0_0] : memref<48x72xf32, #tpu.memory_space<vmem>>, vector<48x72xf32>
    %c0_1 = arith.constant 0 : index
    %c0_2 = arith.constant 0 : index
    %c0_3 = arith.constant 0 : index
    %1 = vector.load %arg4[%c0_1, %c0_2, %c0_3] : memref<3x1x256xf32, #tpu.memory_space<vmem>>, vector<1x1x256xf32>
    %2 = vector.shape_cast %1 : vector<1x1x256xf32> to vector<1x256xf32>
    %c0_4 = arith.constant 0 : index
    %c0_5 = arith.constant 0 : index
    %3 = vector.load %arg5[%c0_4, %c0_5] : memref<48x48xf32, #tpu.memory_space<vmem>>, vector<48x48xf32>
    %c0_6 = arith.constant 0 : index
    %c0_7 = arith.constant 0 : index
    %c0_8 = arith.constant 0 : index
    %4 = vector.load %arg8[%c0_6, %c0_7, %c0_8] : memref<3x256x256xf32, #tpu.memory_space<vmem>>, vector<1x256x256xf32>
    %5 = vector.shape_cast %4 : vector<1x256x256xf32> to vector<256x256xf32>
    %cst = arith.constant dense<0.000000e+00> : vector<48x72xf32>
    %6 = tpu.matmul %3, %0, %cst {dimension_numbers = #tpu.dot_dimension_numbers<[1], [0], [0], [1], [0, 0, 1, 1], [], []>} : vector<48x48xf32>, vector<48x72xf32>, vector<48x72xf32> -> vector<48x72xf32>
    %cst_9 = arith.constant dense<0.000000e+00> : vector<48x72xf32>
    %7 = tpu.matmul %3, %6, %cst_9 {dimension_numbers = #tpu.dot_dimension_numbers<[1], [0], [0], [1], [0, 0, 1, 1], [], []>} : vector<48x48xf32>, vector<48x72xf32>, vector<48x72xf32> -> vector<48x72xf32>
    %c0_10 = arith.constant 0 : index
    %c0_11 = arith.constant 0 : index
    %c0_12 = arith.constant 0 : index
    %8 = vector.load %arg1[%c0_10, %c0_11, %c0_12] : memref<3x72x256xf32, #tpu.memory_space<vmem>>, vector<1x72x256xf32>
    %9 = vector.shape_cast %8 : vector<1x72x256xf32> to vector<72x256xf32>
    %cst_13 = arith.constant dense<0.000000e+00> : vector<48x256xf32>
    %10 = tpu.matmul %0, %9, %cst_13 {dimension_numbers = #tpu.dot_dimension_numbers<[1], [0], [0], [1], [0, 0, 1, 1], [], []>} : vector<48x72xf32>, vector<72x256xf32>, vector<48x256xf32> -> vector<48x256xf32>
    %c1 = arith.constant 1 : index
    %c0_14 = arith.constant 0 : index
    %c0_15 = arith.constant 0 : index
    %11 = vector.load %arg1[%c1, %c0_14, %c0_15] : memref<3x72x256xf32, #tpu.memory_space<vmem>>, vector<1x72x256xf32>
    %12 = vector.shape_cast %11 : vector<1x72x256xf32> to vector<72x256xf32>
    %cst_16 = arith.constant dense<0.000000e+00> : vector<48x256xf32>
    %13 = tpu.matmul %6, %12, %cst_16 {dimension_numbers = #tpu.dot_dimension_numbers<[1], [0], [0], [1], [0, 0, 1, 1], [], []>} : vector<48x72xf32>, vector<72x256xf32>, vector<48x256xf32> -> vector<48x256xf32>
    %14 = arith.addf %10, %13 : vector<48x256xf32>
    %c2 = arith.constant 2 : index
    %c0_17 = arith.constant 0 : index
    %c0_18 = arith.constant 0 : index
    %15 = vector.load %arg1[%c2, %c0_17, %c0_18] : memref<3x72x256xf32, #tpu.memory_space<vmem>>, vector<1x72x256xf32>
    %16 = vector.shape_cast %15 : vector<1x72x256xf32> to vector<72x256xf32>
    %cst_19 = arith.constant dense<0.000000e+00> : vector<48x256xf32>
    %17 = tpu.matmul %7, %16, %cst_19 {dimension_numbers = #tpu.dot_dimension_numbers<[1], [0], [0], [1], [0, 0, 1, 1], [], []>} : vector<48x72xf32>, vector<72x256xf32>, vector<48x256xf32> -> vector<48x256xf32>
    %18 = arith.addf %14, %17 : vector<48x256xf32>
    %19 = vector.broadcast %2 : vector<1x256xf32> to vector<48x256xf32>
    %20 = arith.addf %18, %19 : vector<48x256xf32>
    %cst_20 = arith.constant 0.000000e+00 : f32
    %21 = vector.broadcast %cst_20 : f32 to vector<48x256xf32>
    %22 = arith.maximumf %20, %21 : vector<48x256xf32>
    %cst_21 = arith.constant dense<0.000000e+00> : vector<48x256xf32>
    %23 = tpu.matmul %3, %22, %cst_21 {dimension_numbers = #tpu.dot_dimension_numbers<[1], [0], [0], [1], [0, 0, 1, 1], [], []>} : vector<48x48xf32>, vector<48x256xf32>, vector<48x256xf32> -> vector<48x256xf32>
    %24 = arith.maximumf %22, %23 : vector<48x256xf32>
    %cst_22 = arith.constant dense<0.000000e+00> : vector<48x256xf32>
    %25 = tpu.matmul %24, %5, %cst_22 {dimension_numbers = #tpu.dot_dimension_numbers<[1], [0], [0], [1], [0, 0, 1, 1], [], []>} : vector<48x256xf32>, vector<256x256xf32>, vector<48x256xf32> -> vector<48x256xf32>
    %26 = arith.maximumf %24, %25 : vector<48x256xf32>
    %c0_23 = arith.constant 0 : index
    %c0_24 = arith.constant 0 : index
    %27 = vector.load %arg9[%c0_23, %c0_24] : memref<32x48xf32, #tpu.memory_space<vmem>>, vector<32x48xf32>
    %c0_25 = arith.constant 0 : index
    %c0_26 = arith.constant 0 : index
    %28 = vector.load %arg10[%c0_25, %c0_26] : memref<256x160xf32, #tpu.memory_space<vmem>>, vector<256x160xf32>
    %cst_27 = arith.constant dense<0.000000e+00> : vector<48x160xf32>
    %29 = tpu.matmul %26, %28, %cst_27 {dimension_numbers = #tpu.dot_dimension_numbers<[1], [0], [0], [1], [0, 0, 1, 1], [], []>} : vector<48x256xf32>, vector<256x160xf32>, vector<48x160xf32> -> vector<48x160xf32>
    %cst_28 = arith.constant dense<0.000000e+00> : vector<32x160xf32>
    %30 = tpu.matmul %27, %29, %cst_28 {dimension_numbers = #tpu.dot_dimension_numbers<[1], [0], [0], [1], [0, 0, 1, 1], [], []>} : vector<32x48xf32>, vector<48x160xf32>, vector<32x160xf32> -> vector<32x160xf32>
    %c1_29 = arith.constant 1 : index
    %c0_30 = arith.constant 0 : index
    %c0_31 = arith.constant 0 : index
    %31 = vector.load %arg4[%c1_29, %c0_30, %c0_31] : memref<3x1x256xf32, #tpu.memory_space<vmem>>, vector<1x1x256xf32>
    %32 = vector.shape_cast %31 : vector<1x1x256xf32> to vector<1x256xf32>
    %c0_32 = arith.constant 0 : index
    %c0_33 = arith.constant 0 : index
    %33 = vector.load %arg6[%c0_32, %c0_33] : memref<32x32xf32, #tpu.memory_space<vmem>>, vector<32x32xf32>
    %c1_34 = arith.constant 1 : index
    %c0_35 = arith.constant 0 : index
    %c0_36 = arith.constant 0 : index
    %34 = vector.load %arg8[%c1_34, %c0_35, %c0_36] : memref<3x256x256xf32, #tpu.memory_space<vmem>>, vector<1x256x256xf32>
    %35 = vector.shape_cast %34 : vector<1x256x256xf32> to vector<256x256xf32>
    %cst_37 = arith.constant dense<0.000000e+00> : vector<32x160xf32>
    %36 = tpu.matmul %33, %30, %cst_37 {dimension_numbers = #tpu.dot_dimension_numbers<[1], [0], [0], [1], [0, 0, 1, 1], [], []>} : vector<32x32xf32>, vector<32x160xf32>, vector<32x160xf32> -> vector<32x160xf32>
    %cst_38 = arith.constant dense<0.000000e+00> : vector<32x160xf32>
    %37 = tpu.matmul %33, %36, %cst_38 {dimension_numbers = #tpu.dot_dimension_numbers<[1], [0], [0], [1], [0, 0, 1, 1], [], []>} : vector<32x32xf32>, vector<32x160xf32>, vector<32x160xf32> -> vector<32x160xf32>
    %c0_39 = arith.constant 0 : index
    %c0_40 = arith.constant 0 : index
    %c0_41 = arith.constant 0 : index
    %38 = vector.load %arg2[%c0_39, %c0_40, %c0_41] : memref<3x160x256xf32, #tpu.memory_space<vmem>>, vector<1x160x256xf32>
    %39 = vector.shape_cast %38 : vector<1x160x256xf32> to vector<160x256xf32>
    %cst_42 = arith.constant dense<0.000000e+00> : vector<32x256xf32>
    %40 = tpu.matmul %30, %39, %cst_42 {dimension_numbers = #tpu.dot_dimension_numbers<[1], [0], [0], [1], [0, 0, 1, 1], [], []>} : vector<32x160xf32>, vector<160x256xf32>, vector<32x256xf32> -> vector<32x256xf32>
    %c1_43 = arith.constant 1 : index
    %c0_44 = arith.constant 0 : index
    %c0_45 = arith.constant 0 : index
    %41 = vector.load %arg2[%c1_43, %c0_44, %c0_45] : memref<3x160x256xf32, #tpu.memory_space<vmem>>, vector<1x160x256xf32>
    %42 = vector.shape_cast %41 : vector<1x160x256xf32> to vector<160x256xf32>
    %cst_46 = arith.constant dense<0.000000e+00> : vector<32x256xf32>
    %43 = tpu.matmul %36, %42, %cst_46 {dimension_numbers = #tpu.dot_dimension_numbers<[1], [0], [0], [1], [0, 0, 1, 1], [], []>} : vector<32x160xf32>, vector<160x256xf32>, vector<32x256xf32> -> vector<32x256xf32>
    %44 = arith.addf %40, %43 : vector<32x256xf32>
    %c2_47 = arith.constant 2 : index
    %c0_48 = arith.constant 0 : index
    %c0_49 = arith.constant 0 : index
    %45 = vector.load %arg2[%c2_47, %c0_48, %c0_49] : memref<3x160x256xf32, #tpu.memory_space<vmem>>, vector<1x160x256xf32>
    %46 = vector.shape_cast %45 : vector<1x160x256xf32> to vector<160x256xf32>
    %cst_50 = arith.constant dense<0.000000e+00> : vector<32x256xf32>
    %47 = tpu.matmul %37, %46, %cst_50 {dimension_numbers = #tpu.dot_dimension_numbers<[1], [0], [0], [1], [0, 0, 1, 1], [], []>} : vector<32x160xf32>, vector<160x256xf32>, vector<32x256xf32> -> vector<32x256xf32>
    %48 = arith.addf %44, %47 : vector<32x256xf32>
    %49 = vector.broadcast %32 : vector<1x256xf32> to vector<32x256xf32>
    %50 = arith.addf %48, %49 : vector<32x256xf32>
    %cst_51 = arith.constant 0.000000e+00 : f32
    %51 = vector.broadcast %cst_51 : f32 to vector<32x256xf32>
    %52 = arith.maximumf %50, %51 : vector<32x256xf32>
    %cst_52 = arith.constant dense<0.000000e+00> : vector<32x256xf32>
    %53 = tpu.matmul %33, %52, %cst_52 {dimension_numbers = #tpu.dot_dimension_numbers<[1], [0], [0], [1], [0, 0, 1, 1], [], []>} : vector<32x32xf32>, vector<32x256xf32>, vector<32x256xf32> -> vector<32x256xf32>
    %54 = arith.maximumf %52, %53 : vector<32x256xf32>
    %cst_53 = arith.constant dense<0.000000e+00> : vector<32x256xf32>
    %55 = tpu.matmul %54, %35, %cst_53 {dimension_numbers = #tpu.dot_dimension_numbers<[1], [0], [0], [1], [0, 0, 1, 1], [], []>} : vector<32x256xf32>, vector<256x256xf32>, vector<32x256xf32> -> vector<32x256xf32>
    %56 = arith.maximumf %54, %55 : vector<32x256xf32>
    %c0_54 = arith.constant 0 : index
    %c0_55 = arith.constant 0 : index
    %57 = vector.load %arg11[%c0_54, %c0_55] : memref<16x32xf32, #tpu.memory_space<vmem>>, vector<16x32xf32>
    %c0_56 = arith.constant 0 : index
    %c0_57 = arith.constant 0 : index
    %58 = vector.load %arg12[%c0_56, %c0_57] : memref<256x192xf32, #tpu.memory_space<vmem>>, vector<256x192xf32>
    %cst_58 = arith.constant dense<0.000000e+00> : vector<32x192xf32>
    %59 = tpu.matmul %56, %58, %cst_58 {dimension_numbers = #tpu.dot_dimension_numbers<[1], [0], [0], [1], [0, 0, 1, 1], [], []>} : vector<32x256xf32>, vector<256x192xf32>, vector<32x192xf32> -> vector<32x192xf32>
    %cst_59 = arith.constant dense<0.000000e+00> : vector<16x192xf32>
    %60 = tpu.matmul %57, %59, %cst_59 {dimension_numbers = #tpu.dot_dimension_numbers<[1], [0], [0], [1], [0, 0, 1, 1], [], []>} : vector<16x32xf32>, vector<32x192xf32>, vector<16x192xf32> -> vector<16x192xf32>
    %c2_60 = arith.constant 2 : index
    %c0_61 = arith.constant 0 : index
    %c0_62 = arith.constant 0 : index
    %61 = vector.load %arg4[%c2_60, %c0_61, %c0_62] : memref<3x1x256xf32, #tpu.memory_space<vmem>>, vector<1x1x256xf32>
    %62 = vector.shape_cast %61 : vector<1x1x256xf32> to vector<1x256xf32>
    %c0_63 = arith.constant 0 : index
    %c0_64 = arith.constant 0 : index
    %63 = vector.load %arg7[%c0_63, %c0_64] : memref<16x16xf32, #tpu.memory_space<vmem>>, vector<16x16xf32>
    %c2_65 = arith.constant 2 : index
    %c0_66 = arith.constant 0 : index
    %c0_67 = arith.constant 0 : index
    %64 = vector.load %arg8[%c2_65, %c0_66, %c0_67] : memref<3x256x256xf32, #tpu.memory_space<vmem>>, vector<1x256x256xf32>
    %65 = vector.shape_cast %64 : vector<1x256x256xf32> to vector<256x256xf32>
    %cst_68 = arith.constant dense<0.000000e+00> : vector<16x192xf32>
    %66 = tpu.matmul %63, %60, %cst_68 {dimension_numbers = #tpu.dot_dimension_numbers<[1], [0], [0], [1], [0, 0, 1, 1], [], []>} : vector<16x16xf32>, vector<16x192xf32>, vector<16x192xf32> -> vector<16x192xf32>
    %cst_69 = arith.constant dense<0.000000e+00> : vector<16x192xf32>
    %67 = tpu.matmul %63, %66, %cst_69 {dimension_numbers = #tpu.dot_dimension_numbers<[1], [0], [0], [1], [0, 0, 1, 1], [], []>} : vector<16x16xf32>, vector<16x192xf32>, vector<16x192xf32> -> vector<16x192xf32>
    %c0_70 = arith.constant 0 : index
    %c0_71 = arith.constant 0 : index
    %c0_72 = arith.constant 0 : index
    %68 = vector.load %arg3[%c0_70, %c0_71, %c0_72] : memref<3x192x256xf32, #tpu.memory_space<vmem>>, vector<1x192x256xf32>
    %69 = vector.shape_cast %68 : vector<1x192x256xf32> to vector<192x256xf32>
    %cst_73 = arith.constant dense<0.000000e+00> : vector<16x256xf32>
    %70 = tpu.matmul %60, %69, %cst_73 {dimension_numbers = #tpu.dot_dimension_numbers<[1], [0], [0], [1], [0, 0, 1, 1], [], []>} : vector<16x192xf32>, vector<192x256xf32>, vector<16x256xf32> -> vector<16x256xf32>
    %c1_74 = arith.constant 1 : index
    %c0_75 = arith.constant 0 : index
    %c0_76 = arith.constant 0 : index
    %71 = vector.load %arg3[%c1_74, %c0_75, %c0_76] : memref<3x192x256xf32, #tpu.memory_space<vmem>>, vector<1x192x256xf32>
    %72 = vector.shape_cast %71 : vector<1x192x256xf32> to vector<192x256xf32>
    %cst_77 = arith.constant dense<0.000000e+00> : vector<16x256xf32>
    %73 = tpu.matmul %66, %72, %cst_77 {dimension_numbers = #tpu.dot_dimension_numbers<[1], [0], [0], [1], [0, 0, 1, 1], [], []>} : vector<16x192xf32>, vector<192x256xf32>, vector<16x256xf32> -> vector<16x256xf32>
    %74 = arith.addf %70, %73 : vector<16x256xf32>
    %c2_78 = arith.constant 2 : index
    %c0_79 = arith.constant 0 : index
    %c0_80 = arith.constant 0 : index
    %75 = vector.load %arg3[%c2_78, %c0_79, %c0_80] : memref<3x192x256xf32, #tpu.memory_space<vmem>>, vector<1x192x256xf32>
    %76 = vector.shape_cast %75 : vector<1x192x256xf32> to vector<192x256xf32>
    %cst_81 = arith.constant dense<0.000000e+00> : vector<16x256xf32>
    %77 = tpu.matmul %67, %76, %cst_81 {dimension_numbers = #tpu.dot_dimension_numbers<[1], [0], [0], [1], [0, 0, 1, 1], [], []>} : vector<16x192xf32>, vector<192x256xf32>, vector<16x256xf32> -> vector<16x256xf32>
    %78 = arith.addf %74, %77 : vector<16x256xf32>
    %79 = vector.broadcast %62 : vector<1x256xf32> to vector<16x256xf32>
    %80 = arith.addf %78, %79 : vector<16x256xf32>
    %cst_82 = arith.constant 0.000000e+00 : f32
    %81 = vector.broadcast %cst_82 : f32 to vector<16x256xf32>
    %82 = arith.maximumf %80, %81 : vector<16x256xf32>
    %cst_83 = arith.constant dense<0.000000e+00> : vector<16x256xf32>
    %83 = tpu.matmul %63, %82, %cst_83 {dimension_numbers = #tpu.dot_dimension_numbers<[1], [0], [0], [1], [0, 0, 1, 1], [], []>} : vector<16x16xf32>, vector<16x256xf32>, vector<16x256xf32> -> vector<16x256xf32>
    %84 = arith.maximumf %82, %83 : vector<16x256xf32>
    %cst_84 = arith.constant dense<0.000000e+00> : vector<16x256xf32>
    %85 = tpu.matmul %84, %65, %cst_84 {dimension_numbers = #tpu.dot_dimension_numbers<[1], [0], [0], [1], [0, 0, 1, 1], [], []>} : vector<16x256xf32>, vector<256x256xf32>, vector<16x256xf32> -> vector<16x256xf32>
    %86 = arith.maximumf %84, %85 : vector<16x256xf32>
    %c0_85 = arith.constant 0 : index
    %c0_86 = arith.constant 0 : index
    %c0_87 = arith.constant 0 : index
    %87 = vector.load %arg13[%c0_85, %c0_86, %c0_87] : memref<2x2x16xf32, #tpu.memory_space<vmem>>, vector<1x2x16xf32>
    %88 = vector.shape_cast %87 : vector<1x2x16xf32> to vector<2x16xf32>
    %cst_88 = arith.constant dense<0.000000e+00> : vector<2x256xf32>
    %89 = tpu.matmul %88, %86, %cst_88 {dimension_numbers = #tpu.dot_dimension_numbers<[1], [0], [0], [1], [0, 0, 1, 1], [], []>} : vector<2x16xf32>, vector<16x256xf32>, vector<2x256xf32> -> vector<2x256xf32>
    %c0_89 = arith.constant 0 : index
    %c0_90 = arith.constant 0 : index
    %c0_91 = arith.constant 0 : index
    %90 = vector.load %arg14[%c0_89, %c0_90, %c0_91] : memref<2x256x128xf32, #tpu.memory_space<vmem>>, vector<1x256x128xf32>
    %91 = vector.shape_cast %90 : vector<1x256x128xf32> to vector<256x128xf32>
    %cst_92 = arith.constant dense<0.000000e+00> : vector<2x128xf32>
    %92 = tpu.matmul %89, %91, %cst_92 {dimension_numbers = #tpu.dot_dimension_numbers<[1], [0], [0], [1], [0, 0, 1, 1], [], []>} : vector<2x256xf32>, vector<256x128xf32>, vector<2x128xf32> -> vector<2x128xf32>
    %c1_93 = arith.constant 1 : index
    %c0_94 = arith.constant 0 : index
    %c0_95 = arith.constant 0 : index
    %93 = vector.load %arg13[%c1_93, %c0_94, %c0_95] : memref<2x2x16xf32, #tpu.memory_space<vmem>>, vector<1x2x16xf32>
    %94 = vector.shape_cast %93 : vector<1x2x16xf32> to vector<2x16xf32>
    %cst_96 = arith.constant dense<0.000000e+00> : vector<2x256xf32>
    %95 = tpu.matmul %94, %86, %cst_96 {dimension_numbers = #tpu.dot_dimension_numbers<[1], [0], [0], [1], [0, 0, 1, 1], [], []>} : vector<2x16xf32>, vector<16x256xf32>, vector<2x256xf32> -> vector<2x256xf32>
    %c1_97 = arith.constant 1 : index
    %c0_98 = arith.constant 0 : index
    %c0_99 = arith.constant 0 : index
    %96 = vector.load %arg14[%c1_97, %c0_98, %c0_99] : memref<2x256x128xf32, #tpu.memory_space<vmem>>, vector<1x256x128xf32>
    %97 = vector.shape_cast %96 : vector<1x256x128xf32> to vector<256x128xf32>
    %cst_100 = arith.constant dense<0.000000e+00> : vector<2x128xf32>
    %98 = tpu.matmul %95, %97, %cst_100 {dimension_numbers = #tpu.dot_dimension_numbers<[1], [0], [0], [1], [0, 0, 1, 1], [], []>} : vector<2x256xf32>, vector<256x128xf32>, vector<2x128xf32> -> vector<2x128xf32>
    %99 = arith.addf %92, %98 : vector<2x128xf32>
    %c0_101 = arith.constant 0 : index
    %c0_102 = arith.constant 0 : index
    %100 = vector.load %arg15[%c0_101, %c0_102] : memref<1x128xf32, #tpu.memory_space<vmem>>, vector<1x128xf32>
    %101 = vector.broadcast %100 : vector<1x128xf32> to vector<2x128xf32>
    %102 = arith.addf %99, %101 : vector<2x128xf32>
    %cst_103 = arith.constant 0.000000e+00 : f32
    %103 = vector.broadcast %cst_103 : f32 to vector<2x128xf32>
    %104 = arith.maximumf %102, %103 : vector<2x128xf32>
    %c0_104 = arith.constant 0 : index
    %c0_105 = arith.constant 0 : index
    %105 = vector.load %arg16[%c0_104, %c0_105] : memref<128x768xf32, #tpu.memory_space<vmem>>, vector<128x768xf32>
    %cst_106 = arith.constant dense<0.000000e+00> : vector<2x768xf32>
    %106 = tpu.matmul %104, %105, %cst_106 {dimension_numbers = #tpu.dot_dimension_numbers<[1], [0], [0], [1], [0, 0, 1, 1], [], []>} : vector<2x128xf32>, vector<128x768xf32>, vector<2x768xf32> -> vector<2x768xf32>
    %c0_107 = arith.constant 0 : index
    %c0_108 = arith.constant 0 : index
    %107 = vector.load %arg17[%c0_107, %c0_108] : memref<1x768xf32, #tpu.memory_space<vmem>>, vector<1x768xf32>
    %108 = vector.broadcast %107 : vector<1x768xf32> to vector<2x768xf32>
    %109 = arith.addf %106, %108 : vector<2x768xf32>
    %c0_109 = arith.constant 0 : index
    %c0_110 = arith.constant 0 : index
    %110 = vector.load %arg18[%c0_109, %c0_110] : memref<2x768xf32, #tpu.memory_space<vmem>>, vector<2x768xf32>
    tpu.vector_store %arg18[%c0_109, %c0_110], %109 {strides = array<i32>} : memref<2x768xf32, #tpu.memory_space<vmem>>, vector<2x768xf32>,
    return
  }
}

</mosaic_0001>

<llo_original>
// kernel: tile.18
$region0: #{tile.18}
  #allocation0 [shape = 's32[1]{0}', space=sflag, size = 0x4, scoped, tag = 'scoped memory for tile.18']
  %s0 = inlined_call_operand.vmem [shape: f32[16], index: 0, kind: input, shape index: {}]
  %s1 = inlined_call_operand.vmem [shape: f32[16,16], index: 1, kind: output, shape index: {}]
  // Predicated region
  $region2: #{tile.18} parent=0 // pred_check
    _
  $region3: #{tile.18} parent=0 // pred_check_branch
    %3 = sbr.rel (0) target = $region5
  $region4: #{tile.18} parent=0 // pred_region
    _
  $region5: #{tile.18} parent=0 // pred_fallthru
    _
  %v4 = vld [vmem:[%s0] ss:$0 sm:$0xff]
  %5 = vst [vmem:[%s1] sm:$0xff] %v4
  %s6 = scalar_lea.vmem %s1, 8
  %7 = vst [vmem:[%s6] sm:$0xff] %v4

// kernel: tile.27
$region0: #{tile.27}
  %s0 = inlined_call_operand.vmem [shape: f32[16,16], index: 0, kind: input, shape index: {}]
  %s1 = inlined_call_operand.vmem [shape: f32[1,1,256], index: 1, kind: output, shape index: {}]
  $region1: #{tile.27} parent=0
    #allocation0 [shape = 'u8[8192]{0}', space=vmem, size = 0x2000, scoped, tag = 'scoped mem for output reshape']
    %s2 = smov 3
    %v3 = vld [vmem:[%s0] ss:$8 sm:%s2]
    %vm4 = vcmask 130048
    %5 = vst.msk [vmem:[#allocation0] ss:$8 sm:$0x3] %vm4, %v3
    %s6 = scalar_lea.vmem %s0, 7
    %s7 = smov 3
    %v8 = vld [vmem:[%s6] ss:$8 sm:%s7]
    %9 = vrot.lane.b32.xlu0 %v8, 112
    %v10 = vpop.permute.xlu0 %9
    %vm11 = vcmask 1048448
    %12 = vst.msk [vmem:[#allocation0] ss:$8 sm:$0x3] %vm11, %v10
    %s13 = scalar_lea.vmem %s0, 6
    %s14 = smov 3
    %v15 = vld [vmem:[%s13] ss:$8 sm:%s14]
    %16 = vrot.lane.b32.xlu0 %v15, 96
    %v17 = vpop.permute.xlu0 %16
    %vm18 = vcmask 917248
    %19 = vst.msk [vmem:[#allocation0] ss:$8 sm:$0x3] %vm18, %v17
    %s20 = scalar_lea.vmem %s0, 5
    %s21 = smov 3
    %v22 = vld [vmem:[%s20] ss:$8 sm:%s21]
    %23 = vrot.lane.b32.xlu0 %v22, 80
    %v24 = vpop.permute.xlu0 %23
    %vm25 = vcmask 786048
    %26 = vst.msk [vmem:[#allocation0] ss:$8 sm:$0x3] %vm25, %v24
    %s27 = scalar_lea.vmem %s0, 4
    %s28 = smov 3
    %v29 = vld [vmem:[%s27] ss:$8 sm:%s28]
    %30 = vrot.lane.b32.xlu0 %v29, 64
    %v31 = vpop.permute.xlu0 %30
    %vm32 = vcmask 654848
    %33 = vst.msk [vmem:[#allocation0] ss:$8 sm:$0x3] %vm32, %v31
    %s34 = scalar_lea.vmem %s0, 3
    %s35 = smov 3
    %v36 = vld [vmem:[%s34] ss:$8 sm:%s35]
    %37 = vrot.lane.b32.xlu0 %v36, 48
    %v38 = vpop.permute.xlu0 %37
    %vm39 = vcmask 523648
    %40 = vst.msk [vmem:[#allocation0] ss:$8 sm:$0x3] %vm39, %v38
    %s41 = scalar_lea.vmem %s0, 2
    %s42 = smov 3
    %v43 = vld [vmem:[%s41] ss:$8 sm:%s42]
    %44 = vrot.lane.b32.xlu0 %v43, 32
    %v45 = vpop.permute.xlu0 %44
    %vm46 = vcmask 392448
    %47 = vst.msk [vmem:[#allocation0] ss:$8 sm:$0x3] %vm46, %v45
    %s48 = scalar_lea.vmem %s0, 1
    %s49 = smov 3
    %v50 = vld [vmem:[%s48] ss:$8 sm:%s49]
    %51 = vrot.lane.b32.xlu0 %v50, 16
    %v52 = vpop.permute.xlu0 %51
    %vm53 = vcmask 261248
    %54 = vst.msk [vmem:[#allocation0] ss:$8 sm:$0x3] %vm53, %v52
    %s56 = sshllo.u32 0, 1
    %v58 = vld [vmem:[#allocation0] sm:%s56]
    %s59 = sshllo.u32 0, 1
    %60 = vst [vmem:[%s1] sm:%s59] %v58
    %s61 = scalar_lea.vmem [#allocation0], 8
    %v62 = vld [vmem:[%s61] sm:%s56]
    %s63 = sshllo.u32 0, 1
    %s64 = scalar_lea.vmem %s1, 1
    %65 = vst [vmem:[%s64] sm:%s63] %v62

// kernel: tile.22
$region0: #{tile.22}
  #allocation0 [shape = 's32[1]{0}', space=sflag, size = 0x4, scoped, tag = 'scoped memory for tile.22']
  %s0 = inlined_call_operand.vmem [shape: f32[32], index: 0, kind: input, shape index: {}]
  %s1 = inlined_call_operand.vmem [shape: f32[8,32], index: 1, kind: output, shape index: {}]
  // Predicated region
  $region2: #{tile.22} parent=0 // pred_check
    _
  $region3: #{tile.22} parent=0 // pred_check_branch
    %3 = sbr.rel (0) target = $region5
  $region4: #{tile.22} parent=0 // pred_region
    _
  $region5: #{tile.22} parent=0 // pred_fallthru
    _
  %v4 = vld [vmem:[%s0] ss:$0 sm:$0xff]
  %5 = vst [vmem:[%s1] sm:$0xff] %v4

// kernel: tile.28
$region0: #{tile.28}
  %s0 = inlined_call_operand.vmem [shape: f32[8,32], index: 0, kind: input, shape index: {}]
  %s1 = inlined_call_operand.vmem [shape: f32[1,1,256], index: 1, kind: output, shape index: {}]
  $region1: #{tile.28} parent=0
    #allocation0 [shape = 'u8[8192]{0}', space=vmem, size = 0x2000, scoped, tag = 'scoped mem for output reshape']
    %s2 = smov 3
    %v3 = vld [vmem:[%s0] ss:$4 sm:%s2]
    %vm4 = vcmask 261120
    %5 = vst.msk [vmem:[#allocation0] ss:$8 sm:$0x3] %vm4, %v3
    %s6 = scalar_lea.vmem %s0, 3
    %s7 = smov 3
    %v8 = vld [vmem:[%s6] ss:$4 sm:%s7]
    %9 = vrot.lane.b32.xlu0 %v8, 96
    %v10 = vpop.permute.xlu0 %9
    %vm11 = vcmask 1048320
    %12 = vst.msk [vmem:[#allocation0] ss:$8 sm:$0x3] %vm11, %v10
    %s13 = scalar_lea.vmem %s0, 2
    %s14 = smov 3
    %v15 = vld [vmem:[%s13] ss:$4 sm:%s14]
    %16 = vrot.lane.b32.xlu0 %v15, 64
    %v17 = vpop.permute.xlu0 %16
    %vm18 = vcmask 785920
    %19 = vst.msk [vmem:[#allocation0] ss:$8 sm:$0x3] %vm18, %v17
    %s20 = scalar_lea.vmem %s0, 1
    %s21 = smov 3
    %v22 = vld [vmem:[%s20] ss:$4 sm:%s21]
    %23 = vrot.lane.b32.xlu0 %v22, 32
    %v24 = vpop.permute.xlu0 %23
    %vm25 = vcmask 523520
    %26 = vst.msk [vmem:[#allocation0] ss:$8 sm:$0x3] %vm25, %v24
    %s28 = sshllo.u32 0, 1
    %v30 = vld [vmem:[#allocation0] sm:%s28]
    %s31 = sshllo.u32 0, 1
    %32 = vst [vmem:[%s1] sm:%s31] %v30
    %s33 = scalar_lea.vmem [#allocation0], 8
    %v34 = vld [vmem:[%s33] sm:%s28]
    %s35 = sshllo.u32 0, 1
    %s36 = scalar_lea.vmem %s1, 1
    %37 = vst [vmem:[%s36] sm:%s35] %v34

// kernel: tile.26
$region0: #{tile.26}
  #allocation0 [shape = 's32[1]{0}', space=sflag, size = 0x4, scoped, tag = 'scoped memory for tile.26']
  %s0 = inlined_call_operand.vmem [shape: f32[64], index: 0, kind: input, shape index: {}]
  %s1 = inlined_call_operand.vmem [shape: f32[4,64], index: 1, kind: output, shape index: {}]
  // Predicated region
  $region2: #{tile.26} parent=0 // pred_check
    _
  $region3: #{tile.26} parent=0 // pred_check_branch
    %3 = sbr.rel (0) target = $region5
  $region4: #{tile.26} parent=0 // pred_region
    _
  $region5: #{tile.26} parent=0 // pred_fallthru
    _
  %v4 = vld [vmem:[%s0] ss:$0 sm:$0xff]
  %5 = vst [vmem:[%s1] sm:$0xf] %v4

// kernel: tile.29
$region0: #{tile.29}
  %s0 = inlined_call_operand.vmem [shape: f32[4,64], index: 0, kind: input, shape index: {}]
  %s1 = inlined_call_operand.vmem [shape: f32[1,1,256], index: 1, kind: output, shape index: {}]
  $region1: #{tile.29} parent=0
    #allocation0 [shape = 'u8[8192]{0}', space=vmem, size = 0x2000, scoped, tag = 'scoped mem for output reshape']
    #allocation1 [shape = 'u8[4096]{0}', space=vmem, size = 0x1000, scoped, tag = 'scoped mem for input reshape']
    %s3 = sshllo.u32 0, 4
    %v4 = vld [vmem:[%s0] sm:%s3]
    %5 = vst [vmem:[#allocation1] sm:%s3] %v4
    %s6 = smov 3
    %v7 = vld [vmem:[#allocation1] ss:$2 sm:%s6]
    %vm8 = vcmask 523264
    %9 = vst.msk [vmem:[#allocation0] ss:$8 sm:$0x3] %vm8, %v7
    %s10 = scalar_lea.vmem [#allocation1], 1
    %s11 = smov 3
    %v12 = vld [vmem:[%s10] ss:$2 sm:%s11]
    %13 = vrot.lane.b32.xlu0 %v12, 64
    %v14 = vpop.permute.xlu0 %13
    %vm15 = vcmask 1048064
    %16 = vst.msk [vmem:[#allocation0] ss:$8 sm:$0x3] %vm15, %v14
    %s18 = sshllo.u32 0, 1
    %v20 = vld [vmem:[#allocation0] sm:%s18]
    %s21 = sshllo.u32 0, 1
    %22 = vst [vmem:[%s1] sm:%s21] %v20
    %s23 = scalar_lea.vmem [#allocation0], 8
    %v24 = vld [vmem:[%s23] sm:%s18]
    %s25 = sshllo.u32 0, 1
    %s26 = scalar_lea.vmem %s1, 1
    %27 = vst [vmem:[%s26] sm:%s25] %v24

// kernel: simple_cnn_forward.1
$region0: #{simple_cnn_forward.1}
  #allocation0 [shape = 'u32[]', space=smem, size = 0x4, offset = 0x4, fixed_abs, tag = 'smem constant byte address 0x4 - core index']
  #allocation1 [shape = 'u32[144,128]{1,0:T(1,128)}', space=vmem, size = 0x12000, scoped, tag = 'internal scratch']
  %s0 = inlined_call_operand.vmem [shape: f32[48,72], index: 0, kind: input, shape index: {}]
  %s1 = inlined_call_operand.vmem [shape: f32[3,72,256], index: 1, kind: input, shape index: {}]
  %s2 = inlined_call_operand.vmem [shape: f32[3,160,256], index: 2, kind: input, shape index: {}]
  %s3 = inlined_call_operand.vmem [shape: f32[3,192,256], index: 3, kind: input, shape index: {}]
  %s4 = inlined_call_operand.vmem [shape: f32[3,1,256], index: 4, kind: input, shape index: {}]
  %s5 = inlined_call_operand.vmem [shape: f32[48,48], index: 5, kind: input, shape index: {}]
  %s6 = inlined_call_operand.vmem [shape: f32[32,32], index: 6, kind: input, shape index: {}]
  %s7 = inlined_call_operand.vmem [shape: f32[16,16], index: 7, kind: input, shape index: {}]
  %s8 = inlined_call_operand.vmem [shape: f32[3,256,256], index: 8, kind: input, shape index: {}]
  %s9 = inlined_call_operand.vmem [shape: f32[32,48], index: 9, kind: input, shape index: {}]
  %s10 = inlined_call_operand.vmem [shape: f32[256,160], index: 10, kind: input, shape index: {}]
  %s11 = inlined_call_operand.vmem [shape: f32[16,32], index: 11, kind: input, shape index: {}]
  %s12 = inlined_call_operand.vmem [shape: f32[256,192], index: 12, kind: input, shape index: {}]
  %s13 = inlined_call_operand.vmem [shape: f32[2,2,16], index: 13, kind: input, shape index: {}]
  %s14 = inlined_call_operand.vmem [shape: f32[2,256,128], index: 14, kind: input, shape index: {}]
  %s15 = inlined_call_operand.vmem [shape: f32[1,128], index: 15, kind: input, shape index: {}]
  %s16 = inlined_call_operand.vmem [shape: f32[128,768], index: 16, kind: input, shape index: {}]
  %s17 = inlined_call_operand.vmem [shape: f32[1,768], index: 17, kind: input, shape index: {}]
  %s18 = inlined_call_operand.vmem [shape: f32[2,768], index: 18, kind: output, shape index: {}]
  %s19 = sld [smem:[#allocation0]]
  $region82: #{simple_cnn_forward.1} parent=0
    _
  %s21 = ssub.s32 1, %s19
  %s22 = scalar_select 0, %s21, %s19
  // Predicated region
  $region2: #{simple_cnn_forward.1} parent=0 // pred_check
    _
  $region3: #{simple_cnn_forward.1} parent=0 // pred_check_branch
    %24 = sbr.rel (0) target = $region5
  $region4: #{simple_cnn_forward.1} parent=0 // pred_region
    _
  $region5: #{simple_cnn_forward.1} parent=0 // pred_fallthru
    _
  // Predicated region
  $region6: #{simple_cnn_forward.1} parent=0 // pred_check
    _
  $region7: #{simple_cnn_forward.1} parent=0 // pred_check_branch
    %26 = sbr.rel (0) target = $region9
  $region8: #{simple_cnn_forward.1} parent=0 // pred_region
    _
  $region9: #{simple_cnn_forward.1} parent=0 // pred_fallthru
    _
  // Predicated region
  $region10: #{simple_cnn_forward.1} parent=0 // pred_check
    _
  $region11: #{simple_cnn_forward.1} parent=0 // pred_check_branch
    %28 = sbr.rel (0) target = $region13
  $region12: #{simple_cnn_forward.1} parent=0 // pred_region
    _
  $region13: #{simple_cnn_forward.1} parent=0 // pred_fallthru
    _
  // Predicated region
  $region14: #{simple_cnn_forward.1} parent=0 // pred_check
    _
  $region15: #{simple_cnn_forward.1} parent=0 // pred_check_branch
    %30 = sbr.rel (0) target = $region17
  $region16: #{simple_cnn_forward.1} parent=0 // pred_region
    _
  $region17: #{simple_cnn_forward.1} parent=0 // pred_fallthru
    _
  // Predicated region
  $region18: #{simple_cnn_forward.1} parent=0 // pred_check
    _
  $region19: #{simple_cnn_forward.1} parent=0 // pred_check_branch
    %32 = sbr.rel (0) target = $region21
  $region20: #{simple_cnn_forward.1} parent=0 // pred_region
    _
  $region21: #{simple_cnn_forward.1} parent=0 // pred_fallthru
    _
  // Predicated region
  $region22: #{simple_cnn_forward.1} parent=0 // pred_check
    _
  $region23: #{simple_cnn_forward.1} parent=0 // pred_check_branch
    %34 = sbr.rel (0) target = $region25
  $region24: #{simple_cnn_forward.1} parent=0 // pred_region
    _
  $region25: #{simple_cnn_forward.1} parent=0 // pred_fallthru
    _
  // Predicated region
  $region26: #{simple_cnn_forward.1} parent=0 // pred_check
    _
  $region27: #{simple_cnn_forward.1} parent=0 // pred_check_branch
    %36 = sbr.rel (0) target = $region29
  $region28: #{simple_cnn_forward.1} parent=0 // pred_region
    _
  $region29: #{simple_cnn_forward.1} parent=0 // pred_fallthru
    _
  // Predicated region
  $region30: #{simple_cnn_forward.1} parent=0 // pred_check
    _
  $region31: #{simple_cnn_forward.1} parent=0 // pred_check_branch
    %38 = sbr.rel (0) target = $region33
  $region32: #{simple_cnn_forward.1} parent=0 // pred_region
    _
  $region33: #{simple_cnn_forward.1} parent=0 // pred_fallthru
    _
  // Predicated region
  $region34: #{simple_cnn_forward.1} parent=0 // pred_check
    _
  $region35: #{simple_cnn_forward.1} parent=0 // pred_check_branch
    %40 = sbr.rel (0) target = $region37
  $region36: #{simple_cnn_forward.1} parent=0 // pred_region
    _
  $region37: #{simple_cnn_forward.1} parent=0 // pred_fallthru
    _
  // Predicated region
  $region38: #{simple_cnn_forward.1} parent=0 // pred_check
    _
  $region39: #{simple_cnn_forward.1} parent=0 // pred_check_branch
    %42 = sbr.rel (0) target = $region41
  $region40: #{simple_cnn_forward.1} parent=0 // pred_region
    _
  $region41: #{simple_cnn_forward.1} parent=0 // pred_fallthru
    _
  // Predicated region
  $region42: #{simple_cnn_forward.1} parent=0 // pred_check
    _
  $region43: #{simple_cnn_forward.1} parent=0 // pred_check_branch
    %44 = sbr.rel (0) target = $region45
  $region44: #{simple_cnn_forward.1} parent=0 // pred_region
    _
  $region45: #{simple_cnn_forward.1} parent=0 // pred_fallthru
    _
  // Predicated region
  $region46: #{simple_cnn_forward.1} parent=0 // pred_check
    _
  $region47: #{simple_cnn_forward.1} parent=0 // pred_check_branch
    %46 = sbr.rel (0) target = $region49
  $region48: #{simple_cnn_forward.1} parent=0 // pred_region
    _
  $region49: #{simple_cnn_forward.1} parent=0 // pred_fallthru
    _
  // Predicated region
  $region50: #{simple_cnn_forward.1} parent=0 // pred_check
    _
  $region51: #{simple_cnn_forward.1} parent=0 // pred_check_branch
    %48 = sbr.rel (0) target = $region53
  $region52: #{simple_cnn_forward.1} parent=0 // pred_region
    _
  $region53: #{simple_cnn_forward.1} parent=0 // pred_fallthru
    _
  // Predicated region
  $region54: #{simple_cnn_forward.1} parent=0 // pred_check
    _
  $region55: #{simple_cnn_forward.1} parent=0 // pred_check_branch
    %50 = sbr.rel (0) target = $region57
  $region56: #{simple_cnn_forward.1} parent=0 // pred_region
    _
  $region57: #{simple_cnn_forward.1} parent=0 // pred_fallthru
    _
  // Predicated region
  $region58: #{simple_cnn_forward.1} parent=0 // pred_check
    _
  $region59: #{simple_cnn_forward.1} parent=0 // pred_check_branch
    %52 = sbr.rel (0) target = $region61
  $region60: #{simple_cnn_forward.1} parent=0 // pred_region
    _
  $region61: #{simple_cnn_forward.1} parent=0 // pred_fallthru
    _
  // Predicated region
  $region62: #{simple_cnn_forward.1} parent=0 // pred_check
    _
  $region63: #{simple_cnn_forward.1} parent=0 // pred_check_branch
    %54 = sbr.rel (0) target = $region65
  $region64: #{simple_cnn_forward.1} parent=0 // pred_region
    _
  $region65: #{simple_cnn_forward.1} parent=0 // pred_fallthru
    _
  // Predicated region
  $region66: #{simple_cnn_forward.1} parent=0 // pred_check
    _
  $region67: #{simple_cnn_forward.1} parent=0 // pred_check_branch
    %56 = sbr.rel (0) target = $region69
  $region68: #{simple_cnn_forward.1} parent=0 // pred_region
    _
  $region69: #{simple_cnn_forward.1} parent=0 // pred_fallthru
    _
  // Predicated region
  $region70: #{simple_cnn_forward.1} parent=0 // pred_check
    _
  $region71: #{simple_cnn_forward.1} parent=0 // pred_check_branch
    %58 = sbr.rel (0) target = $region73
  $region72: #{simple_cnn_forward.1} parent=0 // pred_region
    _
  $region73: #{simple_cnn_forward.1} parent=0 // pred_fallthru
    _
  %v59 = vld [vmem:[%s0] sm:$0xff]
  %v60 = vld [vmem:[%s0 + $0x8] sm:$0xff]
  %v61 = vld [vmem:[%s0 + $0x10] sm:$0xff]
  %v62 = vld [vmem:[%s0 + $0x18] sm:$0xff]
  %v63 = vld [vmem:[%s0 + $0x20] sm:$0xff]
  %v64 = vld [vmem:[%s0 + $0x28] sm:$0xff]
  %v65 = vld [vmem:[%s4] sm:$0x3]
  %v66 = vld [vmem:[%s5] sm:$0xff]
  %v67 = vld [vmem:[%s5 + $0x8] sm:$0xff]
  %v68 = vld [vmem:[%s5 + $0x10] sm:$0xff]
  %v69 = vld [vmem:[%s5 + $0x18] sm:$0xff]
  %v70 = vld [vmem:[%s5 + $0x20] sm:$0xff]
  %v71 = vld [vmem:[%s5 + $0x28] sm:$0xff]
  %v72 = vld [vmem:[%s8] sm:$0xff]
  %v73 = vld [vmem:[%s8 + $0x8] sm:$0xff]
  %v74 = vld [vmem:[%s8 + $0x10] sm:$0xff]
  %v75 = vld [vmem:[%s8 + $0x18] sm:$0xff]
  %v76 = vld [vmem:[%s8 + $0x20] sm:$0xff]
  %v77 = vld [vmem:[%s8 + $0x28] sm:$0xff]
  %v78 = vld [vmem:[%s8 + $0x30] sm:$0xff]
  %v79 = vld [vmem:[%s8 + $0x38] sm:$0xff]
  %v80 = vld [vmem:[%s8 + $0x40] sm:$0xff]
  %v81 = vld [vmem:[%s8 + $0x48] sm:$0xff]
  %v82 = vld [vmem:[%s8 + $0x50] sm:$0xff]
  %v83 = vld [vmem:[%s8 + $0x58] sm:$0xff]
  %v84 = vld [vmem:[%s8 + $0x60] sm:$0xff]
  %v85 = vld [vmem:[%s8 + $0x68] sm:$0xff]
  %v86 = vld [vmem:[%s8 + $0x70] sm:$0xff]
  %v87 = vld [vmem:[%s8 + $0x78] sm:$0xff]
  %v88 = vld [vmem:[%s8 + $0x80] sm:$0xff]
  %v89 = vld [vmem:[%s8 + $0x88] sm:$0xff]
  %v90 = vld [vmem:[%s8 + $0x90] sm:$0xff]
  %v91 = vld [vmem:[%s8 + $0x98] sm:$0xff]
  %v92 = vld [vmem:[%s8 + $0xa0] sm:$0xff]
  %v93 = vld [vmem:[%s8 + $0xa8] sm:$0xff]
  %v94 = vld [vmem:[%s8 + $0xb0] sm:$0xff]
  %v95 = vld [vmem:[%s8 + $0xb8] sm:$0xff]
  %v96 = vld [vmem:[%s8 + $0xc0] sm:$0xff]
  %v97 = vld [vmem:[%s8 + $0xc8] sm:$0xff]
  %v98 = vld [vmem:[%s8 + $0xd0] sm:$0xff]
  %v99 = vld [vmem:[%s8 + $0xd8] sm:$0xff]
  %v100 = vld [vmem:[%s8 + $0xe0] sm:$0xff]
  %v101 = vld [vmem:[%s8 + $0xe8] sm:$0xff]
  %v102 = vld [vmem:[%s8 + $0xf0] sm:$0xff]
  %v103 = vld [vmem:[%s8 + $0xf8] sm:$0xff]
  %v104 = vld [vmem:[%s8 + $0x100] sm:$0xff]
  %v105 = vld [vmem:[%s8 + $0x108] sm:$0xff]
  %v106 = vld [vmem:[%s8 + $0x110] sm:$0xff]
  %v107 = vld [vmem:[%s8 + $0x118] sm:$0xff]
  %v108 = vld [vmem:[%s8 + $0x120] sm:$0xff]
  %v109 = vld [vmem:[%s8 + $0x128] sm:$0xff]
  %v110 = vld [vmem:[%s8 + $0x130] sm:$0xff]
  %v111 = vld [vmem:[%s8 + $0x138] sm:$0xff]
  %v112 = vld [vmem:[%s8 + $0x140] sm:$0xff]
  %v113 = vld [vmem:[%s8 + $0x148] sm:$0xff]
  %v114 = vld [vmem:[%s8 + $0x150] sm:$0xff]
  %v115 = vld [vmem:[%s8 + $0x158] sm:$0xff]
  %v116 = vld [vmem:[%s8 + $0x160] sm:$0xff]
  %v117 = vld [vmem:[%s8 + $0x168] sm:$0xff]
  %v118 = vld [vmem:[%s8 + $0x170] sm:$0xff]
  %v119 = vld [vmem:[%s8 + $0x178] sm:$0xff]
  %v120 = vld [vmem:[%s8 + $0x180] sm:$0xff]
  %v121 = vld [vmem:[%s8 + $0x188] sm:$0xff]
  %v122 = vld [vmem:[%s8 + $0x190] sm:$0xff]
  %v123 = vld [vmem:[%s8 + $0x198] sm:$0xff]
  %v124 = vld [vmem:[%s8 + $0x1a0] sm:$0xff]
  %v125 = vld [vmem:[%s8 + $0x1a8] sm:$0xff]
  %v126 = vld [vmem:[%s8 + $0x1b0] sm:$0xff]
  %v127 = vld [vmem:[%s8 + $0x1b8] sm:$0xff]
  %v128 = vld [vmem:[%s8 + $0x1c0] sm:$0xff]
  %v129 = vld [vmem:[%s8 + $0x1c8] sm:$0xff]
  %v130 = vld [vmem:[%s8 + $0x1d0] sm:$0xff]
  %v131 = vld [vmem:[%s8 + $0x1d8] sm:$0xff]
  %v132 = vld [vmem:[%s8 + $0x1e0] sm:$0xff]
  %v133 = vld [vmem:[%s8 + $0x1e8] sm:$0xff]
  %v134 = vld [vmem:[%s8 + $0x1f0] sm:$0xff]
  %v135 = vld [vmem:[%s8 + $0x1f8] sm:$0xff]
  %vm136 = vcmask 392192
  %v138 = vsel %vm136, %v66, 0
  %v141 = vsel %vm136, %v67, 0
  %v144 = vsel %vm136, %v68, 0
  %v147 = vsel %vm136, %v69, 0
  %v150 = vsel %vm136, %v70, 0
  %v153 = vsel %vm136, %v71, 0
  %155 = vmatprep.subr.mxu0 0.0
  %156 = vmatpush1.msra.mxu0 %v59
  %157 = vmatprep.subr.mxu0 0.0
  %158 = vmatpush1.msra.mxu0 %v60
  %159 = vmatprep.subr.mxu0 0.0
  %160 = vmatpush1.msra.mxu0 %v61
  %161 = vmatprep.subr.mxu0 0.0
  %162 = vmatpush1.msra.mxu0 %v62
  %163 = vmatprep.subr.mxu0 0.0
  %164 = vmatpush1.msra.mxu0 %v63
  %165 = vmatprep.subr.mxu0 0.0
  %166 = vmatpush1.msra.mxu0 %v64
  %167 = vmatprep.subr.mxu0 0.0
  %168 = vmatpush1.msra.mxu0 0.0
  %169 = vmatprep.subr.mxu0 0.0
  %170 = vmatpush1.msra.mxu0 0.0
  %171 = vmatprep.subr.mxu0 0.0
  %172 = vmatpush1.msra.mxu0 0.0
  %173 = vmatprep.subr.mxu0 0.0
  %174 = vmatpush1.msra.mxu0 0.0
  %175 = vmatprep.subr.mxu0 0.0
  %176 = vmatpush1.msra.mxu0 0.0
  %177 = vmatprep.subr.mxu0 0.0
  %178 = vmatpush1.msra.mxu0 0.0
  %179 = vmatprep.subr.mxu0 0.0
  %180 = vmatpush1.msra.mxu0 0.0
  %181 = vmatprep.subr.mxu0 0.0
  %182 = vmatpush1.msra.mxu0 0.0
  %183 = vmatprep.subr.mxu0 0.0
  %184 = vmatpush1.msra.mxu0 0.0
  %185 = vmatprep.subr.mxu0 0.0
  %186 = vmatpush1.msra.mxu0 0.0
  %187 = vmatprep.subr.mxu0 0.0
  %188 = vmatpush1.msra.mxu0 0.0
  %189 = vmatprep.subr.mxu0 0.0
  %190 = vmatpush1.msra.mxu0 0.0
  %191 = vmatprep.subr.mxu0 0.0
  %192 = vmatpush1.msra.mxu0 0.0
  %193 = vmatprep.subr.mxu0 0.0
  %194 = vmatpush1.msra.mxu0 0.0
  %195 = vmatprep.subr.mxu0 0.0
  %196 = vmatpush1.msra.mxu0 0.0
  %197 = vmatprep.subr.mxu0 0.0
  %198 = vmatpush1.msra.mxu0 0.0
  %199 = vmatprep.subr.mxu0 0.0
  %200 = vmatpush1.msra.mxu0 0.0
  %201 = vmatprep.subr.mxu0 0.0
  %202 = vmatpush1.msra.mxu0 0.0
  %203 = vmatprep.subr.mxu0 0.0
  %204 = vmatpush1.msra.mxu0 0.0
  %205 = vmatprep.subr.mxu0 0.0
  %206 = vmatpush1.msra.mxu0 0.0
  %207 = vmatprep.subr.mxu0 0.0
  %208 = vmatpush1.msra.mxu0 0.0
  %209 = vmatprep.subr.mxu0 0.0
  %210 = vmatpush1.msra.mxu0 0.0
  %211 = vmatprep.subr.mxu0 0.0
  %212 = vmatpush1.msra.mxu0 0.0
  %213 = vmatprep.subr.mxu0 0.0
  %214 = vmatpush1.msra.mxu0 0.0
  %215 = vmatprep.subr.mxu0 0.0
  %216 = vmatpush1.msra.mxu0 0.0
  %217 = vmatprep.subr.mxu0 0.0
  %218 = vmatpush1.msra.mxu0 0.0
  %219 = vmatprep.mubr.f32.mxu0 0.0
  %220 = vmatmul.mubr.f32.gmra.mrb[0].mxu0 %v138
  %v221 = vpop.f32.mrb[0].mxu0
  %v222 = vadd.f32 0.0, %v221
  %v223 = vpop.f32.mrb[0].mxu0
  %224 = vmatprep.mubr.f32.mxu0 0.0
  %225 = vmatmul.mubr.f32.gmra.mrb[0].mxu0 %v141
  %v226 = vpop.f32.mrb[0].mxu0
  %v227 = vadd.f32 0.0, %v226
  %v228 = vpop.f32.mrb[0].mxu0
  %229 = vmatprep.mubr.f32.mxu0 0.0
  %230 = vmatmul.mubr.f32.gmra.mrb[0].mxu0 %v144
  %v231 = vpop.f32.mrb[0].mxu0
  %v232 = vadd.f32 0.0, %v231
  %v233 = vpop.f32.mrb[0].mxu0
  %234 = vmatprep.mubr.f32.mxu0 0.0
  %235 = vmatmul.mubr.f32.gmra.mrb[0].mxu0 %v147
  %v236 = vpop.f32.mrb[0].mxu0
  %v237 = vadd.f32 0.0, %v236
  %v238 = vpop.f32.mrb[0].mxu0
  %239 = vmatprep.mubr.f32.mxu0 0.0
  %240 = vmatmul.mubr.f32.gmra.mrb[0].mxu0 %v150
  %v241 = vpop.f32.mrb[0].mxu0
  %v242 = vadd.f32 0.0, %v241
  %v243 = vpop.f32.mrb[0].mxu0
  %244 = vmatprep.mubr.f32.mxu0 0.0
  %245 = vmatmul.mubr.f32.gmra.mrb[0].mxu0 %v153
  %v246 = vpop.f32.mrb[0].mxu0
  %v247 = vadd.f32 0.0, %v246
  %v248 = vpop.f32.mrb[0].mxu0
  %249 = vdwg.mxu0
  %250 = vmatprep.subr.mxu0 0.0
  %251 = vmatpush1.msra.mxu0 %v222
  %252 = vmatprep.subr.mxu0 0.0
  %253 = vmatpush1.msra.mxu0 %v227
  %254 = vmatprep.subr.mxu0 0.0
  %255 = vmatpush1.msra.mxu0 %v232
  %256 = vmatprep.subr.mxu0 0.0
  %257 = vmatpush1.msra.mxu0 %v237
  %258 = vmatprep.subr.mxu0 0.0
  %259 = vmatpush1.msra.mxu0 %v242
  %260 = vmatprep.subr.mxu0 0.0
  %261 = vmatpush1.msra.mxu0 %v247
  %262 = vmatprep.subr.mxu0 0.0
  %263 = vmatpush1.msra.mxu0 0.0
  %264 = vmatprep.subr.mxu0 0.0
  %265 = vmatpush1.msra.mxu0 0.0
  %266 = vmatprep.subr.mxu0 0.0
  %267 = vmatpush1.msra.mxu0 0.0
  %268 = vmatprep.subr.mxu0 0.0
  %269 = vmatpush1.msra.mxu0 0.0
  %270 = vmatprep.subr.mxu0 0.0
  %271 = vmatpush1.msra.mxu0 0.0
  %272 = vmatprep.subr.mxu0 0.0
  %273 = vmatpush1.msra.mxu0 0.0
  %274 = vmatprep.subr.mxu0 0.0
  %275 = vmatpush1.msra.mxu0 0.0
  %276 = vmatprep.subr.mxu0 0.0
  %277 = vmatpush1.msra.mxu0 0.0
  %278 = vmatprep.subr.mxu0 0.0
  %279 = vmatpush1.msra.mxu0 0.0
  %280 = vmatprep.subr.mxu0 0.0
  %281 = vmatpush1.msra.mxu0 0.0
  %282 = vmatprep.subr.mxu0 0.0
  %283 = vmatpush1.msra.mxu0 0.0
  %284 = vmatprep.subr.mxu0 0.0
  %285 = vmatpush1.msra.mxu0 0.0
  %286 = vmatprep.subr.mxu0 0.0
  %287 = vmatpush1.msra.mxu0 0.0
  %288 = vmatprep.subr.mxu0 0.0
  %289 = vmatpush1.msra.mxu0 0.0
  %290 = vmatprep.subr.mxu0 0.0
  %291 = vmatpush1.msra.mxu0 0.0
  %292 = vmatprep.subr.mxu0 0.0
  %293 = vmatpush1.msra.mxu0 0.0
  %294 = vmatprep.subr.mxu0 0.0
  %295 = vmatpush1.msra.mxu0 0.0
  %296 = vmatprep.subr.mxu0 0.0
  %297 = vmatpush1.msra.mxu0 0.0
  %298 = vmatprep.subr.mxu0 0.0
  %299 = vmatpush1.msra.mxu0 0.0
  %300 = vmatprep.subr.mxu0 0.0
  %301 = vmatpush1.msra.mxu0 0.0
  %302 = vmatprep.subr.mxu0 0.0
  %303 = vmatpush1.msra.mxu0 0.0
  %304 = vmatprep.subr.mxu0 0.0
  %305 = vmatpush1.msra.mxu0 0.0
  %306 = vmatprep.subr.mxu0 0.0
  %307 = vmatpush1.msra.mxu0 0.0
  %308 = vmatprep.subr.mxu0 0.0
  %309 = vmatpush1.msra.mxu0 0.0
  %310 = vmatprep.subr.mxu0 0.0
  %311 = vmatpush1.msra.mxu0 0.0
  %312 = vmatprep.subr.mxu0 0.0
  %313 = vmatpush1.msra.mxu0 0.0
  %314 = vmatprep.mubr.f32.mxu0 0.0
  %315 = vmatmul.mubr.f32.gmra.mrb[0].mxu0 %v138
  %v316 = vpop.f32.mrb[0].mxu0
  %v317 = vadd.f32 0.0, %v316
  %v318 = vpop.f32.mrb[0].mxu0
  %319 = vmatprep.mubr.f32.mxu0 0.0
  %320 = vmatmul.mubr.f32.gmra.mrb[0].mxu0 %v141
  %v321 = vpop.f32.mrb[0].mxu0
  %v322 = vadd.f32 0.0, %v321
  %v323 = vpop.f32.mrb[0].mxu0
  %324 = vmatprep.mubr.f32.mxu0 0.0
  %325 = vmatmul.mubr.f32.gmra.mrb[0].mxu0 %v144
  %v326 = vpop.f32.mrb[0].mxu0
  %v327 = vadd.f32 0.0, %v326
  %v328 = vpop.f32.mrb[0].mxu0
  %329 = vmatprep.mubr.f32.mxu0 0.0
  %330 = vmatmul.mubr.f32.gmra.mrb[0].mxu0 %v147
  %v331 = vpop.f32.mrb[0].mxu0
  %v332 = vadd.f32 0.0, %v331
  %v333 = vpop.f32.mrb[0].mxu0
  %334 = vmatprep.mubr.f32.mxu0 0.0
  %335 = vmatmul.mubr.f32.gmra.mrb[0].mxu0 %v150
  %v336 = vpop.f32.mrb[0].mxu0
  %v337 = vadd.f32 0.0, %v336
  %v338 = vpop.f32.mrb[0].mxu0
  %339 = vmatprep.mubr.f32.mxu0 0.0
  %340 = vmatmul.mubr.f32.gmra.mrb[0].mxu0 %v153
  %v341 = vpop.f32.mrb[0].mxu0
  %v342 = vadd.f32 0.0, %v341
  %v343 = vpop.f32.mrb[0].mxu0
  %344 = vdwg.mxu0
  %v345 = vld [vmem:[%s1] sm:$0xff]
  %v346 = vld [vmem:[%s1 + $0x8] sm:$0xff]
  %v347 = vld [vmem:[%s1 + $0x10] sm:$0xff]
  %v348 = vld [vmem:[%s1 + $0x18] sm:$0xff]
  %v349 = vld [vmem:[%s1 + $0x20] sm:$0xff]
  %v350 = vld [vmem:[%s1 + $0x28] sm:$0xff]
  %v351 = vld [vmem:[%s1 + $0x30] sm:$0xff]
  %v352 = vld [vmem:[%s1 + $0x38] sm:$0xff]
  %v353 = vld [vmem:[%s1 + $0x40] sm:$0xff]
  %v354 = vld [vmem:[%s1 + $0x48] sm:$0xff]
  %v355 = vld [vmem:[%s1 + $0x50] sm:$0xff]
  %v356 = vld [vmem:[%s1 + $0x58] sm:$0xff]
  %v357 = vld [vmem:[%s1 + $0x60] sm:$0xff]
  %v358 = vld [vmem:[%s1 + $0x68] sm:$0xff]
  %v359 = vld [vmem:[%s1 + $0x70] sm:$0xff]
  %v360 = vld [vmem:[%s1 + $0x78] sm:$0xff]
  %v361 = vld [vmem:[%s1 + $0x80] sm:$0xff]
  %v362 = vld [vmem:[%s1 + $0x88] sm:$0xff]
  %s363 = scalar_lea.vmem %s1, 144
  %v364 = vld [vmem:[%s363] sm:$0xff]
  %v365 = vld [vmem:[%s363 + $0x8] sm:$0xff]
  %v366 = vld [vmem:[%s363 + $0x10] sm:$0xff]
  %v367 = vld [vmem:[%s363 + $0x18] sm:$0xff]
  %v368 = vld [vmem:[%s363 + $0x20] sm:$0xff]
  %v369 = vld [vmem:[%s363 + $0x28] sm:$0xff]
  %v370 = vld [vmem:[%s363 + $0x30] sm:$0xff]
  %v371 = vld [vmem:[%s363 + $0x38] sm:$0xff]
  %v372 = vld [vmem:[%s363 + $0x40] sm:$0xff]
  %v373 = vld [vmem:[%s363 + $0x48] sm:$0xff]
  %v374 = vld [vmem:[%s363 + $0x50] sm:$0xff]
  %v375 = vld [vmem:[%s363 + $0x58] sm:$0xff]
  %v376 = vld [vmem:[%s363 + $0x60] sm:$0xff]
  %v377 = vld [vmem:[%s363 + $0x68] sm:$0xff]
  %v378 = vld [vmem:[%s363 + $0x70] sm:$0xff]
  %v379 = vld [vmem:[%s363 + $0x78] sm:$0xff]
  %v380 = vld [vmem:[%s363 + $0x80] sm:$0xff]
  %v381 = vld [vmem:[%s363 + $0x88] sm:$0xff]
  %vm382 = vcmask 588800
  %v384 = vsel %vm382, %v222, 0
  %v387 = vsel %vm382, %v227, 0
  %v390 = vsel %vm382, %v232, 0
  %v393 = vsel %vm382, %v237, 0
  %v396 = vsel %vm382, %v242, 0
  %v399 = vsel %vm382, %v247, 0
  %401 = vmatprep.subr.mxu0 %v365
  %402 = vmatpush1.msra.mxu0 %v364
  %403 = vmatprep.subr.mxu0 %v367
  %404 = vmatpush1.msra.mxu0 %v366
  %405 = vmatprep.subr.mxu0 %v369
  %406 = vmatpush1.msra.mxu0 %v368
  %407 = vmatprep.subr.mxu0 %v371
  %408 = vmatpush1.msra.mxu0 %v370
  %409 = vmatprep.subr.mxu0 %v373
  %410 = vmatpush1.msra.mxu0 %v372
  %411 = vmatprep.subr.mxu0 %v375
  %412 = vmatpush1.msra.mxu0 %v374
  %413 = vmatprep.subr.mxu0 %v377
  %414 = vmatpush1.msra.mxu0 %v376
  %415 = vmatprep.subr.mxu0 %v379
  %416 = vmatpush1.msra.mxu0 %v378
  %417 = vmatprep.subr.mxu0 %v381
  %418 = vmatpush1.msra.mxu0 %v380
  %419 = vmatprep.subr.mxu0 0.0
  %420 = vmatpush1.msra.mxu0 0.0
  %421 = vmatprep.subr.mxu0 0.0
  %422 = vmatpush1.msra.mxu0 0.0
  %423 = vmatprep.subr.mxu0 0.0
  %424 = vmatpush1.msra.mxu0 0.0
  %425 = vmatprep.subr.mxu0 0.0
  %426 = vmatpush1.msra.mxu0 0.0
  %427 = vmatprep.subr.mxu0 0.0
  %428 = vmatpush1.msra.mxu0 0.0
  %429 = vmatprep.subr.mxu0 0.0
  %430 = vmatpush1.msra.mxu0 0.0
  %431 = vmatprep.subr.mxu0 0.0
  %432 = vmatpush1.msra.mxu0 0.0
  %433 = vmatprep.subr.mxu0 0.0
  %434 = vmatpush1.msra.mxu0 0.0
  %435 = vmatprep.subr.mxu0 0.0
  %436 = vmatpush1.msra.mxu0 0.0
  %437 = vmatprep.subr.mxu0 0.0
  %438 = vmatpush1.msra.mxu0 0.0
  %439 = vmatprep.subr.mxu0 0.0
  %440 = vmatpush1.msra.mxu0 0.0
  %441 = vmatprep.subr.mxu0 0.0
  %442 = vmatpush1.msra.mxu0 0.0
  %443 = vmatprep.subr.mxu0 0.0
  %444 = vmatpush1.msra.mxu0 0.0
  %445 = vmatprep.subr.mxu0 0.0
  %446 = vmatpush1.msra.mxu0 0.0
  %447 = vmatprep.subr.mxu0 0.0
  %448 = vmatpush1.msra.mxu0 0.0
  %449 = vmatprep.subr.mxu0 0.0
  %450 = vmatpush1.msra.mxu0 0.0
  %451 = vmatprep.subr.mxu0 0.0
  %452 = vmatpush1.msra.mxu0 0.0
  %453 = vmatprep.subr.mxu0 0.0
  %454 = vmatpush1.msra.mxu0 0.0
  %455 = vmatprep.subr.mxu0 0.0
  %456 = vmatpush1.msra.mxu0 0.0
  %457 = vmatprep.subr.mxu0 0.0
  %458 = vmatpush1.msra.mxu0 0.0
  %459 = vmatprep.subr.mxu0 0.0
  %460 = vmatpush1.msra.mxu0 0.0
  %461 = vmatprep.subr.mxu0 0.0
  %462 = vmatpush1.msra.mxu0 0.0
  %463 = vmatprep.subr.mxu0 0.0
  %464 = vmatpush1.msra.mxu0 0.0
  %465 = vmatprep.mubr.f32.mxu0 0.0
  %466 = vmatmul.mubr.f32.gmra.mrb[0].mxu0 %v384
  %v467 = vpop.f32.mrb[0].mxu0
  %v468 = vadd.f32 0.0, %v467
  %v469 = vpop.f32.mrb[0].mxu0
  %v470 = vadd.f32 0.0, %v469
  %471 = vmatprep.mubr.f32.mxu0 0.0
  %472 = vmatmul.mubr.f32.gmra.mrb[0].mxu0 %v387
  %v473 = vpop.f32.mrb[0].mxu0
  %v474 = vadd.f32 0.0, %v473
  %v475 = vpop.f32.mrb[0].mxu0
  %v476 = vadd.f32 0.0, %v475
  %477 = vmatprep.mubr.f32.mxu0 0.0
  %478 = vmatmul.mubr.f32.gmra.mrb[0].mxu0 %v390
  %v479 = vpop.f32.mrb[0].mxu0
  %v480 = vadd.f32 0.0, %v479
  %v481 = vpop.f32.mrb[0].mxu0
  %v482 = vadd.f32 0.0, %v481
  %483 = vmatprep.mubr.f32.mxu0 0.0
  %484 = vmatmul.mubr.f32.gmra.mrb[0].mxu0 %v393
  %v485 = vpop.f32.mrb[0].mxu0
  %v486 = vadd.f32 0.0, %v485
  %v487 = vpop.f32.mrb[0].mxu0
  %v488 = vadd.f32 0.0, %v487
  %489 = vmatprep.mubr.f32.mxu0 0.0
  %490 = vmatmul.mubr.f32.gmra.mrb[0].mxu0 %v396
  %v491 = vpop.f32.mrb[0].mxu0
  %v492 = vadd.f32 0.0, %v491
  %v493 = vpop.f32.mrb[0].mxu0
  %v494 = vadd.f32 0.0, %v493
  %495 = vmatprep.mubr.f32.mxu0 0.0
  %496 = vmatmul.mubr.f32.gmra.mrb[0].mxu0 %v399
  %v497 = vpop.f32.mrb[0].mxu0
  %v498 = vadd.f32 0.0, %v497
  %v499 = vpop.f32.mrb[0].mxu0
  %v500 = vadd.f32 0.0, %v499
  %501 = vdwg.mxu0
  %v503 = vsel %vm382, %v59, 0
  %v506 = vsel %vm382, %v60, 0
  %v509 = vsel %vm382, %v61, 0
  %v512 = vsel %vm382, %v62, 0
  %v515 = vsel %vm382, %v63, 0
  %v518 = vsel %vm382, %v64, 0
  %520 = vmatprep.subr.mxu0 %v346
  %521 = vmatpush1.msra.mxu0 %v345
  %522 = vmatprep.subr.mxu0 %v348
  %523 = vmatpush1.msra.mxu0 %v347
  %524 = vmatprep.subr.mxu0 %v350
  %525 = vmatpush1.msra.mxu0 %v349
  %526 = vmatprep.subr.mxu0 %v352
  %527 = vmatpush1.msra.mxu0 %v351
  %528 = vmatprep.subr.mxu0 %v354
  %529 = vmatpush1.msra.mxu0 %v353
  %530 = vmatprep.subr.mxu0 %v356
  %531 = vmatpush1.msra.mxu0 %v355
  %532 = vmatprep.subr.mxu0 %v358
  %533 = vmatpush1.msra.mxu0 %v357
  %534 = vmatprep.subr.mxu0 %v360
  %535 = vmatpush1.msra.mxu0 %v359
  %536 = vmatprep.subr.mxu0 %v362
  %537 = vmatpush1.msra.mxu0 %v361
  %538 = vmatprep.subr.mxu0 0.0
  %539 = vmatpush1.msra.mxu0 0.0
  %540 = vmatprep.subr.mxu0 0.0
  %541 = vmatpush1.msra.mxu0 0.0
  %542 = vmatprep.subr.mxu0 0.0
  %543 = vmatpush1.msra.mxu0 0.0
  %544 = vmatprep.subr.mxu0 0.0
  %545 = vmatpush1.msra.mxu0 0.0
  %546 = vmatprep.subr.mxu0 0.0
  %547 = vmatpush1.msra.mxu0 0.0
  %548 = vmatprep.subr.mxu0 0.0
  %549 = vmatpush1.msra.mxu0 0.0
  %550 = vmatprep.subr.mxu0 0.0
  %551 = vmatpush1.msra.mxu0 0.0
  %552 = vmatprep.subr.mxu0 0.0
  %553 = vmatpush1.msra.mxu0 0.0
  %554 = vmatprep.subr.mxu0 0.0
  %555 = vmatpush1.msra.mxu0 0.0
  %556 = vmatprep.subr.mxu0 0.0
  %557 = vmatpush1.msra.mxu0 0.0
  %558 = vmatprep.subr.mxu0 0.0
  %559 = vmatpush1.msra.mxu0 0.0
  %560 = vmatprep.subr.mxu0 0.0
  %561 = vmatpush1.msra.mxu0 0.0
  %562 = vmatprep.subr.mxu0 0.0
  %563 = vmatpush1.msra.mxu0 0.0
  %564 = vmatprep.subr.mxu0 0.0
  %565 = vmatpush1.msra.mxu0 0.0
  %566 = vmatprep.subr.mxu0 0.0
  %567 = vmatpush1.msra.mxu0 0.0
  %568 = vmatprep.subr.mxu0 0.0
  %569 = vmatpush1.msra.mxu0 0.0
  %570 = vmatprep.subr.mxu0 0.0
  %571 = vmatpush1.msra.mxu0 0.0
  %572 = vmatprep.subr.mxu0 0.0
  %573 = vmatpush1.msra.mxu0 0.0
  %574 = vmatprep.subr.mxu0 0.0
  %575 = vmatpush1.msra.mxu0 0.0
  %576 = vmatprep.subr.mxu0 0.0
  %577 = vmatpush1.msra.mxu0 0.0
  %578 = vmatprep.subr.mxu0 0.0
  %579 = vmatpush1.msra.mxu0 0.0
  %580 = vmatprep.subr.mxu0 0.0
  %581 = vmatpush1.msra.mxu0 0.0
  %582 = vmatprep.subr.mxu0 0.0
  %583 = vmatpush1.msra.mxu0 0.0
  %584 = vmatprep.mubr.f32.mxu0 0.0
  %585 = vmatmul.mubr.f32.gmra.mrb[0].mxu0 %v503
  %v586 = vpop.f32.mrb[0].mxu0
  %v587 = vadd.f32 %v468, %v586
  %v588 = vpop.f32.mrb[0].mxu0
  %v589 = vadd.f32 %v470, %v588
  %590 = vmatprep.mubr.f32.mxu0 0.0
  %591 = vmatmul.mubr.f32.gmra.mrb[0].mxu0 %v506
  %v592 = vpop.f32.mrb[0].mxu0
  %v593 = vadd.f32 %v474, %v592
  %v594 = vpop.f32.mrb[0].mxu0
  %v595 = vadd.f32 %v476, %v594
  %596 = vmatprep.mubr.f32.mxu0 0.0
  %597 = vmatmul.mubr.f32.gmra.mrb[0].mxu0 %v509
  %v598 = vpop.f32.mrb[0].mxu0
  %v599 = vadd.f32 %v480, %v598
  %v600 = vpop.f32.mrb[0].mxu0
  %v601 = vadd.f32 %v482, %v600
  %602 = vmatprep.mubr.f32.mxu0 0.0
  %603 = vmatmul.mubr.f32.gmra.mrb[0].mxu0 %v512
  %v604 = vpop.f32.mrb[0].mxu0
  %v605 = vadd.f32 %v486, %v604
  %v606 = vpop.f32.mrb[0].mxu0
  %v607 = vadd.f32 %v488, %v606
  %608 = vmatprep.mubr.f32.mxu0 0.0
  %609 = vmatmul.mubr.f32.gmra.mrb[0].mxu0 %v515
  %v610 = vpop.f32.mrb[0].mxu0
  %v611 = vadd.f32 %v492, %v610
  %v612 = vpop.f32.mrb[0].mxu0
  %v613 = vadd.f32 %v494, %v612
  %614 = vmatprep.mubr.f32.mxu0 0.0
  %615 = vmatmul.mubr.f32.gmra.mrb[0].mxu0 %v518
  %v616 = vpop.f32.mrb[0].mxu0
  %v617 = vadd.f32 %v498, %v616
  %v618 = vpop.f32.mrb[0].mxu0
  %v619 = vadd.f32 %v500, %v618
  %620 = vdwg.mxu0
  %s621 = scalar_lea.vmem %s1, 288
  %v622 = vld [vmem:[%s621] sm:$0xff]
  %v623 = vld [vmem:[%s621 + $0x8] sm:$0xff]
  %v624 = vld [vmem:[%s621 + $0x10] sm:$0xff]
  %v625 = vld [vmem:[%s621 + $0x18] sm:$0xff]
  %v626 = vld [vmem:[%s621 + $0x20] sm:$0xff]
  %v627 = vld [vmem:[%s621 + $0x28] sm:$0xff]
  %v628 = vld [vmem:[%s621 + $0x30] sm:$0xff]
  %v629 = vld [vmem:[%s621 + $0x38] sm:$0xff]
  %v630 = vld [vmem:[%s621 + $0x40] sm:$0xff]
  %v631 = vld [vmem:[%s621 + $0x48] sm:$0xff]
  %v632 = vld [vmem:[%s621 + $0x50] sm:$0xff]
  %v633 = vld [vmem:[%s621 + $0x58] sm:$0xff]
  %v634 = vld [vmem:[%s621 + $0x60] sm:$0xff]
  %v635 = vld [vmem:[%s621 + $0x68] sm:$0xff]
  %v636 = vld [vmem:[%s621 + $0x70] sm:$0xff]
  %v637 = vld [vmem:[%s621 + $0x78] sm:$0xff]
  %v638 = vld [vmem:[%s621 + $0x80] sm:$0xff]
  %v639 = vld [vmem:[%s621 + $0x88] sm:$0xff]
  %v641 = vsel %vm382, %v317, 0
  %v644 = vsel %vm382, %v322, 0
  %v647 = vsel %vm382, %v327, 0
  %v650 = vsel %vm382, %v332, 0
  %v653 = vsel %vm382, %v337, 0
  %v656 = vsel %vm382, %v342, 0
  %658 = vmatprep.subr.mxu0 %v623
  %659 = vmatpush1.msra.mxu0 %v622
  %660 = vmatprep.subr.mxu0 %v625
  %661 = vmatpush1.msra.mxu0 %v624
  %662 = vmatprep.subr.mxu0 %v627
  %663 = vmatpush1.msra.mxu0 %v626
  %664 = vmatprep.subr.mxu0 %v629
  %665 = vmatpush1.msra.mxu0 %v628
  %666 = vmatprep.subr.mxu0 %v631
  %667 = vmatpush1.msra.mxu0 %v630
  %668 = vmatprep.subr.mxu0 %v633
  %669 = vmatpush1.msra.mxu0 %v632
  %670 = vmatprep.subr.mxu0 %v635
  %671 = vmatpush1.msra.mxu0 %v634
  %672 = vmatprep.subr.mxu0 %v637
  %673 = vmatpush1.msra.mxu0 %v636
  %674 = vmatprep.subr.mxu0 %v639
  %675 = vmatpush1.msra.mxu0 %v638
  %676 = vmatprep.subr.mxu0 0.0
  %677 = vmatpush1.msra.mxu0 0.0
  %678 = vmatprep.subr.mxu0 0.0
  %679 = vmatpush1.msra.mxu0 0.0
  %680 = vmatprep.subr.mxu0 0.0
  %681 = vmatpush1.msra.mxu0 0.0
  %682 = vmatprep.subr.mxu0 0.0
  %683 = vmatpush1.msra.mxu0 0.0
  %684 = vmatprep.subr.mxu0 0.0
  %685 = vmatpush1.msra.mxu0 0.0
  %686 = vmatprep.subr.mxu0 0.0
  %687 = vmatpush1.msra.mxu0 0.0
  %688 = vmatprep.subr.mxu0 0.0
  %689 = vmatpush1.msra.mxu0 0.0
  %690 = vmatprep.subr.mxu0 0.0
  %691 = vmatpush1.msra.mxu0 0.0
  %692 = vmatprep.subr.mxu0 0.0
  %693 = vmatpush1.msra.mxu0 0.0
  %694 = vmatprep.subr.mxu0 0.0
  %695 = vmatpush1.msra.mxu0 0.0
  %696 = vmatprep.subr.mxu0 0.0
  %697 = vmatpush1.msra.mxu0 0.0
  %698 = vmatprep.subr.mxu0 0.0
  %699 = vmatpush1.msra.mxu0 0.0
  %700 = vmatprep.subr.mxu0 0.0
  %701 = vmatpush1.msra.mxu0 0.0
  %702 = vmatprep.subr.mxu0 0.0
  %703 = vmatpush1.msra.mxu0 0.0
  %704 = vmatprep.subr.mxu0 0.0
  %705 = vmatpush1.msra.mxu0 0.0
  %706 = vmatprep.subr.mxu0 0.0
  %707 = vmatpush1.msra.mxu0 0.0
  %708 = vmatprep.subr.mxu0 0.0
  %709 = vmatpush1.msra.mxu0 0.0
  %710 = vmatprep.subr.mxu0 0.0
  %711 = vmatpush1.msra.mxu0 0.0
  %712 = vmatprep.subr.mxu0 0.0
  %713 = vmatpush1.msra.mxu0 0.0
  %714 = vmatprep.subr.mxu0 0.0
  %715 = vmatpush1.msra.mxu0 0.0
  %716 = vmatprep.subr.mxu0 0.0
  %717 = vmatpush1.msra.mxu0 0.0
  %718 = vmatprep.subr.mxu0 0.0
  %719 = vmatpush1.msra.mxu0 0.0
  %720 = vmatprep.subr.mxu0 0.0
  %721 = vmatpush1.msra.mxu0 0.0
  %722 = vmatprep.mubr.f32.mxu0 0.0
  %723 = vmatmul.mubr.f32.gmra.mrb[0].mxu0 %v641
  %v724 = vpop.f32.mrb[0].mxu0
  %v725 = vadd.f32 0.0, %v724
  %v726 = vpop.f32.mrb[0].mxu0
  %v727 = vadd.f32 0.0, %v726
  %728 = vmatprep.mubr.f32.mxu0 0.0
  %729 = vmatmul.mubr.f32.gmra.mrb[0].mxu0 %v644
  %v730 = vpop.f32.mrb[0].mxu0
  %v731 = vadd.f32 0.0, %v730
  %v732 = vpop.f32.mrb[0].mxu0
  %v733 = vadd.f32 0.0, %v732
  %734 = vmatprep.mubr.f32.mxu0 0.0
  %735 = vmatmul.mubr.f32.gmra.mrb[0].mxu0 %v647
  %v736 = vpop.f32.mrb[0].mxu0
  %v737 = vadd.f32 0.0, %v736
  %v738 = vpop.f32.mrb[0].mxu0
  %v739 = vadd.f32 0.0, %v738
  %740 = vmatprep.mubr.f32.mxu0 0.0
  %741 = vmatmul.mubr.f32.gmra.mrb[0].mxu0 %v650
  %v742 = vpop.f32.mrb[0].mxu0
  %v743 = vadd.f32 0.0, %v742
  %v744 = vpop.f32.mrb[0].mxu0
  %v745 = vadd.f32 0.0, %v744
  %746 = vmatprep.mubr.f32.mxu0 0.0
  %747 = vmatmul.mubr.f32.gmra.mrb[0].mxu0 %v653
  %v748 = vpop.f32.mrb[0].mxu0
  %v749 = vadd.f32 0.0, %v748
  %v750 = vpop.f32.mrb[0].mxu0
  %v751 = vadd.f32 0.0, %v750
  %752 = vmatprep.mubr.f32.mxu0 0.0
  %753 = vmatmul.mubr.f32.gmra.mrb[0].mxu0 %v656
  %v754 = vpop.f32.mrb[0].mxu0
  %v755 = vadd.f32 0.0, %v754
  %v756 = vpop.f32.mrb[0].mxu0
  %v757 = vadd.f32 0.0, %v756
  %758 = vdwg.mxu0
  %v759 = vadd.f32 %v587, %v725
  %v760 = vadd.f32 %v589, %v727
  %v761 = vadd.f32 %v593, %v731
  %v762 = vadd.f32 %v595, %v733
  %v763 = vadd.f32 %v599, %v737
  %v764 = vadd.f32 %v601, %v739
  %v765 = vadd.f32 %v605, %v743
  %v766 = vadd.f32 %v607, %v745
  %v767 = vadd.f32 %v611, %v749
  %v768 = vadd.f32 %v613, %v751
  %v769 = vadd.f32 %v617, %v755
  %v770 = vadd.f32 %v619, %v757
  %v772 = vlaneseq
  %v773 = vshrl.u32 %v772, 7
  %v774 = vsub.s32 0, %v773
  %v775 = vrot.slane %v65, %v774
  %v776 = vlaneseq
  %v777 = vshrl.u32 %v776, 7
  %v778 = vsub.s32 1, %v777
  %v779 = vrot.slane %v65, %v778
  %v782 = vadd.f32 %v759, %v775
  %v783 = vadd.f32 %v760, %v779
  %v784 = vadd.f32 %v761, %v775
  %v785 = vadd.f32 %v762, %v779
  %v786 = vadd.f32 %v763, %v775
  %v787 = vadd.f32 %v764, %v779
  %v788 = vadd.f32 %v765, %v775
  %v789 = vadd.f32 %v766, %v779
  %v790 = vadd.f32 %v767, %v775
  %v791 = vadd.f32 %v768, %v779
  %v792 = vadd.f32 %v769, %v775
  %v793 = vadd.f32 %v770, %v779
  %v794 = vmax.f32 %v782, 0.0
  %v795 = vmax.f32 %v783, 0.0
  %v796 = vmax.f32 %v784, 0.0
  %v797 = vmax.f32 %v785, 0.0
  %v798 = vmax.f32 %v786, 0.0
  %v799 = vmax.f32 %v787, 0.0
  %v800 = vmax.f32 %v788, 0.0
  %v801 = vmax.f32 %v789, 0.0
  %v802 = vmax.f32 %v790, 0.0
  %v803 = vmax.f32 %v791, 0.0
  %v804 = vmax.f32 %v792, 0.0
  %v805 = vmax.f32 %v793, 0.0
  %806 = vmatprep.subr.mxu0 %v795
  %807 = vmatpush1.msra.mxu0 %v794
  %808 = vmatprep.subr.mxu0 %v797
  %809 = vmatpush1.msra.mxu0 %v796
  %810 = vmatprep.subr.mxu0 %v799
  %811 = vmatpush1.msra.mxu0 %v798
  %812 = vmatprep.subr.mxu0 %v801
  %813 = vmatpush1.msra.mxu0 %v800
  %814 = vmatprep.subr.mxu0 %v803
  %815 = vmatpush1.msra.mxu0 %v802
  %816 = vmatprep.subr.mxu0 %v805
  %817 = vmatpush1.msra.mxu0 %v804
  %818 = vmatprep.subr.mxu0 0.0
  %819 = vmatpush1.msra.mxu0 0.0
  %820 = vmatprep.subr.mxu0 0.0
  %821 = vmatpush1.msra.mxu0 0.0
  %822 = vmatprep.subr.mxu0 0.0
  %823 = vmatpush1.msra.mxu0 0.0
  %824 = vmatprep.subr.mxu0 0.0
  %825 = vmatpush1.msra.mxu0 0.0
  %826 = vmatprep.subr.mxu0 0.0
  %827 = vmatpush1.msra.mxu0 0.0
  %828 = vmatprep.subr.mxu0 0.0
  %829 = vmatpush1.msra.mxu0 0.0
  %830 = vmatprep.subr.mxu0 0.0
  %831 = vmatpush1.msra.mxu0 0.0
  %832 = vmatprep.subr.mxu0 0.0
  %833 = vmatpush1.msra.mxu0 0.0
  %834 = vmatprep.subr.mxu0 0.0
  %835 = vmatpush1.msra.mxu0 0.0
  %836 = vmatprep.subr.mxu0 0.0
  %837 = vmatpush1.msra.mxu0 0.0
  %838 = vmatprep.subr.mxu0 0.0
  %839 = vmatpush1.msra.mxu0 0.0
  %840 = vmatprep.subr.mxu0 0.0
  %841 = vmatpush1.msra.mxu0 0.0
  %842 = vmatprep.subr.mxu0 0.0
  %843 = vmatpush1.msra.mxu0 0.0
  %844 = vmatprep.subr.mxu0 0.0
  %845 = vmatpush1.msra.mxu0 0.0
  %846 = vmatprep.subr.mxu0 0.0
  %847 = vmatpush1.msra.mxu0 0.0
  %848 = vmatprep.subr.mxu0 0.0
  %849 = vmatpush1.msra.mxu0 0.0
  %850 = vmatprep.subr.mxu0 0.0
  %851 = vmatpush1.msra.mxu0 0.0
  %852 = vmatprep.subr.mxu0 0.0
  %853 = vmatpush1.msra.mxu0 0.0
  %854 = vmatprep.subr.mxu0 0.0
  %855 = vmatpush1.msra.mxu0 0.0
  %856 = vmatprep.subr.mxu0 0.0
  %857 = vmatpush1.msra.mxu0 0.0
  %858 = vmatprep.subr.mxu0 0.0
  %859 = vmatpush1.msra.mxu0 0.0
  %860 = vmatprep.subr.mxu0 0.0
  %861 = vmatpush1.msra.mxu0 0.0
  %862 = vmatprep.subr.mxu0 0.0
  %863 = vmatpush1.msra.mxu0 0.0
  %864 = vmatprep.subr.mxu0 0.0
  %865 = vmatpush1.msra.mxu0 0.0
  %866 = vmatprep.subr.mxu0 0.0
  %867 = vmatpush1.msra.mxu0 0.0
  %868 = vmatprep.subr.mxu0 0.0
  %869 = vmatpush1.msra.mxu0 0.0
  %870 = vmatprep.mubr.f32.mxu0 0.0
  %871 = vmatmul.mubr.f32.gmra.mrb[0].mxu0 %v138
  %v872 = vpop.f32.mrb[0].mxu0
  %v873 = vadd.f32 0.0, %v872
  %v874 = vpop.f32.mrb[0].mxu0
  %v875 = vadd.f32 0.0, %v874
  %876 = vmatprep.mubr.f32.mxu0 0.0
  %877 = vmatmul.mubr.f32.gmra.mrb[0].mxu0 %v141
  %v878 = vpop.f32.mrb[0].mxu0
  %v879 = vadd.f32 0.0, %v878
  %v880 = vpop.f32.mrb[0].mxu0
  %v881 = vadd.f32 0.0, %v880
  %882 = vmatprep.mubr.f32.mxu0 0.0
  %883 = vmatmul.mubr.f32.gmra.mrb[0].mxu0 %v144
  %v884 = vpop.f32.mrb[0].mxu0
  %v885 = vadd.f32 0.0, %v884
  %v886 = vpop.f32.mrb[0].mxu0
  %v887 = vadd.f32 0.0, %v886
  %888 = vmatprep.mubr.f32.mxu0 0.0
  %889 = vmatmul.mubr.f32.gmra.mrb[0].mxu0 %v147
  %v890 = vpop.f32.mrb[0].mxu0
  %v891 = vadd.f32 0.0, %v890
  %v892 = vpop.f32.mrb[0].mxu0
  %v893 = vadd.f32 0.0, %v892
  %894 = vmatprep.mubr.f32.mxu0 0.0
  %895 = vmatmul.mubr.f32.gmra.mrb[0].mxu0 %v150
  %v896 = vpop.f32.mrb[0].mxu0
  %v897 = vadd.f32 0.0, %v896
  %v898 = vpop.f32.mrb[0].mxu0
  %v899 = vadd.f32 0.0, %v898
  %900 = vmatprep.mubr.f32.mxu0 0.0
  %901 = vmatmul.mubr.f32.gmra.mrb[0].mxu0 %v153
  %v902 = vpop.f32.mrb[0].mxu0
  %v903 = vadd.f32 0.0, %v902
  %v904 = vpop.f32.mrb[0].mxu0
  %v905 = vadd.f32 0.0, %v904
  %906 = vdwg.mxu0
  %v907 = vmax.f32 %v794, %v873
  %v908 = vmax.f32 %v795, %v875
  %v909 = vmax.f32 %v796, %v879
  %v910 = vmax.f32 %v797, %v881
  %v911 = vmax.f32 %v798, %v885
  %v912 = vmax.f32 %v799, %v887
  %v913 = vmax.f32 %v800, %v891
  %v914 = vmax.f32 %v801, %v893
  %v915 = vmax.f32 %v802, %v897
  %v916 = vmax.f32 %v803, %v899
  %v917 = vmax.f32 %v804, %v903
  %v918 = vmax.f32 %v805, %v905
  %919 = vmatprep.subr.mxu0 %v73
  %920 = vmatpush1.msra.mxu0 %v72
  %921 = vmatprep.subr.mxu0 %v75
  %922 = vmatpush1.msra.mxu0 %v74
  %923 = vmatprep.subr.mxu0 %v77
  %924 = vmatpush1.msra.mxu0 %v76
  %925 = vmatprep.subr.mxu0 %v79
  %926 = vmatpush1.msra.mxu0 %v78
  %927 = vmatprep.subr.mxu0 %v81
  %928 = vmatpush1.msra.mxu0 %v80
  %929 = vmatprep.subr.mxu0 %v83
  %930 = vmatpush1.msra.mxu0 %v82
  %931 = vmatprep.subr.mxu0 %v85
  %932 = vmatpush1.msra.mxu0 %v84
  %933 = vmatprep.subr.mxu0 %v87
  %934 = vmatpush1.msra.mxu0 %v86
  %935 = vmatprep.subr.mxu0 %v89
  %936 = vmatpush1.msra.mxu0 %v88
  %937 = vmatprep.subr.mxu0 %v91
  %938 = vmatpush1.msra.mxu0 %v90
  %939 = vmatprep.subr.mxu0 %v93
  %940 = vmatpush1.msra.mxu0 %v92
  %941 = vmatprep.subr.mxu0 %v95
  %942 = vmatpush1.msra.mxu0 %v94
  %943 = vmatprep.subr.mxu0 %v97
  %944 = vmatpush1.msra.mxu0 %v96
  %945 = vmatprep.subr.mxu0 %v99
  %946 = vmatpush1.msra.mxu0 %v98
  %947 = vmatprep.subr.mxu0 %v101
  %948 = vmatpush1.msra.mxu0 %v100
  %949 = vmatprep.subr.mxu0 %v103
  %950 = vmatpush1.msra.mxu0 %v102
  %951 = vmatprep.subr.mxu0 %v105
  %952 = vmatpush1.msra.mxu0 %v104
  %953 = vmatprep.subr.mxu0 %v107
  %954 = vmatpush1.msra.mxu0 %v106
  %955 = vmatprep.subr.mxu0 %v109
  %956 = vmatpush1.msra.mxu0 %v108
  %957 = vmatprep.subr.mxu0 %v111
  %958 = vmatpush1.msra.mxu0 %v110
  %959 = vmatprep.subr.mxu0 %v113
  %960 = vmatpush1.msra.mxu0 %v112
  %961 = vmatprep.subr.mxu0 %v115
  %962 = vmatpush1.msra.mxu0 %v114
  %963 = vmatprep.subr.mxu0 %v117
  %964 = vmatpush1.msra.mxu0 %v116
  %965 = vmatprep.subr.mxu0 %v119
  %966 = vmatpush1.msra.mxu0 %v118
  %967 = vmatprep.subr.mxu0 %v121
  %968 = vmatpush1.msra.mxu0 %v120
  %969 = vmatprep.subr.mxu0 %v123
  %970 = vmatpush1.msra.mxu0 %v122
  %971 = vmatprep.subr.mxu0 %v125
  %972 = vmatpush1.msra.mxu0 %v124
  %973 = vmatprep.subr.mxu0 %v127
  %974 = vmatpush1.msra.mxu0 %v126
  %975 = vmatprep.subr.mxu0 %v129
  %976 = vmatpush1.msra.mxu0 %v128
  %977 = vmatprep.subr.mxu0 %v131
  %978 = vmatpush1.msra.mxu0 %v130
  %979 = vmatprep.subr.mxu0 %v133
  %980 = vmatpush1.msra.mxu0 %v132
  %981 = vmatprep.subr.mxu0 %v135
  %982 = vmatpush1.msra.mxu0 %v134
  %983 = vmatprep.mubr.f32.mxu0 %v908
  %984 = vmatmul.mubr.f32.gmra.mrb[0].mxu0 %v907
  %v985 = vpop.f32.mrb[0].mxu0
  %v986 = vadd.f32 0.0, %v985
  %v987 = vpop.f32.mrb[0].mxu0
  %v988 = vadd.f32 0.0, %v987
  %989 = vmatprep.mubr.f32.mxu0 %v910
  %990 = vmatmul.mubr.f32.gmra.mrb[0].mxu0 %v909
  %v991 = vpop.f32.mrb[0].mxu0
  %v992 = vadd.f32 0.0, %v991
  %v993 = vpop.f32.mrb[0].mxu0
  %v994 = vadd.f32 0.0, %v993
  %995 = vmatprep.mubr.f32.mxu0 %v912
  %996 = vmatmul.mubr.f32.gmra.mrb[0].mxu0 %v911
  %v997 = vpop.f32.mrb[0].mxu0
  %v998 = vadd.f32 0.0, %v997
  %v999 = vpop.f32.mrb[0].mxu0
  %v1000 = vadd.f32 0.0, %v999
  %1001 = vmatprep.mubr.f32.mxu0 %v914
  %1002 = vmatmul.mubr.f32.gmra.mrb[0].mxu0 %v913
  %v1003 = vpop.f32.mrb[0].mxu0
  %v1004 = vadd.f32 0.0, %v1003
  %v1005 = vpop.f32.mrb[0].mxu0
  %v1006 = vadd.f32 0.0, %v1005
  %1007 = vmatprep.mubr.f32.mxu0 %v916
  %1008 = vmatmul.mubr.f32.gmra.mrb[0].mxu0 %v915
  %v1009 = vpop.f32.mrb[0].mxu0
  %v1010 = vadd.f32 0.0, %v1009
  %v1011 = vpop.f32.mrb[0].mxu0
  %v1012 = vadd.f32 0.0, %v1011
  %1013 = vmatprep.mubr.f32.mxu0 %v918
  %1014 = vmatmul.mubr.f32.gmra.mrb[0].mxu0 %v917
  %v1015 = vpop.f32.mrb[0].mxu0
  %v1016 = vadd.f32 0.0, %v1015
  %v1017 = vpop.f32.mrb[0].mxu0
  %v1018 = vadd.f32 0.0, %v1017
  %1019 = vdwg.mxu0
  %v1020 = vmax.f32 %v907, %v986
  %v1021 = vmax.f32 %v908, %v988
  %v1022 = vmax.f32 %v909, %v992
  %v1023 = vmax.f32 %v910, %v994
  %v1024 = vmax.f32 %v911, %v998
  %v1025 = vmax.f32 %v912, %v1000
  %v1026 = vmax.f32 %v913, %v1004
  %v1027 = vmax.f32 %v914, %v1006
  %v1028 = vmax.f32 %v915, %v1010
  %v1029 = vmax.f32 %v916, %v1012
  %v1030 = vmax.f32 %v917, %v1016
  %v1031 = vmax.f32 %v918, %v1018
  %v1032 = vld [vmem:[%s9] sm:$0xff]
  %v1033 = vld [vmem:[%s9 + $0x8] sm:$0xff]
  %v1034 = vld [vmem:[%s9 + $0x10] sm:$0xff]
  %v1035 = vld [vmem:[%s9 + $0x18] sm:$0xff]
  %v1036 = vld [vmem:[%s10] sm:$0xff]
  %v1037 = vld [vmem:[%s10 + $0x8] sm:$0xff]
  %v1038 = vld [vmem:[%s10 + $0x10] sm:$0xff]
  %v1039 = vld [vmem:[%s10 + $0x18] sm:$0xff]
  %v1040 = vld [vmem:[%s10 + $0x20] sm:$0xff]
  %v1041 = vld [vmem:[%s10 + $0x28] sm:$0xff]
  %v1042 = vld [vmem:[%s10 + $0x30] sm:$0xff]
  %v1043 = vld [vmem:[%s10 + $0x38] sm:$0xff]
  %v1044 = vld [vmem:[%s10 + $0x40] sm:$0xff]
  %v1045 = vld [vmem:[%s10 + $0x48] sm:$0xff]
  %v1046 = vld [vmem:[%s10 + $0x50] sm:$0xff]
  %v1047 = vld [vmem:[%s10 + $0x58] sm:$0xff]
  %v1048 = vld [vmem:[%s10 + $0x60] sm:$0xff]
  %v1049 = vld [vmem:[%s10 + $0x68] sm:$0xff]
  %v1050 = vld [vmem:[%s10 + $0x70] sm:$0xff]
  %v1051 = vld [vmem:[%s10 + $0x78] sm:$0xff]
  %v1052 = vld [vmem:[%s10 + $0x80] sm:$0xff]
  %v1053 = vld [vmem:[%s10 + $0x88] sm:$0xff]
  %v1054 = vld [vmem:[%s10 + $0x90] sm:$0xff]
  %v1055 = vld [vmem:[%s10 + $0x98] sm:$0xff]
  %v1056 = vld [vmem:[%s10 + $0xa0] sm:$0xff]
  %v1057 = vld [vmem:[%s10 + $0xa8] sm:$0xff]
  %v1058 = vld [vmem:[%s10 + $0xb0] sm:$0xff]
  %v1059 = vld [vmem:[%s10 + $0xb8] sm:$0xff]
  %v1060 = vld [vmem:[%s10 + $0xc0] sm:$0xff]
  %v1061 = vld [vmem:[%s10 + $0xc8] sm:$0xff]
  %v1062 = vld [vmem:[%s10 + $0xd0] sm:$0xff]
  %v1063 = vld [vmem:[%s10 + $0xd8] sm:$0xff]
  %v1064 = vld [vmem:[%s10 + $0xe0] sm:$0xff]
  %v1065 = vld [vmem:[%s10 + $0xe8] sm:$0xff]
  %v1066 = vld [vmem:[%s10 + $0xf0] sm:$0xff]
  %v1067 = vld [vmem:[%s10 + $0xf8] sm:$0xff]
  %v1068 = vld [vmem:[%s10 + $0x100] sm:$0xff]
  %v1069 = vld [vmem:[%s10 + $0x108] sm:$0xff]
  %v1070 = vld [vmem:[%s10 + $0x110] sm:$0xff]
  %v1071 = vld [vmem:[%s10 + $0x118] sm:$0xff]
  %v1072 = vld [vmem:[%s10 + $0x120] sm:$0xff]
  %v1073 = vld [vmem:[%s10 + $0x128] sm:$0xff]
  %v1074 = vld [vmem:[%s10 + $0x130] sm:$0xff]
  %v1075 = vld [vmem:[%s10 + $0x138] sm:$0xff]
  %v1076 = vld [vmem:[%s10 + $0x140] sm:$0xff]
  %v1077 = vld [vmem:[%s10 + $0x148] sm:$0xff]
  %v1078 = vld [vmem:[%s10 + $0x150] sm:$0xff]
  %v1079 = vld [vmem:[%s10 + $0x158] sm:$0xff]
  %v1080 = vld [vmem:[%s10 + $0x160] sm:$0xff]
  %v1081 = vld [vmem:[%s10 + $0x168] sm:$0xff]
  %v1082 = vld [vmem:[%s10 + $0x170] sm:$0xff]
  %v1083 = vld [vmem:[%s10 + $0x178] sm:$0xff]
  %v1084 = vld [vmem:[%s10 + $0x180] sm:$0xff]
  %v1085 = vld [vmem:[%s10 + $0x188] sm:$0xff]
  %v1086 = vld [vmem:[%s10 + $0x190] sm:$0xff]
  %v1087 = vld [vmem:[%s10 + $0x198] sm:$0xff]
  %v1088 = vld [vmem:[%s10 + $0x1a0] sm:$0xff]
  %v1089 = vld [vmem:[%s10 + $0x1a8] sm:$0xff]
  %v1090 = vld [vmem:[%s10 + $0x1b0] sm:$0xff]
  %v1091 = vld [vmem:[%s10 + $0x1b8] sm:$0xff]
  %v1092 = vld [vmem:[%s10 + $0x1c0] sm:$0xff]
  %v1093 = vld [vmem:[%s10 + $0x1c8] sm:$0xff]
  %v1094 = vld [vmem:[%s10 + $0x1d0] sm:$0xff]
  %v1095 = vld [vmem:[%s10 + $0x1d8] sm:$0xff]
  %v1096 = vld [vmem:[%s10 + $0x1e0] sm:$0xff]
  %v1097 = vld [vmem:[%s10 + $0x1e8] sm:$0xff]
  %v1098 = vld [vmem:[%s10 + $0x1f0] sm:$0xff]
  %v1099 = vld [vmem:[%s10 + $0x1f8] sm:$0xff]
  %1100 = vmatprep.subr.mxu0 %v1037
  %1101 = vmatpush1.msra.mxu0 %v1036
  %1102 = vmatprep.subr.mxu0 %v1039
  %1103 = vmatpush1.msra.mxu0 %v1038
  %1104 = vmatprep.subr.mxu0 %v1041
  %1105 = vmatpush1.msra.mxu0 %v1040
  %1106 = vmatprep.subr.mxu0 %v1043
  %1107 = vmatpush1.msra.mxu0 %v1042
  %1108 = vmatprep.subr.mxu0 %v1045
  %1109 = vmatpush1.msra.mxu0 %v1044
  %1110 = vmatprep.subr.mxu0 %v1047
  %1111 = vmatpush1.msra.mxu0 %v1046
  %1112 = vmatprep.subr.mxu0 %v1049
  %1113 = vmatpush1.msra.mxu0 %v1048
  %1114 = vmatprep.subr.mxu0 %v1051
  %1115 = vmatpush1.msra.mxu0 %v1050
  %1116 = vmatprep.subr.mxu0 %v1053
  %1117 = vmatpush1.msra.mxu0 %v1052
  %1118 = vmatprep.subr.mxu0 %v1055
  %1119 = vmatpush1.msra.mxu0 %v1054
  %1120 = vmatprep.subr.mxu0 %v1057
  %1121 = vmatpush1.msra.mxu0 %v1056
  %1122 = vmatprep.subr.mxu0 %v1059
  %1123 = vmatpush1.msra.mxu0 %v1058
  %1124 = vmatprep.subr.mxu0 %v1061
  %1125 = vmatpush1.msra.mxu0 %v1060
  %1126 = vmatprep.subr.mxu0 %v1063
  %1127 = vmatpush1.msra.mxu0 %v1062
  %1128 = vmatprep.subr.mxu0 %v1065
  %1129 = vmatpush1.msra.mxu0 %v1064
  %1130 = vmatprep.subr.mxu0 %v1067
  %1131 = vmatpush1.msra.mxu0 %v1066
  %1132 = vmatprep.subr.mxu0 %v1069
  %1133 = vmatpush1.msra.mxu0 %v1068
  %1134 = vmatprep.subr.mxu0 %v1071
  %1135 = vmatpush1.msra.mxu0 %v1070
  %1136 = vmatprep.subr.mxu0 %v1073
  %1137 = vmatpush1.msra.mxu0 %v1072
  %1138 = vmatprep.subr.mxu0 %v1075
  %1139 = vmatpush1.msra.mxu0 %v1074
  %1140 = vmatprep.subr.mxu0 %v1077
  %1141 = vmatpush1.msra.mxu0 %v1076
  %1142 = vmatprep.subr.mxu0 %v1079
  %1143 = vmatpush1.msra.mxu0 %v1078
  %1144 = vmatprep.subr.mxu0 %v1081
  %1145 = vmatpush1.msra.mxu0 %v1080
  %1146 = vmatprep.subr.mxu0 %v1083
  %1147 = vmatpush1.msra.mxu0 %v1082
  %1148 = vmatprep.subr.mxu0 %v1085
  %1149 = vmatpush1.msra.mxu0 %v1084
  %1150 = vmatprep.subr.mxu0 %v1087
  %1151 = vmatpush1.msra.mxu0 %v1086
  %1152 = vmatprep.subr.mxu0 %v1089
  %1153 = vmatpush1.msra.mxu0 %v1088
  %1154 = vmatprep.subr.mxu0 %v1091
  %1155 = vmatpush1.msra.mxu0 %v1090
  %1156 = vmatprep.subr.mxu0 %v1093
  %1157 = vmatpush1.msra.mxu0 %v1092
  %1158 = vmatprep.subr.mxu0 %v1095
  %1159 = vmatpush1.msra.mxu0 %v1094
  %1160 = vmatprep.subr.mxu0 %v1097
  %1161 = vmatpush1.msra.mxu0 %v1096
  %1162 = vmatprep.subr.mxu0 %v1099
  %1163 = vmatpush1.msra.mxu0 %v1098
  %1164 = vmatprep.mubr.f32.mxu0 %v1021
  %1165 = vmatmul.mubr.f32.gmra.mrb[0].mxu0 %v1020
  %v1166 = vpop.f32.mrb[0].mxu0
  %v1167 = vadd.f32 0.0, %v1166
  %v1168 = vpop.f32.mrb[0].mxu0
  %v1169 = vadd.f32 0.0, %v1168
  %1170 = vmatprep.mubr.f32.mxu0 %v1023
  %1171 = vmatmul.mubr.f32.gmra.mrb[0].mxu0 %v1022
  %v1172 = vpop.f32.mrb[0].mxu0
  %v1173 = vadd.f32 0.0, %v1172
  %v1174 = vpop.f32.mrb[0].mxu0
  %v1175 = vadd.f32 0.0, %v1174
  %1176 = vmatprep.mubr.f32.mxu0 %v1025
  %1177 = vmatmul.mubr.f32.gmra.mrb[0].mxu0 %v1024
  %v1178 = vpop.f32.mrb[0].mxu0
  %v1179 = vadd.f32 0.0, %v1178
  %v1180 = vpop.f32.mrb[0].mxu0
  %v1181 = vadd.f32 0.0, %v1180
  %1182 = vmatprep.mubr.f32.mxu0 %v1027
  %1183 = vmatmul.mubr.f32.gmra.mrb[0].mxu0 %v1026
  %v1184 = vpop.f32.mrb[0].mxu0
  %v1185 = vadd.f32 0.0, %v1184
  %v1186 = vpop.f32.mrb[0].mxu0
  %v1187 = vadd.f32 0.0, %v1186
  %1188 = vmatprep.mubr.f32.mxu0 %v1029
  %1189 = vmatmul.mubr.f32.gmra.mrb[0].mxu0 %v1028
  %v1190 = vpop.f32.mrb[0].mxu0
  %v1191 = vadd.f32 0.0, %v1190
  %v1192 = vpop.f32.mrb[0].mxu0
  %v1193 = vadd.f32 0.0, %v1192
  %1194 = vmatprep.mubr.f32.mxu0 %v1031
  %1195 = vmatmul.mubr.f32.gmra.mrb[0].mxu0 %v1030
  %v1196 = vpop.f32.mrb[0].mxu0
  %v1197 = vadd.f32 0.0, %v1196
  %v1198 = vpop.f32.mrb[0].mxu0
  %v1199 = vadd.f32 0.0, %v1198
  %1200 = vdwg.mxu0
  %v1202 = vsel %vm136, %v1032, 0
  %v1205 = vsel %vm136, %v1033, 0
  %v1208 = vsel %vm136, %v1034, 0
  %v1211 = vsel %vm136, %v1035, 0
  %1213 = vmatprep.subr.mxu0 %v1169
  %1214 = vmatpush1.msra.mxu0 %v1167
  %1215 = vmatprep.subr.mxu0 %v1175
  %1216 = vmatpush1.msra.mxu0 %v1173
  %1217 = vmatprep.subr.mxu0 %v1181
  %1218 = vmatpush1.msra.mxu0 %v1179
  %1219 = vmatprep.subr.mxu0 %v1187
  %1220 = vmatpush1.msra.mxu0 %v1185
  %1221 = vmatprep.subr.mxu0 %v1193
  %1222 = vmatpush1.msra.mxu0 %v1191
  %1223 = vmatprep.subr.mxu0 %v1199
  %1224 = vmatpush1.msra.mxu0 %v1197
  %1225 = vmatprep.subr.mxu0 0.0
  %1226 = vmatpush1.msra.mxu0 0.0
  %1227 = vmatprep.subr.mxu0 0.0
  %1228 = vmatpush1.msra.mxu0 0.0
  %1229 = vmatprep.subr.mxu0 0.0
  %1230 = vmatpush1.msra.mxu0 0.0
  %1231 = vmatprep.subr.mxu0 0.0
  %1232 = vmatpush1.msra.mxu0 0.0
  %1233 = vmatprep.subr.mxu0 0.0
  %1234 = vmatpush1.msra.mxu0 0.0
  %1235 = vmatprep.subr.mxu0 0.0
  %1236 = vmatpush1.msra.mxu0 0.0
  %1237 = vmatprep.subr.mxu0 0.0
  %1238 = vmatpush1.msra.mxu0 0.0
  %1239 = vmatprep.subr.mxu0 0.0
  %1240 = vmatpush1.msra.mxu0 0.0
  %1241 = vmatprep.subr.mxu0 0.0
  %1242 = vmatpush1.msra.mxu0 0.0
  %1243 = vmatprep.subr.mxu0 0.0
  %1244 = vmatpush1.msra.mxu0 0.0
  %1245 = vmatprep.subr.mxu0 0.0
  %1246 = vmatpush1.msra.mxu0 0.0
  %1247 = vmatprep.subr.mxu0 0.0
  %1248 = vmatpush1.msra.mxu0 0.0
  %1249 = vmatprep.subr.mxu0 0.0
  %1250 = vmatpush1.msra.mxu0 0.0
  %1251 = vmatprep.subr.mxu0 0.0
  %1252 = vmatpush1.msra.mxu0 0.0
  %1253 = vmatprep.subr.mxu0 0.0
  %1254 = vmatpush1.msra.mxu0 0.0
  %1255 = vmatprep.subr.mxu0 0.0
  %1256 = vmatpush1.msra.mxu0 0.0
  %1257 = vmatprep.subr.mxu0 0.0
  %1258 = vmatpush1.msra.mxu0 0.0
  %1259 = vmatprep.subr.mxu0 0.0
  %1260 = vmatpush1.msra.mxu0 0.0
  %1261 = vmatprep.subr.mxu0 0.0
  %1262 = vmatpush1.msra.mxu0 0.0
  %1263 = vmatprep.subr.mxu0 0.0
  %1264 = vmatpush1.msra.mxu0 0.0
  %1265 = vmatprep.subr.mxu0 0.0
  %1266 = vmatpush1.msra.mxu0 0.0
  %1267 = vmatprep.subr.mxu0 0.0
  %1268 = vmatpush1.msra.mxu0 0.0
  %1269 = vmatprep.subr.mxu0 0.0
  %1270 = vmatpush1.msra.mxu0 0.0
  %1271 = vmatprep.subr.mxu0 0.0
  %1272 = vmatpush1.msra.mxu0 0.0
  %1273 = vmatprep.subr.mxu0 0.0
  %1274 = vmatpush1.msra.mxu0 0.0
  %1275 = vmatprep.subr.mxu0 0.0
  %1276 = vmatpush1.msra.mxu0 0.0
  %1277 = vmatprep.mubr.f32.mxu0 0.0
  %1278 = vmatmul.mubr.f32.gmra.mrb[0].mxu0 %v1202
  %v1279 = vpop.f32.mrb[0].mxu0
  %v1280 = vadd.f32 0.0, %v1279
  %v1281 = vpop.f32.mrb[0].mxu0
  %v1282 = vadd.f32 0.0, %v1281
  %1283 = vmatprep.mubr.f32.mxu0 0.0
  %1284 = vmatmul.mubr.f32.gmra.mrb[0].mxu0 %v1205
  %v1285 = vpop.f32.mrb[0].mxu0
  %v1286 = vadd.f32 0.0, %v1285
  %v1287 = vpop.f32.mrb[0].mxu0
  %v1288 = vadd.f32 0.0, %v1287
  %1289 = vmatprep.mubr.f32.mxu0 0.0
  %1290 = vmatmul.mubr.f32.gmra.mrb[0].mxu0 %v1208
  %v1291 = vpop.f32.mrb[0].mxu0
  %v1292 = vadd.f32 0.0, %v1291
  %v1293 = vpop.f32.mrb[0].mxu0
  %v1294 = vadd.f32 0.0, %v1293
  %1295 = vmatprep.mubr.f32.mxu0 0.0
  %1296 = vmatmul.mubr.f32.gmra.mrb[0].mxu0 %v1211
  %v1297 = vpop.f32.mrb[0].mxu0
  %v1298 = vadd.f32 0.0, %v1297
  %v1299 = vpop.f32.mrb[0].mxu0
  %v1300 = vadd.f32 0.0, %v1299
  %1301 = vdwg.mxu0
  %s1302 = scalar_lea.vmem %s4, 2
  %v1303 = vld [vmem:[%s1302] sm:$0x3]
  %v1304 = vld [vmem:[%s6] sm:$0xff]
  %v1305 = vld [vmem:[%s6 + $0x8] sm:$0xff]
  %v1306 = vld [vmem:[%s6 + $0x10] sm:$0xff]
  %v1307 = vld [vmem:[%s6 + $0x18] sm:$0xff]
  %s1308 = scalar_lea.vmem %s8, 512
  %v1309 = vld [vmem:[%s1308] sm:$0xff]
  %v1310 = vld [vmem:[%s1308 + $0x8] sm:$0xff]
  %v1311 = vld [vmem:[%s1308 + $0x10] sm:$0xff]
  %v1312 = vld [vmem:[%s1308 + $0x18] sm:$0xff]
  %v1313 = vld [vmem:[%s1308 + $0x20] sm:$0xff]
  %v1314 = vld [vmem:[%s1308 + $0x28] sm:$0xff]
  %v1315 = vld [vmem:[%s1308 + $0x30] sm:$0xff]
  %v1316 = vld [vmem:[%s1308 + $0x38] sm:$0xff]
  %v1317 = vld [vmem:[%s1308 + $0x40] sm:$0xff]
  %v1318 = vld [vmem:[%s1308 + $0x48] sm:$0xff]
  %v1319 = vld [vmem:[%s1308 + $0x50] sm:$0xff]
  %v1320 = vld [vmem:[%s1308 + $0x58] sm:$0xff]
  %v1321 = vld [vmem:[%s1308 + $0x60] sm:$0xff]
  %v1322 = vld [vmem:[%s1308 + $0x68] sm:$0xff]
  %v1323 = vld [vmem:[%s1308 + $0x70] sm:$0xff]
  %v1324 = vld [vmem:[%s1308 + $0x78] sm:$0xff]
  %v1325 = vld [vmem:[%s1308 + $0x80] sm:$0xff]
  %v1326 = vld [vmem:[%s1308 + $0x88] sm:$0xff]
  %v1327 = vld [vmem:[%s1308 + $0x90] sm:$0xff]
  %v1328 = vld [vmem:[%s1308 + $0x98] sm:$0xff]
  %v1329 = vld [vmem:[%s1308 + $0xa0] sm:$0xff]
  %v1330 = vld [vmem:[%s1308 + $0xa8] sm:$0xff]
  %v1331 = vld [vmem:[%s1308 + $0xb0] sm:$0xff]
  %v1332 = vld [vmem:[%s1308 + $0xb8] sm:$0xff]
  %v1333 = vld [vmem:[%s1308 + $0xc0] sm:$0xff]
  %v1334 = vld [vmem:[%s1308 + $0xc8] sm:$0xff]
  %v1335 = vld [vmem:[%s1308 + $0xd0] sm:$0xff]
  %v1336 = vld [vmem:[%s1308 + $0xd8] sm:$0xff]
  %v1337 = vld [vmem:[%s1308 + $0xe0] sm:$0xff]
  %v1338 = vld [vmem:[%s1308 + $0xe8] sm:$0xff]
  %v1339 = vld [vmem:[%s1308 + $0xf0] sm:$0xff]
  %v1340 = vld [vmem:[%s1308 + $0xf8] sm:$0xff]
  %v1341 = vld [vmem:[%s1308 + $0x100] sm:$0xff]
  %v1342 = vld [vmem:[%s1308 + $0x108] sm:$0xff]
  %v1343 = vld [vmem:[%s1308 + $0x110] sm:$0xff]
  %v1344 = vld [vmem:[%s1308 + $0x118] sm:$0xff]
  %v1345 = vld [vmem:[%s1308 + $0x120] sm:$0xff]
  %v1346 = vld [vmem:[%s1308 + $0x128] sm:$0xff]
  %v1347 = vld [vmem:[%s1308 + $0x130] sm:$0xff]
  %v1348 = vld [vmem:[%s1308 + $0x138] sm:$0xff]
  %v1349 = vld [vmem:[%s1308 + $0x140] sm:$0xff]
  %v1350 = vld [vmem:[%s1308 + $0x148] sm:$0xff]
  %v1351 = vld [vmem:[%s1308 + $0x150] sm:$0xff]
  %v1352 = vld [vmem:[%s1308 + $0x158] sm:$0xff]
  %v1353 = vld [vmem:[%s1308 + $0x160] sm:$0xff]
  %v1354 = vld [vmem:[%s1308 + $0x168] sm:$0xff]
  %v1355 = vld [vmem:[%s1308 + $0x170] sm:$0xff]
  %v1356 = vld [vmem:[%s1308 + $0x178] sm:$0xff]
  %v1357 = vld [vmem:[%s1308 + $0x180] sm:$0xff]
  %v1358 = vld [vmem:[%s1308 + $0x188] sm:$0xff]
  %v1359 = vld [vmem:[%s1308 + $0x190] sm:$0xff]
  %v1360 = vld [vmem:[%s1308 + $0x198] sm:$0xff]
  %v1361 = vld [vmem:[%s1308 + $0x1a0] sm:$0xff]
  %v1362 = vld [vmem:[%s1308 + $0x1a8] sm:$0xff]
  %v1363 = vld [vmem:[%s1308 + $0x1b0] sm:$0xff]
  %v1364 = vld [vmem:[%s1308 + $0x1b8] sm:$0xff]
  %v1365 = vld [vmem:[%s1308 + $0x1c0] sm:$0xff]
  %v1366 = vld [vmem:[%s1308 + $0x1c8] sm:$0xff]
  %v1367 = vld [vmem:[%s1308 + $0x1d0] sm:$0xff]
  %v1368 = vld [vmem:[%s1308 + $0x1d8] sm:$0xff]
  %v1369 = vld [vmem:[%s1308 + $0x1e0] sm:$0xff]
  %v1370 = vld [vmem:[%s1308 + $0x1e8] sm:$0xff]
  %v1371 = vld [vmem:[%s1308 + $0x1f0] sm:$0xff]
  %v1372 = vld [vmem:[%s1308 + $0x1f8] sm:$0xff]
  %vm1373 = vcmask 261120
  %v1375 = vsel %vm1373, %v1304, 0
  %v1378 = vsel %vm1373, %v1305, 0
  %v1381 = vsel %vm1373, %v1306, 0
  %v1384 = vsel %vm1373, %v1307, 0
  %1386 = vmatprep.subr.mxu0 %v1282
  %1387 = vmatpush1.msra.mxu0 %v1280
  %1388 = vmatprep.subr.mxu0 %v1288
  %1389 = vmatpush1.msra.mxu0 %v1286
  %1390 = vmatprep.subr.mxu0 %v1294
  %1391 = vmatpush1.msra.mxu0 %v1292
  %1392 = vmatprep.subr.mxu0 %v1300
  %1393 = vmatpush1.msra.mxu0 %v1298
  %1394 = vmatprep.subr.mxu0 0.0
  %1395 = vmatpush1.msra.mxu0 0.0
  %1396 = vmatprep.subr.mxu0 0.0
  %1397 = vmatpush1.msra.mxu0 0.0
  %1398 = vmatprep.subr.mxu0 0.0
  %1399 = vmatpush1.msra.mxu0 0.0
  %1400 = vmatprep.subr.mxu0 0.0
  %1401 = vmatpush1.msra.mxu0 0.0
  %1402 = vmatprep.subr.mxu0 0.0
  %1403 = vmatpush1.msra.mxu0 0.0
  %1404 = vmatprep.subr.mxu0 0.0
  %1405 = vmatpush1.msra.mxu0 0.0
  %1406 = vmatprep.subr.mxu0 0.0
  %1407 = vmatpush1.msra.mxu0 0.0
  %1408 = vmatprep.subr.mxu0 0.0
  %1409 = vmatpush1.msra.mxu0 0.0
  %1410 = vmatprep.subr.mxu0 0.0
  %1411 = vmatpush1.msra.mxu0 0.0
  %1412 = vmatprep.subr.mxu0 0.0
  %1413 = vmatpush1.msra.mxu0 0.0
  %1414 = vmatprep.subr.mxu0 0.0
  %1415 = vmatpush1.msra.mxu0 0.0
  %1416 = vmatprep.subr.mxu0 0.0
  %1417 = vmatpush1.msra.mxu0 0.0
  %1418 = vmatprep.subr.mxu0 0.0
  %1419 = vmatpush1.msra.mxu0 0.0
  %1420 = vmatprep.subr.mxu0 0.0
  %1421 = vmatpush1.msra.mxu0 0.0
  %1422 = vmatprep.subr.mxu0 0.0
  %1423 = vmatpush1.msra.mxu0 0.0
  %1424 = vmatprep.subr.mxu0 0.0
  %1425 = vmatpush1.msra.mxu0 0.0
  %1426 = vmatprep.subr.mxu0 0.0
  %1427 = vmatpush1.msra.mxu0 0.0
  %1428 = vmatprep.subr.mxu0 0.0
  %1429 = vmatpush1.msra.mxu0 0.0
  %1430 = vmatprep.subr.mxu0 0.0
  %1431 = vmatpush1.msra.mxu0 0.0
  %1432 = vmatprep.subr.mxu0 0.0
  %1433 = vmatpush1.msra.mxu0 0.0
  %1434 = vmatprep.subr.mxu0 0.0
  %1435 = vmatpush1.msra.mxu0 0.0
  %1436 = vmatprep.subr.mxu0 0.0
  %1437 = vmatpush1.msra.mxu0 0.0
  %1438 = vmatprep.subr.mxu0 0.0
  %1439 = vmatpush1.msra.mxu0 0.0
  %1440 = vmatprep.subr.mxu0 0.0
  %1441 = vmatpush1.msra.mxu0 0.0
  %1442 = vmatprep.subr.mxu0 0.0
  %1443 = vmatpush1.msra.mxu0 0.0
  %1444 = vmatprep.subr.mxu0 0.0
  %1445 = vmatpush1.msra.mxu0 0.0
  %1446 = vmatprep.subr.mxu0 0.0
  %1447 = vmatpush1.msra.mxu0 0.0
  %1448 = vmatprep.subr.mxu0 0.0
  %1449 = vmatpush1.msra.mxu0 0.0
  %1450 = vmatprep.mubr.f32.mxu0 0.0
  %1451 = vmatmul.mubr.f32.gmra.mrb[0].mxu0 %v1375
  %v1452 = vpop.f32.mrb[0].mxu0
  %v1453 = vadd.f32 0.0, %v1452
  %v1454 = vpop.f32.mrb[0].mxu0
  %v1455 = vadd.f32 0.0, %v1454
  %1456 = vmatprep.mubr.f32.mxu0 0.0
  %1457 = vmatmul.mubr.f32.gmra.mrb[0].mxu0 %v1378
  %v1458 = vpop.f32.mrb[0].mxu0
  %v1459 = vadd.f32 0.0, %v1458
  %v1460 = vpop.f32.mrb[0].mxu0
  %v1461 = vadd.f32 0.0, %v1460
  %1462 = vmatprep.mubr.f32.mxu0 0.0
  %1463 = vmatmul.mubr.f32.gmra.mrb[0].mxu0 %v1381
  %v1464 = vpop.f32.mrb[0].mxu0
  %v1465 = vadd.f32 0.0, %v1464
  %v1466 = vpop.f32.mrb[0].mxu0
  %v1467 = vadd.f32 0.0, %v1466
  %1468 = vmatprep.mubr.f32.mxu0 0.0
  %1469 = vmatmul.mubr.f32.gmra.mrb[0].mxu0 %v1384
  %v1470 = vpop.f32.mrb[0].mxu0
  %v1471 = vadd.f32 0.0, %v1470
  %v1472 = vpop.f32.mrb[0].mxu0
  %v1473 = vadd.f32 0.0, %v1472
  %1474 = vdwg.mxu0
  %1475 = vmatprep.subr.mxu0 %v1455
  %1476 = vmatpush1.msra.mxu0 %v1453
  %1477 = vmatprep.subr.mxu0 %v1461
  %1478 = vmatpush1.msra.mxu0 %v1459
  %1479 = vmatprep.subr.mxu0 %v1467
  %1480 = vmatpush1.msra.mxu0 %v1465
  %1481 = vmatprep.subr.mxu0 %v1473
  %1482 = vmatpush1.msra.mxu0 %v1471
  %1483 = vmatprep.subr.mxu0 0.0
  %1484 = vmatpush1.msra.mxu0 0.0
  %1485 = vmatprep.subr.mxu0 0.0
  %1486 = vmatpush1.msra.mxu0 0.0
  %1487 = vmatprep.subr.mxu0 0.0
  %1488 = vmatpush1.msra.mxu0 0.0
  %1489 = vmatprep.subr.mxu0 0.0
  %1490 = vmatpush1.msra.mxu0 0.0
  %1491 = vmatprep.subr.mxu0 0.0
  %1492 = vmatpush1.msra.mxu0 0.0
  %1493 = vmatprep.subr.mxu0 0.0
  %1494 = vmatpush1.msra.mxu0 0.0
  %1495 = vmatprep.subr.mxu0 0.0
  %1496 = vmatpush1.msra.mxu0 0.0
  %1497 = vmatprep.subr.mxu0 0.0
  %1498 = vmatpush1.msra.mxu0 0.0
  %1499 = vmatprep.subr.mxu0 0.0
  %1500 = vmatpush1.msra.mxu0 0.0
  %1501 = vmatprep.subr.mxu0 0.0
  %1502 = vmatpush1.msra.mxu0 0.0
  %1503 = vmatprep.subr.mxu0 0.0
  %1504 = vmatpush1.msra.mxu0 0.0
  %1505 = vmatprep.subr.mxu0 0.0
  %1506 = vmatpush1.msra.mxu0 0.0
  %1507 = vmatprep.subr.mxu0 0.0
  %1508 = vmatpush1.msra.mxu0 0.0
  %1509 = vmatprep.subr.mxu0 0.0
  %1510 = vmatpush1.msra.mxu0 0.0
  %1511 = vmatprep.subr.mxu0 0.0
  %1512 = vmatpush1.msra.mxu0 0.0
  %1513 = vmatprep.subr.mxu0 0.0
  %1514 = vmatpush1.msra.mxu0 0.0
  %1515 = vmatprep.subr.mxu0 0.0
  %1516 = vmatpush1.msra.mxu0 0.0
  %1517 = vmatprep.subr.mxu0 0.0
  %1518 = vmatpush1.msra.mxu0 0.0
  %1519 = vmatprep.subr.mxu0 0.0
  %1520 = vmatpush1.msra.mxu0 0.0
  %1521 = vmatprep.subr.mxu0 0.0
  %1522 = vmatpush1.msra.mxu0 0.0
  %1523 = vmatprep.subr.mxu0 0.0
  %1524 = vmatpush1.msra.mxu0 0.0
  %1525 = vmatprep.subr.mxu0 0.0
  %1526 = vmatpush1.msra.mxu0 0.0
  %1527 = vmatprep.subr.mxu0 0.0
  %1528 = vmatpush1.msra.mxu0 0.0
  %1529 = vmatprep.subr.mxu0 0.0
  %1530 = vmatpush1.msra.mxu0 0.0
  %1531 = vmatprep.subr.mxu0 0.0
  %1532 = vmatpush1.msra.mxu0 0.0
  %1533 = vmatprep.subr.mxu0 0.0
  %1534 = vmatpush1.msra.mxu0 0.0
  %1535 = vmatprep.subr.mxu0 0.0
  %1536 = vmatpush1.msra.mxu0 0.0
  %1537 = vmatprep.subr.mxu0 0.0
  %1538 = vmatpush1.msra.mxu0 0.0
  %1539 = vmatprep.mubr.f32.mxu0 0.0
  %1540 = vmatmul.mubr.f32.gmra.mrb[0].mxu0 %v1375
  %v1541 = vpop.f32.mrb[0].mxu0
  %v1542 = vadd.f32 0.0, %v1541
  %v1543 = vpop.f32.mrb[0].mxu0
  %v1544 = vadd.f32 0.0, %v1543
  %1545 = vmatprep.mubr.f32.mxu0 0.0
  %1546 = vmatmul.mubr.f32.gmra.mrb[0].mxu0 %v1378
  %v1547 = vpop.f32.mrb[0].mxu0
  %v1548 = vadd.f32 0.0, %v1547
  %v1549 = vpop.f32.mrb[0].mxu0
  %v1550 = vadd.f32 0.0, %v1549
  %1551 = vmatprep.mubr.f32.mxu0 0.0
  %1552 = vmatmul.mubr.f32.gmra.mrb[0].mxu0 %v1381
  %v1553 = vpop.f32.mrb[0].mxu0
  %v1554 = vadd.f32 0.0, %v1553
  %v1555 = vpop.f32.mrb[0].mxu0
  %v1556 = vadd.f32 0.0, %v1555
  %1557 = vmatprep.mubr.f32.mxu0 0.0
  %1558 = vmatmul.mubr.f32.gmra.mrb[0].mxu0 %v1384
  %v1559 = vpop.f32.mrb[0].mxu0
  %v1560 = vadd.f32 0.0, %v1559
  %v1561 = vpop.f32.mrb[0].mxu0
  %v1562 = vadd.f32 0.0, %v1561
  %1563 = vdwg.mxu0
  %v1564 = vld [vmem:[%s2] sm:$0xff]
  %v1565 = vld [vmem:[%s2 + $0x8] sm:$0xff]
  %v1566 = vld [vmem:[%s2 + $0x10] sm:$0xff]
  %v1567 = vld [vmem:[%s2 + $0x18] sm:$0xff]
  %v1568 = vld [vmem:[%s2 + $0x20] sm:$0xff]
  %v1569 = vld [vmem:[%s2 + $0x28] sm:$0xff]
  %v1570 = vld [vmem:[%s2 + $0x30] sm:$0xff]
  %v1571 = vld [vmem:[%s2 + $0x38] sm:$0xff]
  %v1572 = vld [vmem:[%s2 + $0x40] sm:$0xff]
  %v1573 = vld [vmem:[%s2 + $0x48] sm:$0xff]
  %v1574 = vld [vmem:[%s2 + $0x50] sm:$0xff]
  %v1575 = vld [vmem:[%s2 + $0x58] sm:$0xff]
  %v1576 = vld [vmem:[%s2 + $0x60] sm:$0xff]
  %v1577 = vld [vmem:[%s2 + $0x68] sm:$0xff]
  %v1578 = vld [vmem:[%s2 + $0x70] sm:$0xff]
  %v1579 = vld [vmem:[%s2 + $0x78] sm:$0xff]
  %v1580 = vld [vmem:[%s2 + $0x80] sm:$0xff]
  %v1581 = vld [vmem:[%s2 + $0x88] sm:$0xff]
  %v1582 = vld [vmem:[%s2 + $0x90] sm:$0xff]
  %v1583 = vld [vmem:[%s2 + $0x98] sm:$0xff]
  %v1584 = vld [vmem:[%s2 + $0xa0] sm:$0xff]
  %v1585 = vld [vmem:[%s2 + $0xa8] sm:$0xff]
  %v1586 = vld [vmem:[%s2 + $0xb0] sm:$0xff]
  %v1587 = vld [vmem:[%s2 + $0xb8] sm:$0xff]
  %v1588 = vld [vmem:[%s2 + $0xc0] sm:$0xff]
  %v1589 = vld [vmem:[%s2 + $0xc8] sm:$0xff]
  %v1590 = vld [vmem:[%s2 + $0xd0] sm:$0xff]
  %v1591 = vld [vmem:[%s2 + $0xd8] sm:$0xff]
  %v1592 = vld [vmem:[%s2 + $0xe0] sm:$0xff]
  %v1593 = vld [vmem:[%s2 + $0xe8] sm:$0xff]
  %v1594 = vld [vmem:[%s2 + $0xf0] sm:$0xff]
  %v1595 = vld [vmem:[%s2 + $0xf8] sm:$0xff]
  %v1596 = vld [vmem:[%s2 + $0x100] sm:$0xff]
  %v1597 = vld [vmem:[%s2 + $0x108] sm:$0xff]
  %v1598 = vld [vmem:[%s2 + $0x110] sm:$0xff]
  %v1599 = vld [vmem:[%s2 + $0x118] sm:$0xff]
  %v1600 = vld [vmem:[%s2 + $0x120] sm:$0xff]
  %v1601 = vld [vmem:[%s2 + $0x128] sm:$0xff]
  %v1602 = vld [vmem:[%s2 + $0x130] sm:$0xff]
  %v1603 = vld [vmem:[%s2 + $0x138] sm:$0xff]
  %s1604 = scalar_lea.vmem %s2, 320
  %v1605 = vld [vmem:[%s1604] sm:$0xff]
  %v1606 = vld [vmem:[%s1604 + $0x8] sm:$0xff]
  %v1607 = vld [vmem:[%s1604 + $0x10] sm:$0xff]
  %v1608 = vld [vmem:[%s1604 + $0x18] sm:$0xff]
  %v1609 = vld [vmem:[%s1604 + $0x20] sm:$0xff]
  %v1610 = vld [vmem:[%s1604 + $0x28] sm:$0xff]
  %v1611 = vld [vmem:[%s1604 + $0x30] sm:$0xff]
  %v1612 = vld [vmem:[%s1604 + $0x38] sm:$0xff]
  %v1613 = vld [vmem:[%s1604 + $0x40] sm:$0xff]
  %v1614 = vld [vmem:[%s1604 + $0x48] sm:$0xff]
  %v1615 = vld [vmem:[%s1604 + $0x50] sm:$0xff]
  %v1616 = vld [vmem:[%s1604 + $0x58] sm:$0xff]
  %v1617 = vld [vmem:[%s1604 + $0x60] sm:$0xff]
  %v1618 = vld [vmem:[%s1604 + $0x68] sm:$0xff]
  %v1619 = vld [vmem:[%s1604 + $0x70] sm:$0xff]
  %v1620 = vld [vmem:[%s1604 + $0x78] sm:$0xff]
  %v1621 = vld [vmem:[%s1604 + $0x80] sm:$0xff]
  %v1622 = vld [vmem:[%s1604 + $0x88] sm:$0xff]
  %v1623 = vld [vmem:[%s1604 + $0x90] sm:$0xff]
  %v1624 = vld [vmem:[%s1604 + $0x98] sm:$0xff]
  %v1625 = vld [vmem:[%s1604 + $0xa0] sm:$0xff]
  %v1626 = vld [vmem:[%s1604 + $0xa8] sm:$0xff]
  %v1627 = vld [vmem:[%s1604 + $0xb0] sm:$0xff]
  %v1628 = vld [vmem:[%s1604 + $0xb8] sm:$0xff]
  %v1629 = vld [vmem:[%s1604 + $0xc0] sm:$0xff]
  %v1630 = vld [vmem:[%s1604 + $0xc8] sm:$0xff]
  %v1631 = vld [vmem:[%s1604 + $0xd0] sm:$0xff]
  %v1632 = vld [vmem:[%s1604 + $0xd8] sm:$0xff]
  %v1633 = vld [vmem:[%s1604 + $0xe0] sm:$0xff]
  %v1634 = vld [vmem:[%s1604 + $0xe8] sm:$0xff]
  %v1635 = vld [vmem:[%s1604 + $0xf0] sm:$0xff]
  %v1636 = vld [vmem:[%s1604 + $0xf8] sm:$0xff]
  %v1637 = vld [vmem:[%s1604 + $0x100] sm:$0xff]
  %v1638 = vld [vmem:[%s1604 + $0x108] sm:$0xff]
  %v1639 = vld [vmem:[%s1604 + $0x110] sm:$0xff]
  %v1640 = vld [vmem:[%s1604 + $0x118] sm:$0xff]
  %v1641 = vld [vmem:[%s1604 + $0x120] sm:$0xff]
  %v1642 = vld [vmem:[%s1604 + $0x128] sm:$0xff]
  %v1643 = vld [vmem:[%s1604 + $0x130] sm:$0xff]
  %v1644 = vld [vmem:[%s1604 + $0x138] sm:$0xff]
  %v1646 = vsel %vm1373, %v1455, 0
  %v1649 = vsel %vm1373, %v1461, 0
  %v1652 = vsel %vm1373, %v1467, 0
  %v1655 = vsel %vm1373, %v1473, 0
  %1657 = vmatprep.subr.mxu0 %v1606
  %1658 = vmatpush1.msra.mxu0 %v1605
  %1659 = vmatprep.subr.mxu0 %v1608
  %1660 = vmatpush1.msra.mxu0 %v1607
  %1661 = vmatprep.subr.mxu0 %v1610
  %1662 = vmatpush1.msra.mxu0 %v1609
  %1663 = vmatprep.subr.mxu0 %v1612
  %1664 = vmatpush1.msra.mxu0 %v1611
  %1665 = vmatprep.subr.mxu0 %v1614
  %1666 = vmatpush1.msra.mxu0 %v1613
  %1667 = vmatprep.subr.mxu0 %v1616
  %1668 = vmatpush1.msra.mxu0 %v1615
  %1669 = vmatprep.subr.mxu0 %v1618
  %1670 = vmatpush1.msra.mxu0 %v1617
  %1671 = vmatprep.subr.mxu0 %v1620
  %1672 = vmatpush1.msra.mxu0 %v1619
  %1673 = vmatprep.subr.mxu0 %v1622
  %1674 = vmatpush1.msra.mxu0 %v1621
  %1675 = vmatprep.subr.mxu0 %v1624
  %1676 = vmatpush1.msra.mxu0 %v1623
  %1677 = vmatprep.subr.mxu0 %v1626
  %1678 = vmatpush1.msra.mxu0 %v1625
  %1679 = vmatprep.subr.mxu0 %v1628
  %1680 = vmatpush1.msra.mxu0 %v1627
  %1681 = vmatprep.subr.mxu0 %v1630
  %1682 = vmatpush1.msra.mxu0 %v1629
  %1683 = vmatprep.subr.mxu0 %v1632
  %1684 = vmatpush1.msra.mxu0 %v1631
  %1685 = vmatprep.subr.mxu0 %v1634
  %1686 = vmatpush1.msra.mxu0 %v1633
  %1687 = vmatprep.subr.mxu0 %v1636
  %1688 = vmatpush1.msra.mxu0 %v1635
  %1689 = vmatprep.subr.mxu0 %v1638
  %1690 = vmatpush1.msra.mxu0 %v1637
  %1691 = vmatprep.subr.mxu0 %v1640
  %1692 = vmatpush1.msra.mxu0 %v1639
  %1693 = vmatprep.subr.mxu0 %v1642
  %1694 = vmatpush1.msra.mxu0 %v1641
  %1695 = vmatprep.subr.mxu0 %v1644
  %1696 = vmatpush1.msra.mxu0 %v1643
  %1697 = vmatprep.subr.mxu0 0.0
  %1698 = vmatpush1.msra.mxu0 0.0
  %1699 = vmatprep.subr.mxu0 0.0
  %1700 = vmatpush1.msra.mxu0 0.0
  %1701 = vmatprep.subr.mxu0 0.0
  %1702 = vmatpush1.msra.mxu0 0.0
  %1703 = vmatprep.subr.mxu0 0.0
  %1704 = vmatpush1.msra.mxu0 0.0
  %1705 = vmatprep.subr.mxu0 0.0
  %1706 = vmatpush1.msra.mxu0 0.0
  %1707 = vmatprep.subr.mxu0 0.0
  %1708 = vmatpush1.msra.mxu0 0.0
  %1709 = vmatprep.subr.mxu0 0.0
  %1710 = vmatpush1.msra.mxu0 0.0
  %1711 = vmatprep.subr.mxu0 0.0
  %1712 = vmatpush1.msra.mxu0 0.0
  %1713 = vmatprep.subr.mxu0 0.0
  %1714 = vmatpush1.msra.mxu0 0.0
  %1715 = vmatprep.subr.mxu0 0.0
  %1716 = vmatpush1.msra.mxu0 0.0
  %1717 = vmatprep.subr.mxu0 0.0
  %1718 = vmatpush1.msra.mxu0 0.0
  %1719 = vmatprep.subr.mxu0 0.0
  %1720 = vmatpush1.msra.mxu0 0.0
  %1721 = vmatprep.mubr.f32.mxu0 %v1646
  %1722 = vmatmul.mubr.f32.gmra.mrb[0].mxu0 %v1453
  %v1723 = vpop.f32.mrb[0].mxu0
  %v1724 = vadd.f32 0.0, %v1723
  %v1725 = vpop.f32.mrb[0].mxu0
  %v1726 = vadd.f32 0.0, %v1725
  %1727 = vmatprep.mubr.f32.mxu0 %v1649
  %1728 = vmatmul.mubr.f32.gmra.mrb[0].mxu0 %v1459
  %v1729 = vpop.f32.mrb[0].mxu0
  %v1730 = vadd.f32 0.0, %v1729
  %v1731 = vpop.f32.mrb[0].mxu0
  %v1732 = vadd.f32 0.0, %v1731
  %1733 = vmatprep.mubr.f32.mxu0 %v1652
  %1734 = vmatmul.mubr.f32.gmra.mrb[0].mxu0 %v1465
  %v1735 = vpop.f32.mrb[0].mxu0
  %v1736 = vadd.f32 0.0, %v1735
  %v1737 = vpop.f32.mrb[0].mxu0
  %v1738 = vadd.f32 0.0, %v1737
  %1739 = vmatprep.mubr.f32.mxu0 %v1655
  %1740 = vmatmul.mubr.f32.gmra.mrb[0].mxu0 %v1471
  %v1741 = vpop.f32.mrb[0].mxu0
  %v1742 = vadd.f32 0.0, %v1741
  %v1743 = vpop.f32.mrb[0].mxu0
  %v1744 = vadd.f32 0.0, %v1743
  %1745 = vdwg.mxu0
  %v1747 = vsel %vm1373, %v1282, 0
  %v1750 = vsel %vm1373, %v1288, 0
  %v1753 = vsel %vm1373, %v1294, 0
  %v1756 = vsel %vm1373, %v1300, 0
  %1758 = vmatprep.subr.mxu0 %v1565
  %1759 = vmatpush1.msra.mxu0 %v1564
  %1760 = vmatprep.subr.mxu0 %v1567
  %1761 = vmatpush1.msra.mxu0 %v1566
  %1762 = vmatprep.subr.mxu0 %v1569
  %1763 = vmatpush1.msra.mxu0 %v1568
  %1764 = vmatprep.subr.mxu0 %v1571
  %1765 = vmatpush1.msra.mxu0 %v1570
  %1766 = vmatprep.subr.mxu0 %v1573
  %1767 = vmatpush1.msra.mxu0 %v1572
  %1768 = vmatprep.subr.mxu0 %v1575
  %1769 = vmatpush1.msra.mxu0 %v1574
  %1770 = vmatprep.subr.mxu0 %v1577
  %1771 = vmatpush1.msra.mxu0 %v1576
  %1772 = vmatprep.subr.mxu0 %v1579
  %1773 = vmatpush1.msra.mxu0 %v1578
  %1774 = vmatprep.subr.mxu0 %v1581
  %1775 = vmatpush1.msra.mxu0 %v1580
  %1776 = vmatprep.subr.mxu0 %v1583
  %1777 = vmatpush1.msra.mxu0 %v1582
  %1778 = vmatprep.subr.mxu0 %v1585
  %1779 = vmatpush1.msra.mxu0 %v1584
  %1780 = vmatprep.subr.mxu0 %v1587
  %1781 = vmatpush1.msra.mxu0 %v1586
  %1782 = vmatprep.subr.mxu0 %v1589
  %1783 = vmatpush1.msra.mxu0 %v1588
  %1784 = vmatprep.subr.mxu0 %v1591
  %1785 = vmatpush1.msra.mxu0 %v1590
  %1786 = vmatprep.subr.mxu0 %v1593
  %1787 = vmatpush1.msra.mxu0 %v1592
  %1788 = vmatprep.subr.mxu0 %v1595
  %1789 = vmatpush1.msra.mxu0 %v1594
  %1790 = vmatprep.subr.mxu0 %v1597
  %1791 = vmatpush1.msra.mxu0 %v1596
  %1792 = vmatprep.subr.mxu0 %v1599
  %1793 = vmatpush1.msra.mxu0 %v1598
  %1794 = vmatprep.subr.mxu0 %v1601
  %1795 = vmatpush1.msra.mxu0 %v1600
  %1796 = vmatprep.subr.mxu0 %v1603
  %1797 = vmatpush1.msra.mxu0 %v1602
  %1798 = vmatprep.subr.mxu0 0.0
  %1799 = vmatpush1.msra.mxu0 0.0
  %1800 = vmatprep.subr.mxu0 0.0
  %1801 = vmatpush1.msra.mxu0 0.0
  %1802 = vmatprep.subr.mxu0 0.0
  %1803 = vmatpush1.msra.mxu0 0.0
  %1804 = vmatprep.subr.mxu0 0.0
  %1805 = vmatpush1.msra.mxu0 0.0
  %1806 = vmatprep.subr.mxu0 0.0
  %1807 = vmatpush1.msra.mxu0 0.0
  %1808 = vmatprep.subr.mxu0 0.0
  %1809 = vmatpush1.msra.mxu0 0.0
  %1810 = vmatprep.subr.mxu0 0.0
  %1811 = vmatpush1.msra.mxu0 0.0
  %1812 = vmatprep.subr.mxu0 0.0
  %1813 = vmatpush1.msra.mxu0 0.0
  %1814 = vmatprep.subr.mxu0 0.0
  %1815 = vmatpush1.msra.mxu0 0.0
  %1816 = vmatprep.subr.mxu0 0.0
  %1817 = vmatpush1.msra.mxu0 0.0
  %1818 = vmatprep.subr.mxu0 0.0
  %1819 = vmatpush1.msra.mxu0 0.0
  %1820 = vmatprep.subr.mxu0 0.0
  %1821 = vmatpush1.msra.mxu0 0.0
  %1822 = vmatprep.mubr.f32.mxu0 %v1747
  %1823 = vmatmul.mubr.f32.gmra.mrb[0].mxu0 %v1280
  %v1824 = vpop.f32.mrb[0].mxu0
  %v1825 = vadd.f32 %v1724, %v1824
  %v1826 = vpop.f32.mrb[0].mxu0
  %v1827 = vadd.f32 %v1726, %v1826
  %1828 = vmatprep.mubr.f32.mxu0 %v1750
  %1829 = vmatmul.mubr.f32.gmra.mrb[0].mxu0 %v1286
  %v1830 = vpop.f32.mrb[0].mxu0
  %v1831 = vadd.f32 %v1730, %v1830
  %v1832 = vpop.f32.mrb[0].mxu0
  %v1833 = vadd.f32 %v1732, %v1832
  %1834 = vmatprep.mubr.f32.mxu0 %v1753
  %1835 = vmatmul.mubr.f32.gmra.mrb[0].mxu0 %v1292
  %v1836 = vpop.f32.mrb[0].mxu0
  %v1837 = vadd.f32 %v1736, %v1836
  %v1838 = vpop.f32.mrb[0].mxu0
  %v1839 = vadd.f32 %v1738, %v1838
  %1840 = vmatprep.mubr.f32.mxu0 %v1756
  %1841 = vmatmul.mubr.f32.gmra.mrb[0].mxu0 %v1298
  %v1842 = vpop.f32.mrb[0].mxu0
  %v1843 = vadd.f32 %v1742, %v1842
  %v1844 = vpop.f32.mrb[0].mxu0
  %v1845 = vadd.f32 %v1744, %v1844
  %1846 = vdwg.mxu0
  %s1847 = scalar_lea.vmem %s2, 640
  %v1848 = vld [vmem:[%s1847] sm:$0xff]
  %v1849 = vld [vmem:[%s1847 + $0x8] sm:$0xff]
  %v1850 = vld [vmem:[%s1847 + $0x10] sm:$0xff]
  %v1851 = vld [vmem:[%s1847 + $0x18] sm:$0xff]
  %v1852 = vld [vmem:[%s1847 + $0x20] sm:$0xff]
  %v1853 = vld [vmem:[%s1847 + $0x28] sm:$0xff]
  %v1854 = vld [vmem:[%s1847 + $0x30] sm:$0xff]
  %v1855 = vld [vmem:[%s1847 + $0x38] sm:$0xff]
  %v1856 = vld [vmem:[%s1847 + $0x40] sm:$0xff]
  %v1857 = vld [vmem:[%s1847 + $0x48] sm:$0xff]
  %v1858 = vld [vmem:[%s1847 + $0x50] sm:$0xff]
  %v1859 = vld [vmem:[%s1847 + $0x58] sm:$0xff]
  %v1860 = vld [vmem:[%s1847 + $0x60] sm:$0xff]
  %v1861 = vld [vmem:[%s1847 + $0x68] sm:$0xff]
  %v1862 = vld [vmem:[%s1847 + $0x70] sm:$0xff]
  %v1863 = vld [vmem:[%s1847 + $0x78] sm:$0xff]
  %v1864 = vld [vmem:[%s1847 + $0x80] sm:$0xff]
  %v1865 = vld [vmem:[%s1847 + $0x88] sm:$0xff]
  %v1866 = vld [vmem:[%s1847 + $0x90] sm:$0xff]
  %v1867 = vld [vmem:[%s1847 + $0x98] sm:$0xff]
  %v1868 = vld [vmem:[%s1847 + $0xa0] sm:$0xff]
  %v1869 = vld [vmem:[%s1847 + $0xa8] sm:$0xff]
  %v1870 = vld [vmem:[%s1847 + $0xb0] sm:$0xff]
  %v1871 = vld [vmem:[%s1847 + $0xb8] sm:$0xff]
  %v1872 = vld [vmem:[%s1847 + $0xc0] sm:$0xff]
  %v1873 = vld [vmem:[%s1847 + $0xc8] sm:$0xff]
  %v1874 = vld [vmem:[%s1847 + $0xd0] sm:$0xff]
  %v1875 = vld [vmem:[%s1847 + $0xd8] sm:$0xff]
  %v1876 = vld [vmem:[%s1847 + $0xe0] sm:$0xff]
  %v1877 = vld [vmem:[%s1847 + $0xe8] sm:$0xff]
  %v1878 = vld [vmem:[%s1847 + $0xf0] sm:$0xff]
  %v1879 = vld [vmem:[%s1847 + $0xf8] sm:$0xff]
  %v1880 = vld [vmem:[%s1847 + $0x100] sm:$0xff]
  %v1881 = vld [vmem:[%s1847 + $0x108] sm:$0xff]
  %v1882 = vld [vmem:[%s1847 + $0x110] sm:$0xff]
  %v1883 = vld [vmem:[%s1847 + $0x118] sm:$0xff]
  %v1884 = vld [vmem:[%s1847 + $0x120] sm:$0xff]
  %v1885 = vld [vmem:[%s1847 + $0x128] sm:$0xff]
  %v1886 = vld [vmem:[%s1847 + $0x130] sm:$0xff]
  %v1887 = vld [vmem:[%s1847 + $0x138] sm:$0xff]
  %v1889 = vsel %vm1373, %v1544, 0
  %v1892 = vsel %vm1373, %v1550, 0
  %v1895 = vsel %vm1373, %v1556, 0
  %v1898 = vsel %vm1373, %v1562, 0
  %1900 = vmatprep.subr.mxu0 %v1849
  %1901 = vmatpush1.msra.mxu0 %v1848
  %1902 = vmatprep.subr.mxu0 %v1851
  %1903 = vmatpush1.msra.mxu0 %v1850
  %1904 = vmatprep.subr.mxu0 %v1853
  %1905 = vmatpush1.msra.mxu0 %v1852
  %1906 = vmatprep.subr.mxu0 %v1855
  %1907 = vmatpush1.msra.mxu0 %v1854
  %1908 = vmatprep.subr.mxu0 %v1857
  %1909 = vmatpush1.msra.mxu0 %v1856
  %1910 = vmatprep.subr.mxu0 %v1859
  %1911 = vmatpush1.msra.mxu0 %v1858
  %1912 = vmatprep.subr.mxu0 %v1861
  %1913 = vmatpush1.msra.mxu0 %v1860
  %1914 = vmatprep.subr.mxu0 %v1863
  %1915 = vmatpush1.msra.mxu0 %v1862
  %1916 = vmatprep.subr.mxu0 %v1865
  %1917 = vmatpush1.msra.mxu0 %v1864
  %1918 = vmatprep.subr.mxu0 %v1867
  %1919 = vmatpush1.msra.mxu0 %v1866
  %1920 = vmatprep.subr.mxu0 %v1869
  %1921 = vmatpush1.msra.mxu0 %v1868
  %1922 = vmatprep.subr.mxu0 %v1871
  %1923 = vmatpush1.msra.mxu0 %v1870
  %1924 = vmatprep.subr.mxu0 %v1873
  %1925 = vmatpush1.msra.mxu0 %v1872
  %1926 = vmatprep.subr.mxu0 %v1875
  %1927 = vmatpush1.msra.mxu0 %v1874
  %1928 = vmatprep.subr.mxu0 %v1877
  %1929 = vmatpush1.msra.mxu0 %v1876
  %1930 = vmatprep.subr.mxu0 %v1879
  %1931 = vmatpush1.msra.mxu0 %v1878
  %1932 = vmatprep.subr.mxu0 %v1881
  %1933 = vmatpush1.msra.mxu0 %v1880
  %1934 = vmatprep.subr.mxu0 %v1883
  %1935 = vmatpush1.msra.mxu0 %v1882
  %1936 = vmatprep.subr.mxu0 %v1885
  %1937 = vmatpush1.msra.mxu0 %v1884
  %1938 = vmatprep.subr.mxu0 %v1887
  %1939 = vmatpush1.msra.mxu0 %v1886
  %1940 = vmatprep.subr.mxu0 0.0
  %1941 = vmatpush1.msra.mxu0 0.0
  %1942 = vmatprep.subr.mxu0 0.0
  %1943 = vmatpush1.msra.mxu0 0.0
  %1944 = vmatprep.subr.mxu0 0.0
  %1945 = vmatpush1.msra.mxu0 0.0
  %1946 = vmatprep.subr.mxu0 0.0
  %1947 = vmatpush1.msra.mxu0 0.0
  %1948 = vmatprep.subr.mxu0 0.0
  %1949 = vmatpush1.msra.mxu0 0.0
  %1950 = vmatprep.subr.mxu0 0.0
  %1951 = vmatpush1.msra.mxu0 0.0
  %1952 = vmatprep.subr.mxu0 0.0
  %1953 = vmatpush1.msra.mxu0 0.0
  %1954 = vmatprep.subr.mxu0 0.0
  %1955 = vmatpush1.msra.mxu0 0.0
  %1956 = vmatprep.subr.mxu0 0.0
  %1957 = vmatpush1.msra.mxu0 0.0
  %1958 = vmatprep.subr.mxu0 0.0
  %1959 = vmatpush1.msra.mxu0 0.0
  %1960 = vmatprep.subr.mxu0 0.0
  %1961 = vmatpush1.msra.mxu0 0.0
  %1962 = vmatprep.subr.mxu0 0.0
  %1963 = vmatpush1.msra.mxu0 0.0
  %1964 = vmatprep.mubr.f32.mxu0 %v1889
  %1965 = vmatmul.mubr.f32.gmra.mrb[0].mxu0 %v1542
  %v1966 = vpop.f32.mrb[0].mxu0
  %v1967 = vadd.f32 0.0, %v1966
  %v1968 = vpop.f32.mrb[0].mxu0
  %v1969 = vadd.f32 0.0, %v1968
  %1970 = vmatprep.mubr.f32.mxu0 %v1892
  %1971 = vmatmul.mubr.f32.gmra.mrb[0].mxu0 %v1548
  %v1972 = vpop.f32.mrb[0].mxu0
  %v1973 = vadd.f32 0.0, %v1972
  %v1974 = vpop.f32.mrb[0].mxu0
  %v1975 = vadd.f32 0.0, %v1974
  %1976 = vmatprep.mubr.f32.mxu0 %v1895
  %1977 = vmatmul.mubr.f32.gmra.mrb[0].mxu0 %v1554
  %v1978 = vpop.f32.mrb[0].mxu0
  %v1979 = vadd.f32 0.0, %v1978
  %v1980 = vpop.f32.mrb[0].mxu0
  %v1981 = vadd.f32 0.0, %v1980
  %1982 = vmatprep.mubr.f32.mxu0 %v1898
  %1983 = vmatmul.mubr.f32.gmra.mrb[0].mxu0 %v1560
  %v1984 = vpop.f32.mrb[0].mxu0
  %v1985 = vadd.f32 0.0, %v1984
  %v1986 = vpop.f32.mrb[0].mxu0
  %v1987 = vadd.f32 0.0, %v1986
  %1988 = vdwg.mxu0
  %v1989 = vadd.f32 %v1825, %v1967
  %v1990 = vadd.f32 %v1827, %v1969
  %v1991 = vadd.f32 %v1831, %v1973
  %v1992 = vadd.f32 %v1833, %v1975
  %v1993 = vadd.f32 %v1837, %v1979
  %v1994 = vadd.f32 %v1839, %v1981
  %v1995 = vadd.f32 %v1843, %v1985
  %v1996 = vadd.f32 %v1845, %v1987
  %v1998 = vlaneseq
  %v1999 = vshrl.u32 %v1998, 7
  %v2000 = vsub.s32 0, %v1999
  %v2001 = vrot.slane %v1303, %v2000
  %v2002 = vlaneseq
  %v2003 = vshrl.u32 %v2002, 7
  %v2004 = vsub.s32 1, %v2003
  %v2005 = vrot.slane %v1303, %v2004
  %v2008 = vadd.f32 %v1989, %v2001
  %v2009 = vadd.f32 %v1990, %v2005
  %v2010 = vadd.f32 %v1991, %v2001
  %v2011 = vadd.f32 %v1992, %v2005
  %v2012 = vadd.f32 %v1993, %v2001
  %v2013 = vadd.f32 %v1994, %v2005
  %v2014 = vadd.f32 %v1995, %v2001
  %v2015 = vadd.f32 %v1996, %v2005
  %v2016 = vmax.f32 %v2008, 0.0
  %v2017 = vmax.f32 %v2009, 0.0
  %v2018 = vmax.f32 %v2010, 0.0
  %v2019 = vmax.f32 %v2011, 0.0
  %v2020 = vmax.f32 %v2012, 0.0
  %v2021 = vmax.f32 %v2013, 0.0
  %v2022 = vmax.f32 %v2014, 0.0
  %v2023 = vmax.f32 %v2015, 0.0
  %2024 = vmatprep.subr.mxu0 %v2017
  %2025 = vmatpush1.msra.mxu0 %v2016
  %2026 = vmatprep.subr.mxu0 %v2019
  %2027 = vmatpush1.msra.mxu0 %v2018
  %2028 = vmatprep.subr.mxu0 %v2021
  %2029 = vmatpush1.msra.mxu0 %v2020
  %2030 = vmatprep.subr.mxu0 %v2023
  %2031 = vmatpush1.msra.mxu0 %v2022
  %2032 = vmatprep.subr.mxu0 0.0
  %2033 = vmatpush1.msra.mxu0 0.0
  %2034 = vmatprep.subr.mxu0 0.0
  %2035 = vmatpush1.msra.mxu0 0.0
  %2036 = vmatprep.subr.mxu0 0.0
  %2037 = vmatpush1.msra.mxu0 0.0
  %2038 = vmatprep.subr.mxu0 0.0
  %2039 = vmatpush1.msra.mxu0 0.0
  %2040 = vmatprep.subr.mxu0 0.0
  %2041 = vmatpush1.msra.mxu0 0.0
  %2042 = vmatprep.subr.mxu0 0.0
  %2043 = vmatpush1.msra.mxu0 0.0
  %2044 = vmatprep.subr.mxu0 0.0
  %2045 = vmatpush1.msra.mxu0 0.0
  %2046 = vmatprep.subr.mxu0 0.0
  %2047 = vmatpush1.msra.mxu0 0.0
  %2048 = vmatprep.subr.mxu0 0.0
  %2049 = vmatpush1.msra.mxu0 0.0
  %2050 = vmatprep.subr.mxu0 0.0
  %2051 = vmatpush1.msra.mxu0 0.0
  %2052 = vmatprep.subr.mxu0 0.0
  %2053 = vmatpush1.msra.mxu0 0.0
  %2054 = vmatprep.subr.mxu0 0.0
  %2055 = vmatpush1.msra.mxu0 0.0
  %2056 = vmatprep.subr.mxu0 0.0
  %2057 = vmatpush1.msra.mxu0 0.0
  %2058 = vmatprep.subr.mxu0 0.0
  %2059 = vmatpush1.msra.mxu0 0.0
  %2060 = vmatprep.subr.mxu0 0.0
  %2061 = vmatpush1.msra.mxu0 0.0
  %2062 = vmatprep.subr.mxu0 0.0
  %2063 = vmatpush1.msra.mxu0 0.0
  %2064 = vmatprep.subr.mxu0 0.0
  %2065 = vmatpush1.msra.mxu0 0.0
  %2066 = vmatprep.subr.mxu0 0.0
  %2067 = vmatpush1.msra.mxu0 0.0
  %2068 = vmatprep.subr.mxu0 0.0
  %2069 = vmatpush1.msra.mxu0 0.0
  %2070 = vmatprep.subr.mxu0 0.0
  %2071 = vmatpush1.msra.mxu0 0.0
  %2072 = vmatprep.subr.mxu0 0.0
  %2073 = vmatpush1.msra.mxu0 0.0
  %2074 = vmatprep.subr.mxu0 0.0
  %2075 = vmatpush1.msra.mxu0 0.0
  %2076 = vmatprep.subr.mxu0 0.0
  %2077 = vmatpush1.msra.mxu0 0.0
  %2078 = vmatprep.subr.mxu0 0.0
  %2079 = vmatpush1.msra.mxu0 0.0
  %2080 = vmatprep.subr.mxu0 0.0
  %2081 = vmatpush1.msra.mxu0 0.0
  %2082 = vmatprep.subr.mxu0 0.0
  %2083 = vmatpush1.msra.mxu0 0.0
  %2084 = vmatprep.subr.mxu0 0.0
  %2085 = vmatpush1.msra.mxu0 0.0
  %2086 = vmatprep.subr.mxu0 0.0
  %2087 = vmatpush1.msra.mxu0 0.0
  %2088 = vmatprep.mubr.f32.mxu0 0.0
  %2089 = vmatmul.mubr.f32.gmra.mrb[0].mxu0 %v1375
  %v2090 = vpop.f32.mrb[0].mxu0
  %v2091 = vadd.f32 0.0, %v2090
  %v2092 = vpop.f32.mrb[0].mxu0
  %v2093 = vadd.f32 0.0, %v2092
  %2094 = vmatprep.mubr.f32.mxu0 0.0
  %2095 = vmatmul.mubr.f32.gmra.mrb[0].mxu0 %v1378
  %v2096 = vpop.f32.mrb[0].mxu0
  %v2097 = vadd.f32 0.0, %v2096
  %v2098 = vpop.f32.mrb[0].mxu0
  %v2099 = vadd.f32 0.0, %v2098
  %2100 = vmatprep.mubr.f32.mxu0 0.0
  %2101 = vmatmul.mubr.f32.gmra.mrb[0].mxu0 %v1381
  %v2102 = vpop.f32.mrb[0].mxu0
  %v2103 = vadd.f32 0.0, %v2102
  %v2104 = vpop.f32.mrb[0].mxu0
  %v2105 = vadd.f32 0.0, %v2104
  %2106 = vmatprep.mubr.f32.mxu0 0.0
  %2107 = vmatmul.mubr.f32.gmra.mrb[0].mxu0 %v1384
  %v2108 = vpop.f32.mrb[0].mxu0
  %v2109 = vadd.f32 0.0, %v2108
  %v2110 = vpop.f32.mrb[0].mxu0
  %v2111 = vadd.f32 0.0, %v2110
  %2112 = vdwg.mxu0
  %v2113 = vmax.f32 %v2016, %v2091
  %v2114 = vmax.f32 %v2017, %v2093
  %v2115 = vmax.f32 %v2018, %v2097
  %v2116 = vmax.f32 %v2019, %v2099
  %v2117 = vmax.f32 %v2020, %v2103
  %v2118 = vmax.f32 %v2021, %v2105
  %v2119 = vmax.f32 %v2022, %v2109
  %v2120 = vmax.f32 %v2023, %v2111
  %2121 = vmatprep.subr.mxu0 %v1310
  %2122 = vmatpush1.msra.mxu0 %v1309
  %2123 = vmatprep.subr.mxu0 %v1312
  %2124 = vmatpush1.msra.mxu0 %v1311
  %2125 = vmatprep.subr.mxu0 %v1314
  %2126 = vmatpush1.msra.mxu0 %v1313
  %2127 = vmatprep.subr.mxu0 %v1316
  %2128 = vmatpush1.msra.mxu0 %v1315
  %2129 = vmatprep.subr.mxu0 %v1318
  %2130 = vmatpush1.msra.mxu0 %v1317
  %2131 = vmatprep.subr.mxu0 %v1320
  %2132 = vmatpush1.msra.mxu0 %v1319
  %2133 = vmatprep.subr.mxu0 %v1322
  %2134 = vmatpush1.msra.mxu0 %v1321
  %2135 = vmatprep.subr.mxu0 %v1324
  %2136 = vmatpush1.msra.mxu0 %v1323
  %2137 = vmatprep.subr.mxu0 %v1326
  %2138 = vmatpush1.msra.mxu0 %v1325
  %2139 = vmatprep.subr.mxu0 %v1328
  %2140 = vmatpush1.msra.mxu0 %v1327
  %2141 = vmatprep.subr.mxu0 %v1330
  %2142 = vmatpush1.msra.mxu0 %v1329
  %2143 = vmatprep.subr.mxu0 %v1332
  %2144 = vmatpush1.msra.mxu0 %v1331
  %2145 = vmatprep.subr.mxu0 %v1334
  %2146 = vmatpush1.msra.mxu0 %v1333
  %2147 = vmatprep.subr.mxu0 %v1336
  %2148 = vmatpush1.msra.mxu0 %v1335
  %2149 = vmatprep.subr.mxu0 %v1338
  %2150 = vmatpush1.msra.mxu0 %v1337
  %2151 = vmatprep.subr.mxu0 %v1340
  %2152 = vmatpush1.msra.mxu0 %v1339
  %2153 = vmatprep.subr.mxu0 %v1342
  %2154 = vmatpush1.msra.mxu0 %v1341
  %2155 = vmatprep.subr.mxu0 %v1344
  %2156 = vmatpush1.msra.mxu0 %v1343
  %2157 = vmatprep.subr.mxu0 %v1346
  %2158 = vmatpush1.msra.mxu0 %v1345
  %2159 = vmatprep.subr.mxu0 %v1348
  %2160 = vmatpush1.msra.mxu0 %v1347
  %2161 = vmatprep.subr.mxu0 %v1350
  %2162 = vmatpush1.msra.mxu0 %v1349
  %2163 = vmatprep.subr.mxu0 %v1352
  %2164 = vmatpush1.msra.mxu0 %v1351
  %2165 = vmatprep.subr.mxu0 %v1354
  %2166 = vmatpush1.msra.mxu0 %v1353
  %2167 = vmatprep.subr.mxu0 %v1356
  %2168 = vmatpush1.msra.mxu0 %v1355
  %2169 = vmatprep.subr.mxu0 %v1358
  %2170 = vmatpush1.msra.mxu0 %v1357
  %2171 = vmatprep.subr.mxu0 %v1360
  %2172 = vmatpush1.msra.mxu0 %v1359
  %2173 = vmatprep.subr.mxu0 %v1362
  %2174 = vmatpush1.msra.mxu0 %v1361
  %2175 = vmatprep.subr.mxu0 %v1364
  %2176 = vmatpush1.msra.mxu0 %v1363
  %2177 = vmatprep.subr.mxu0 %v1366
  %2178 = vmatpush1.msra.mxu0 %v1365
  %2179 = vmatprep.subr.mxu0 %v1368
  %2180 = vmatpush1.msra.mxu0 %v1367
  %2181 = vmatprep.subr.mxu0 %v1370
  %2182 = vmatpush1.msra.mxu0 %v1369
  %2183 = vmatprep.subr.mxu0 %v1372
  %2184 = vmatpush1.msra.mxu0 %v1371
  %2185 = vmatprep.mubr.f32.mxu0 %v2114
  %2186 = vmatmul.mubr.f32.gmra.mrb[0].mxu0 %v2113
  %v2187 = vpop.f32.mrb[0].mxu0
  %v2188 = vadd.f32 0.0, %v2187
  %v2189 = vpop.f32.mrb[0].mxu0
  %v2190 = vadd.f32 0.0, %v2189
  %2191 = vmatprep.mubr.f32.mxu0 %v2116
  %2192 = vmatmul.mubr.f32.gmra.mrb[0].mxu0 %v2115
  %v2193 = vpop.f32.mrb[0].mxu0
  %v2194 = vadd.f32 0.0, %v2193
  %v2195 = vpop.f32.mrb[0].mxu0
  %v2196 = vadd.f32 0.0, %v2195
  %2197 = vmatprep.mubr.f32.mxu0 %v2118
  %2198 = vmatmul.mubr.f32.gmra.mrb[0].mxu0 %v2117
  %v2199 = vpop.f32.mrb[0].mxu0
  %v2200 = vadd.f32 0.0, %v2199
  %v2201 = vpop.f32.mrb[0].mxu0
  %v2202 = vadd.f32 0.0, %v2201
  %2203 = vmatprep.mubr.f32.mxu0 %v2120
  %2204 = vmatmul.mubr.f32.gmra.mrb[0].mxu0 %v2119
  %v2205 = vpop.f32.mrb[0].mxu0
  %v2206 = vadd.f32 0.0, %v2205
  %v2207 = vpop.f32.mrb[0].mxu0
  %v2208 = vadd.f32 0.0, %v2207
  %2209 = vdwg.mxu0
  %v2210 = vmax.f32 %v2113, %v2188
  %v2211 = vmax.f32 %v2114, %v2190
  %v2212 = vmax.f32 %v2115, %v2194
  %v2213 = vmax.f32 %v2116, %v2196
  %v2214 = vmax.f32 %v2117, %v2200
  %v2215 = vmax.f32 %v2118, %v2202
  %v2216 = vmax.f32 %v2119, %v2206
  %v2217 = vmax.f32 %v2120, %v2208
  %v2218 = vld [vmem:[%s11] sm:$0xff]
  %v2219 = vld [vmem:[%s11 + $0x8] sm:$0xff]
  %v2220 = vld [vmem:[%s12] sm:$0xff]
  %v2221 = vld [vmem:[%s12 + $0x8] sm:$0xff]
  %v2222 = vld [vmem:[%s12 + $0x10] sm:$0xff]
  %v2223 = vld [vmem:[%s12 + $0x18] sm:$0xff]
  %v2224 = vld [vmem:[%s12 + $0x20] sm:$0xff]
  %v2225 = vld [vmem:[%s12 + $0x28] sm:$0xff]
  %v2226 = vld [vmem:[%s12 + $0x30] sm:$0xff]
  %v2227 = vld [vmem:[%s12 + $0x38] sm:$0xff]
  %v2228 = vld [vmem:[%s12 + $0x40] sm:$0xff]
  %v2229 = vld [vmem:[%s12 + $0x48] sm:$0xff]
  %v2230 = vld [vmem:[%s12 + $0x50] sm:$0xff]
  %v2231 = vld [vmem:[%s12 + $0x58] sm:$0xff]
  %v2232 = vld [vmem:[%s12 + $0x60] sm:$0xff]
  %v2233 = vld [vmem:[%s12 + $0x68] sm:$0xff]
  %v2234 = vld [vmem:[%s12 + $0x70] sm:$0xff]
  %v2235 = vld [vmem:[%s12 + $0x78] sm:$0xff]
  %v2236 = vld [vmem:[%s12 + $0x80] sm:$0xff]
  %v2237 = vld [vmem:[%s12 + $0x88] sm:$0xff]
  %v2238 = vld [vmem:[%s12 + $0x90] sm:$0xff]
  %v2239 = vld [vmem:[%s12 + $0x98] sm:$0xff]
  %v2240 = vld [vmem:[%s12 + $0xa0] sm:$0xff]
  %v2241 = vld [vmem:[%s12 + $0xa8] sm:$0xff]
  %v2242 = vld [vmem:[%s12 + $0xb0] sm:$0xff]
  %v2243 = vld [vmem:[%s12 + $0xb8] sm:$0xff]
  %v2244 = vld [vmem:[%s12 + $0xc0] sm:$0xff]
  %v2245 = vld [vmem:[%s12 + $0xc8] sm:$0xff]
  %v2246 = vld [vmem:[%s12 + $0xd0] sm:$0xff]
  %v2247 = vld [vmem:[%s12 + $0xd8] sm:$0xff]
  %v2248 = vld [vmem:[%s12 + $0xe0] sm:$0xff]
  %v2249 = vld [vmem:[%s12 + $0xe8] sm:$0xff]
  %v2250 = vld [vmem:[%s12 + $0xf0] sm:$0xff]
  %v2251 = vld [vmem:[%s12 + $0xf8] sm:$0xff]
  %v2252 = vld [vmem:[%s12 + $0x100] sm:$0xff]
  %v2253 = vld [vmem:[%s12 + $0x108] sm:$0xff]
  %v2254 = vld [vmem:[%s12 + $0x110] sm:$0xff]
  %v2255 = vld [vmem:[%s12 + $0x118] sm:$0xff]
  %v2256 = vld [vmem:[%s12 + $0x120] sm:$0xff]
  %v2257 = vld [vmem:[%s12 + $0x128] sm:$0xff]
  %v2258 = vld [vmem:[%s12 + $0x130] sm:$0xff]
  %v2259 = vld [vmem:[%s12 + $0x138] sm:$0xff]
  %v2260 = vld [vmem:[%s12 + $0x140] sm:$0xff]
  %v2261 = vld [vmem:[%s12 + $0x148] sm:$0xff]
  %v2262 = vld [vmem:[%s12 + $0x150] sm:$0xff]
  %v2263 = vld [vmem:[%s12 + $0x158] sm:$0xff]
  %v2264 = vld [vmem:[%s12 + $0x160] sm:$0xff]
  %v2265 = vld [vmem:[%s12 + $0x168] sm:$0xff]
  %v2266 = vld [vmem:[%s12 + $0x170] sm:$0xff]
  %v2267 = vld [vmem:[%s12 + $0x178] sm:$0xff]
  %v2268 = vld [vmem:[%s12 + $0x180] sm:$0xff]
  %v2269 = vld [vmem:[%s12 + $0x188] sm:$0xff]
  %v2270 = vld [vmem:[%s12 + $0x190] sm:$0xff]
  %v2271 = vld [vmem:[%s12 + $0x198] sm:$0xff]
  %v2272 = vld [vmem:[%s12 + $0x1a0] sm:$0xff]
  %v2273 = vld [vmem:[%s12 + $0x1a8] sm:$0xff]
  %v2274 = vld [vmem:[%s12 + $0x1b0] sm:$0xff]
  %v2275 = vld [vmem:[%s12 + $0x1b8] sm:$0xff]
  %v2276 = vld [vmem:[%s12 + $0x1c0] sm:$0xff]
  %v2277 = vld [vmem:[%s12 + $0x1c8] sm:$0xff]
  %v2278 = vld [vmem:[%s12 + $0x1d0] sm:$0xff]
  %v2279 = vld [vmem:[%s12 + $0x1d8] sm:$0xff]
  %v2280 = vld [vmem:[%s12 + $0x1e0] sm:$0xff]
  %v2281 = vld [vmem:[%s12 + $0x1e8] sm:$0xff]
  %v2282 = vld [vmem:[%s12 + $0x1f0] sm:$0xff]
  %v2283 = vld [vmem:[%s12 + $0x1f8] sm:$0xff]
  %2284 = vmatprep.subr.mxu0 %v2221
  %2285 = vmatpush1.msra.mxu0 %v2220
  %2286 = vmatprep.subr.mxu0 %v2223
  %2287 = vmatpush1.msra.mxu0 %v2222
  %2288 = vmatprep.subr.mxu0 %v2225
  %2289 = vmatpush1.msra.mxu0 %v2224
  %2290 = vmatprep.subr.mxu0 %v2227
  %2291 = vmatpush1.msra.mxu0 %v2226
  %2292 = vmatprep.subr.mxu0 %v2229
  %2293 = vmatpush1.msra.mxu0 %v2228
  %2294 = vmatprep.subr.mxu0 %v2231
  %2295 = vmatpush1.msra.mxu0 %v2230
  %2296 = vmatprep.subr.mxu0 %v2233
  %2297 = vmatpush1.msra.mxu0 %v2232
  %2298 = vmatprep.subr.mxu0 %v2235
  %2299 = vmatpush1.msra.mxu0 %v2234
  %2300 = vmatprep.subr.mxu0 %v2237
  %2301 = vmatpush1.msra.mxu0 %v2236
  %2302 = vmatprep.subr.mxu0 %v2239
  %2303 = vmatpush1.msra.mxu0 %v2238
  %2304 = vmatprep.subr.mxu0 %v2241
  %2305 = vmatpush1.msra.mxu0 %v2240
  %2306 = vmatprep.subr.mxu0 %v2243
  %2307 = vmatpush1.msra.mxu0 %v2242
  %2308 = vmatprep.subr.mxu0 %v2245
  %2309 = vmatpush1.msra.mxu0 %v2244
  %2310 = vmatprep.subr.mxu0 %v2247
  %2311 = vmatpush1.msra.mxu0 %v2246
  %2312 = vmatprep.subr.mxu0 %v2249
  %2313 = vmatpush1.msra.mxu0 %v2248
  %2314 = vmatprep.subr.mxu0 %v2251
  %2315 = vmatpush1.msra.mxu0 %v2250
  %2316 = vmatprep.subr.mxu0 %v2253
  %2317 = vmatpush1.msra.mxu0 %v2252
  %2318 = vmatprep.subr.mxu0 %v2255
  %2319 = vmatpush1.msra.mxu0 %v2254
  %2320 = vmatprep.subr.mxu0 %v2257
  %2321 = vmatpush1.msra.mxu0 %v2256
  %2322 = vmatprep.subr.mxu0 %v2259
  %2323 = vmatpush1.msra.mxu0 %v2258
  %2324 = vmatprep.subr.mxu0 %v2261
  %2325 = vmatpush1.msra.mxu0 %v2260
  %2326 = vmatprep.subr.mxu0 %v2263
  %2327 = vmatpush1.msra.mxu0 %v2262
  %2328 = vmatprep.subr.mxu0 %v2265
  %2329 = vmatpush1.msra.mxu0 %v2264
  %2330 = vmatprep.subr.mxu0 %v2267
  %2331 = vmatpush1.msra.mxu0 %v2266
  %2332 = vmatprep.subr.mxu0 %v2269
  %2333 = vmatpush1.msra.mxu0 %v2268
  %2334 = vmatprep.subr.mxu0 %v2271
  %2335 = vmatpush1.msra.mxu0 %v2270
  %2336 = vmatprep.subr.mxu0 %v2273
  %2337 = vmatpush1.msra.mxu0 %v2272
  %2338 = vmatprep.subr.mxu0 %v2275
  %2339 = vmatpush1.msra.mxu0 %v2274
  %2340 = vmatprep.subr.mxu0 %v2277
  %2341 = vmatpush1.msra.mxu0 %v2276
  %2342 = vmatprep.subr.mxu0 %v2279
  %2343 = vmatpush1.msra.mxu0 %v2278
  %2344 = vmatprep.subr.mxu0 %v2281
  %2345 = vmatpush1.msra.mxu0 %v2280
  %2346 = vmatprep.subr.mxu0 %v2283
  %2347 = vmatpush1.msra.mxu0 %v2282
  %2348 = vmatprep.mubr.f32.mxu0 %v2211
  %2349 = vmatmul.mubr.f32.gmra.mrb[0].mxu0 %v2210
  %v2350 = vpop.f32.mrb[0].mxu0
  %v2351 = vadd.f32 0.0, %v2350
  %v2352 = vpop.f32.mrb[0].mxu0
  %v2353 = vadd.f32 0.0, %v2352
  %2354 = vmatprep.mubr.f32.mxu0 %v2213
  %2355 = vmatmul.mubr.f32.gmra.mrb[0].mxu0 %v2212
  %v2356 = vpop.f32.mrb[0].mxu0
  %v2357 = vadd.f32 0.0, %v2356
  %v2358 = vpop.f32.mrb[0].mxu0
  %v2359 = vadd.f32 0.0, %v2358
  %2360 = vmatprep.mubr.f32.mxu0 %v2215
  %2361 = vmatmul.mubr.f32.gmra.mrb[0].mxu0 %v2214
  %v2362 = vpop.f32.mrb[0].mxu0
  %v2363 = vadd.f32 0.0, %v2362
  %v2364 = vpop.f32.mrb[0].mxu0
  %v2365 = vadd.f32 0.0, %v2364
  %2366 = vmatprep.mubr.f32.mxu0 %v2217
  %2367 = vmatmul.mubr.f32.gmra.mrb[0].mxu0 %v2216
  %v2368 = vpop.f32.mrb[0].mxu0
  %v2369 = vadd.f32 0.0, %v2368
  %v2370 = vpop.f32.mrb[0].mxu0
  %v2371 = vadd.f32 0.0, %v2370
  %2372 = vdwg.mxu0
  %v2374 = vsel %vm1373, %v2218, 0
  %v2377 = vsel %vm1373, %v2219, 0
  %2379 = vmatprep.subr.mxu0 %v2353
  %2380 = vmatpush1.msra.mxu0 %v2351
  %2381 = vmatprep.subr.mxu0 %v2359
  %2382 = vmatpush1.msra.mxu0 %v2357
  %2383 = vmatprep.subr.mxu0 %v2365
  %2384 = vmatpush1.msra.mxu0 %v2363
  %2385 = vmatprep.subr.mxu0 %v2371
  %2386 = vmatpush1.msra.mxu0 %v2369
  %2387 = vmatprep.subr.mxu0 0.0
  %2388 = vmatpush1.msra.mxu0 0.0
  %2389 = vmatprep.subr.mxu0 0.0
  %2390 = vmatpush1.msra.mxu0 0.0
  %2391 = vmatprep.subr.mxu0 0.0
  %2392 = vmatpush1.msra.mxu0 0.0
  %2393 = vmatprep.subr.mxu0 0.0
  %2394 = vmatpush1.msra.mxu0 0.0
  %2395 = vmatprep.subr.mxu0 0.0
  %2396 = vmatpush1.msra.mxu0 0.0
  %2397 = vmatprep.subr.mxu0 0.0
  %2398 = vmatpush1.msra.mxu0 0.0
  %2399 = vmatprep.subr.mxu0 0.0
  %2400 = vmatpush1.msra.mxu0 0.0
  %2401 = vmatprep.subr.mxu0 0.0
  %2402 = vmatpush1.msra.mxu0 0.0
  %2403 = vmatprep.subr.mxu0 0.0
  %2404 = vmatpush1.msra.mxu0 0.0
  %2405 = vmatprep.subr.mxu0 0.0
  %2406 = vmatpush1.msra.mxu0 0.0
  %2407 = vmatprep.subr.mxu0 0.0
  %2408 = vmatpush1.msra.mxu0 0.0
  %2409 = vmatprep.subr.mxu0 0.0
  %2410 = vmatpush1.msra.mxu0 0.0
  %2411 = vmatprep.subr.mxu0 0.0
  %2412 = vmatpush1.msra.mxu0 0.0
  %2413 = vmatprep.subr.mxu0 0.0
  %2414 = vmatpush1.msra.mxu0 0.0
  %2415 = vmatprep.subr.mxu0 0.0
  %2416 = vmatpush1.msra.mxu0 0.0
  %2417 = vmatprep.subr.mxu0 0.0
  %2418 = vmatpush1.msra.mxu0 0.0
  %2419 = vmatprep.subr.mxu0 0.0
  %2420 = vmatpush1.msra.mxu0 0.0
  %2421 = vmatprep.subr.mxu0 0.0
  %2422 = vmatpush1.msra.mxu0 0.0
  %2423 = vmatprep.subr.mxu0 0.0
  %2424 = vmatpush1.msra.mxu0 0.0
  %2425 = vmatprep.subr.mxu0 0.0
  %2426 = vmatpush1.msra.mxu0 0.0
  %2427 = vmatprep.subr.mxu0 0.0
  %2428 = vmatpush1.msra.mxu0 0.0
  %2429 = vmatprep.subr.mxu0 0.0
  %2430 = vmatpush1.msra.mxu0 0.0
  %2431 = vmatprep.subr.mxu0 0.0
  %2432 = vmatpush1.msra.mxu0 0.0
  %2433 = vmatprep.subr.mxu0 0.0
  %2434 = vmatpush1.msra.mxu0 0.0
  %2435 = vmatprep.subr.mxu0 0.0
  %2436 = vmatpush1.msra.mxu0 0.0
  %2437 = vmatprep.subr.mxu0 0.0
  %2438 = vmatpush1.msra.mxu0 0.0
  %2439 = vmatprep.subr.mxu0 0.0
  %2440 = vmatpush1.msra.mxu0 0.0
  %2441 = vmatprep.subr.mxu0 0.0
  %2442 = vmatpush1.msra.mxu0 0.0
  %2443 = vmatprep.mubr.f32.mxu0 0.0
  %2444 = vmatmul.mubr.f32.gmra.mrb[0].mxu0 %v2374
  %v2445 = vpop.f32.mrb[0].mxu0
  %v2446 = vadd.f32 0.0, %v2445
  %v2447 = vpop.f32.mrb[0].mxu0
  %v2448 = vadd.f32 0.0, %v2447
  %2449 = vmatprep.mubr.f32.mxu0 0.0
  %2450 = vmatmul.mubr.f32.gmra.mrb[0].mxu0 %v2377
  %v2451 = vpop.f32.mrb[0].mxu0
  %v2452 = vadd.f32 0.0, %v2451
  %v2453 = vpop.f32.mrb[0].mxu0
  %v2454 = vadd.f32 0.0, %v2453
  %2455 = vdwg.mxu0
  %s2456 = scalar_lea.vmem %s4, 4
  %v2457 = vld [vmem:[%s2456] sm:$0x3]
  %v2458 = vld [vmem:[%s7] sm:$0xff]
  %v2459 = vld [vmem:[%s7 + $0x8] sm:$0xff]
  %s2460 = scalar_lea.vmem %s8, 1024
  %v2461 = vld [vmem:[%s2460] sm:$0xff]
  %v2462 = vld [vmem:[%s2460 + $0x8] sm:$0xff]
  %v2463 = vld [vmem:[%s2460 + $0x10] sm:$0xff]
  %v2464 = vld [vmem:[%s2460 + $0x18] sm:$0xff]
  %v2465 = vld [vmem:[%s2460 + $0x20] sm:$0xff]
  %v2466 = vld [vmem:[%s2460 + $0x28] sm:$0xff]
  %v2467 = vld [vmem:[%s2460 + $0x30] sm:$0xff]
  %v2468 = vld [vmem:[%s2460 + $0x38] sm:$0xff]
  %v2469 = vld [vmem:[%s2460 + $0x40] sm:$0xff]
  %v2470 = vld [vmem:[%s2460 + $0x48] sm:$0xff]
  %v2471 = vld [vmem:[%s2460 + $0x50] sm:$0xff]
  %v2472 = vld [vmem:[%s2460 + $0x58] sm:$0xff]
  %v2473 = vld [vmem:[%s2460 + $0x60] sm:$0xff]
  %v2474 = vld [vmem:[%s2460 + $0x68] sm:$0xff]
  %v2475 = vld [vmem:[%s2460 + $0x70] sm:$0xff]
  %v2476 = vld [vmem:[%s2460 + $0x78] sm:$0xff]
  %v2477 = vld [vmem:[%s2460 + $0x80] sm:$0xff]
  %v2478 = vld [vmem:[%s2460 + $0x88] sm:$0xff]
  %v2479 = vld [vmem:[%s2460 + $0x90] sm:$0xff]
  %v2480 = vld [vmem:[%s2460 + $0x98] sm:$0xff]
  %v2481 = vld [vmem:[%s2460 + $0xa0] sm:$0xff]
  %v2482 = vld [vmem:[%s2460 + $0xa8] sm:$0xff]
  %v2483 = vld [vmem:[%s2460 + $0xb0] sm:$0xff]
  %v2484 = vld [vmem:[%s2460 + $0xb8] sm:$0xff]
  %v2485 = vld [vmem:[%s2460 + $0xc0] sm:$0xff]
  %v2486 = vld [vmem:[%s2460 + $0xc8] sm:$0xff]
  %v2487 = vld [vmem:[%s2460 + $0xd0] sm:$0xff]
  %v2488 = vld [vmem:[%s2460 + $0xd8] sm:$0xff]
  %v2489 = vld [vmem:[%s2460 + $0xe0] sm:$0xff]
  %v2490 = vld [vmem:[%s2460 + $0xe8] sm:$0xff]
  %v2491 = vld [vmem:[%s2460 + $0xf0] sm:$0xff]
  %v2492 = vld [vmem:[%s2460 + $0xf8] sm:$0xff]
  %v2493 = vld [vmem:[%s2460 + $0x100] sm:$0xff]
  %v2494 = vld [vmem:[%s2460 + $0x108] sm:$0xff]
  %v2495 = vld [vmem:[%s2460 + $0x110] sm:$0xff]
  %v2496 = vld [vmem:[%s2460 + $0x118] sm:$0xff]
  %v2497 = vld [vmem:[%s2460 + $0x120] sm:$0xff]
  %v2498 = vld [vmem:[%s2460 + $0x128] sm:$0xff]
  %v2499 = vld [vmem:[%s2460 + $0x130] sm:$0xff]
  %v2500 = vld [vmem:[%s2460 + $0x138] sm:$0xff]
  %v2501 = vld [vmem:[%s2460 + $0x140] sm:$0xff]
  %v2502 = vld [vmem:[%s2460 + $0x148] sm:$0xff]
  %v2503 = vld [vmem:[%s2460 + $0x150] sm:$0xff]
  %v2504 = vld [vmem:[%s2460 + $0x158] sm:$0xff]
  %v2505 = vld [vmem:[%s2460 + $0x160] sm:$0xff]
  %v2506 = vld [vmem:[%s2460 + $0x168] sm:$0xff]
  %v2507 = vld [vmem:[%s2460 + $0x170] sm:$0xff]
  %v2508 = vld [vmem:[%s2460 + $0x178] sm:$0xff]
  %v2509 = vld [vmem:[%s2460 + $0x180] sm:$0xff]
  %v2510 = vld [vmem:[%s2460 + $0x188] sm:$0xff]
  %v2511 = vld [vmem:[%s2460 + $0x190] sm:$0xff]
  %v2512 = vld [vmem:[%s2460 + $0x198] sm:$0xff]
  %v2513 = vld [vmem:[%s2460 + $0x1a0] sm:$0xff]
  %v2514 = vld [vmem:[%s2460 + $0x1a8] sm:$0xff]
  %v2515 = vld [vmem:[%s2460 + $0x1b0] sm:$0xff]
  %v2516 = vld [vmem:[%s2460 + $0x1b8] sm:$0xff]
  %v2517 = vld [vmem:[%s2460 + $0x1c0] sm:$0xff]
  %v2518 = vld [vmem:[%s2460 + $0x1c8] sm:$0xff]
  %v2519 = vld [vmem:[%s2460 + $0x1d0] sm:$0xff]
  %v2520 = vld [vmem:[%s2460 + $0x1d8] sm:$0xff]
  %v2521 = vld [vmem:[%s2460 + $0x1e0] sm:$0xff]
  %v2522 = vld [vmem:[%s2460 + $0x1e8] sm:$0xff]
  %v2523 = vld [vmem:[%s2460 + $0x1f0] sm:$0xff]
  %v2524 = vld [vmem:[%s2460 + $0x1f8] sm:$0xff]
  %vm2525 = vcmask 130048
  %v2527 = vsel %vm2525, %v2458, 0
  %v2530 = vsel %vm2525, %v2459, 0
  %2532 = vmatprep.subr.mxu0 %v2448
  %2533 = vmatpush1.msra.mxu0 %v2446
  %2534 = vmatprep.subr.mxu0 %v2454
  %2535 = vmatpush1.msra.mxu0 %v2452
  %2536 = vmatprep.subr.mxu0 0.0
  %2537 = vmatpush1.msra.mxu0 0.0
  %2538 = vmatprep.subr.mxu0 0.0
  %2539 = vmatpush1.msra.mxu0 0.0
  %2540 = vmatprep.subr.mxu0 0.0
  %2541 = vmatpush1.msra.mxu0 0.0
  %2542 = vmatprep.subr.mxu0 0.0
  %2543 = vmatpush1.msra.mxu0 0.0
  %2544 = vmatprep.subr.mxu0 0.0
  %2545 = vmatpush1.msra.mxu0 0.0
  %2546 = vmatprep.subr.mxu0 0.0
  %2547 = vmatpush1.msra.mxu0 0.0
  %2548 = vmatprep.subr.mxu0 0.0
  %2549 = vmatpush1.msra.mxu0 0.0
  %2550 = vmatprep.subr.mxu0 0.0
  %2551 = vmatpush1.msra.mxu0 0.0
  %2552 = vmatprep.subr.mxu0 0.0
  %2553 = vmatpush1.msra.mxu0 0.0
  %2554 = vmatprep.subr.mxu0 0.0
  %2555 = vmatpush1.msra.mxu0 0.0
  %2556 = vmatprep.subr.mxu0 0.0
  %2557 = vmatpush1.msra.mxu0 0.0
  %2558 = vmatprep.subr.mxu0 0.0
  %2559 = vmatpush1.msra.mxu0 0.0
  %2560 = vmatprep.subr.mxu0 0.0
  %2561 = vmatpush1.msra.mxu0 0.0
  %2562 = vmatprep.subr.mxu0 0.0
  %2563 = vmatpush1.msra.mxu0 0.0
  %2564 = vmatprep.subr.mxu0 0.0
  %2565 = vmatpush1.msra.mxu0 0.0
  %2566 = vmatprep.subr.mxu0 0.0
  %2567 = vmatpush1.msra.mxu0 0.0
  %2568 = vmatprep.subr.mxu0 0.0
  %2569 = vmatpush1.msra.mxu0 0.0
  %2570 = vmatprep.subr.mxu0 0.0
  %2571 = vmatpush1.msra.mxu0 0.0
  %2572 = vmatprep.subr.mxu0 0.0
  %2573 = vmatpush1.msra.mxu0 0.0
  %2574 = vmatprep.subr.mxu0 0.0
  %2575 = vmatpush1.msra.mxu0 0.0
  %2576 = vmatprep.subr.mxu0 0.0
  %2577 = vmatpush1.msra.mxu0 0.0
  %2578 = vmatprep.subr.mxu0 0.0
  %2579 = vmatpush1.msra.mxu0 0.0
  %2580 = vmatprep.subr.mxu0 0.0
  %2581 = vmatpush1.msra.mxu0 0.0
  %2582 = vmatprep.subr.mxu0 0.0
  %2583 = vmatpush1.msra.mxu0 0.0
  %2584 = vmatprep.subr.mxu0 0.0
  %2585 = vmatpush1.msra.mxu0 0.0
  %2586 = vmatprep.subr.mxu0 0.0
  %2587 = vmatpush1.msra.mxu0 0.0
  %2588 = vmatprep.subr.mxu0 0.0
  %2589 = vmatpush1.msra.mxu0 0.0
  %2590 = vmatprep.subr.mxu0 0.0
  %2591 = vmatpush1.msra.mxu0 0.0
  %2592 = vmatprep.subr.mxu0 0.0
  %2593 = vmatpush1.msra.mxu0 0.0
  %2594 = vmatprep.subr.mxu0 0.0
  %2595 = vmatpush1.msra.mxu0 0.0
  %2596 = vmatprep.mubr.f32.mxu0 0.0
  %2597 = vmatmul.mubr.f32.gmra.mrb[0].mxu0 %v2527
  %v2598 = vpop.f32.mrb[0].mxu0
  %v2599 = vadd.f32 0.0, %v2598
  %v2600 = vpop.f32.mrb[0].mxu0
  %v2601 = vadd.f32 0.0, %v2600
  %2602 = vmatprep.mubr.f32.mxu0 0.0
  %2603 = vmatmul.mubr.f32.gmra.mrb[0].mxu0 %v2530
  %v2604 = vpop.f32.mrb[0].mxu0
  %v2605 = vadd.f32 0.0, %v2604
  %v2606 = vpop.f32.mrb[0].mxu0
  %v2607 = vadd.f32 0.0, %v2606
  %2608 = vdwg.mxu0
  %2609 = vmatprep.subr.mxu0 %v2601
  %2610 = vmatpush1.msra.mxu0 %v2599
  %2611 = vmatprep.subr.mxu0 %v2607
  %2612 = vmatpush1.msra.mxu0 %v2605
  %2613 = vmatprep.subr.mxu0 0.0
  %2614 = vmatpush1.msra.mxu0 0.0
  %2615 = vmatprep.subr.mxu0 0.0
  %2616 = vmatpush1.msra.mxu0 0.0
  %2617 = vmatprep.subr.mxu0 0.0
  %2618 = vmatpush1.msra.mxu0 0.0
  %2619 = vmatprep.subr.mxu0 0.0
  %2620 = vmatpush1.msra.mxu0 0.0
  %2621 = vmatprep.subr.mxu0 0.0
  %2622 = vmatpush1.msra.mxu0 0.0
  %2623 = vmatprep.subr.mxu0 0.0
  %2624 = vmatpush1.msra.mxu0 0.0
  %2625 = vmatprep.subr.mxu0 0.0
  %2626 = vmatpush1.msra.mxu0 0.0
  %2627 = vmatprep.subr.mxu0 0.0
  %2628 = vmatpush1.msra.mxu0 0.0
  %2629 = vmatprep.subr.mxu0 0.0
  %2630 = vmatpush1.msra.mxu0 0.0
  %2631 = vmatprep.subr.mxu0 0.0
  %2632 = vmatpush1.msra.mxu0 0.0
  %2633 = vmatprep.subr.mxu0 0.0
  %2634 = vmatpush1.msra.mxu0 0.0
  %2635 = vmatprep.subr.mxu0 0.0
  %2636 = vmatpush1.msra.mxu0 0.0
  %2637 = vmatprep.subr.mxu0 0.0
  %2638 = vmatpush1.msra.mxu0 0.0
  %2639 = vmatprep.subr.mxu0 0.0
  %2640 = vmatpush1.msra.mxu0 0.0
  %2641 = vmatprep.subr.mxu0 0.0
  %2642 = vmatpush1.msra.mxu0 0.0
  %2643 = vmatprep.subr.mxu0 0.0
  %2644 = vmatpush1.msra.mxu0 0.0
  %2645 = vmatprep.subr.mxu0 0.0
  %2646 = vmatpush1.msra.mxu0 0.0
  %2647 = vmatprep.subr.mxu0 0.0
  %2648 = vmatpush1.msra.mxu0 0.0
  %2649 = vmatprep.subr.mxu0 0.0
  %2650 = vmatpush1.msra.mxu0 0.0
  %2651 = vmatprep.subr.mxu0 0.0
  %2652 = vmatpush1.msra.mxu0 0.0
  %2653 = vmatprep.subr.mxu0 0.0
  %2654 = vmatpush1.msra.mxu0 0.0
  %2655 = vmatprep.subr.mxu0 0.0
  %2656 = vmatpush1.msra.mxu0 0.0
  %2657 = vmatprep.subr.mxu0 0.0
  %2658 = vmatpush1.msra.mxu0 0.0
  %2659 = vmatprep.subr.mxu0 0.0
  %2660 = vmatpush1.msra.mxu0 0.0
  %2661 = vmatprep.subr.mxu0 0.0
  %2662 = vmatpush1.msra.mxu0 0.0
  %2663 = vmatprep.subr.mxu0 0.0
  %2664 = vmatpush1.msra.mxu0 0.0
  %2665 = vmatprep.subr.mxu0 0.0
  %2666 = vmatpush1.msra.mxu0 0.0
  %2667 = vmatprep.subr.mxu0 0.0
  %2668 = vmatpush1.msra.mxu0 0.0
  %2669 = vmatprep.subr.mxu0 0.0
  %2670 = vmatpush1.msra.mxu0 0.0
  %2671 = vmatprep.subr.mxu0 0.0
  %2672 = vmatpush1.msra.mxu0 0.0
  %2673 = vmatprep.mubr.f32.mxu0 0.0
  %2674 = vmatmul.mubr.f32.gmra.mrb[0].mxu0 %v2527
  %v2675 = vpop.f32.mrb[0].mxu0
  %v2676 = vadd.f32 0.0, %v2675
  %v2677 = vpop.f32.mrb[0].mxu0
  %v2678 = vadd.f32 0.0, %v2677
  %2679 = vmatprep.mubr.f32.mxu0 0.0
  %2680 = vmatmul.mubr.f32.gmra.mrb[0].mxu0 %v2530
  %v2681 = vpop.f32.mrb[0].mxu0
  %v2682 = vadd.f32 0.0, %v2681
  %v2683 = vpop.f32.mrb[0].mxu0
  %v2684 = vadd.f32 0.0, %v2683
  %2685 = vdwg.mxu0
  %v2686 = vld [vmem:[%s3] sm:$0xff]
  %v2687 = vld [vmem:[%s3 + $0x8] sm:$0xff]
  %v2688 = vld [vmem:[%s3 + $0x10] sm:$0xff]
  %v2689 = vld [vmem:[%s3 + $0x18] sm:$0xff]
  %v2690 = vld [vmem:[%s3 + $0x20] sm:$0xff]
  %v2691 = vld [vmem:[%s3 + $0x28] sm:$0xff]
  %v2692 = vld [vmem:[%s3 + $0x30] sm:$0xff]
  %v2693 = vld [vmem:[%s3 + $0x38] sm:$0xff]
  %v2694 = vld [vmem:[%s3 + $0x40] sm:$0xff]
  %v2695 = vld [vmem:[%s3 + $0x48] sm:$0xff]
  %v2696 = vld [vmem:[%s3 + $0x50] sm:$0xff]
  %v2697 = vld [vmem:[%s3 + $0x58] sm:$0xff]
  %v2698 = vld [vmem:[%s3 + $0x60] sm:$0xff]
  %v2699 = vld [vmem:[%s3 + $0x68] sm:$0xff]
  %v2700 = vld [vmem:[%s3 + $0x70] sm:$0xff]
  %v2701 = vld [vmem:[%s3 + $0x78] sm:$0xff]
  %v2702 = vld [vmem:[%s3 + $0x80] sm:$0xff]
  %v2703 = vld [vmem:[%s3 + $0x88] sm:$0xff]
  %v2704 = vld [vmem:[%s3 + $0x90] sm:$0xff]
  %v2705 = vld [vmem:[%s3 + $0x98] sm:$0xff]
  %v2706 = vld [vmem:[%s3 + $0xa0] sm:$0xff]
  %v2707 = vld [vmem:[%s3 + $0xa8] sm:$0xff]
  %v2708 = vld [vmem:[%s3 + $0xb0] sm:$0xff]
  %v2709 = vld [vmem:[%s3 + $0xb8] sm:$0xff]
  %v2710 = vld [vmem:[%s3 + $0xc0] sm:$0xff]
  %v2711 = vld [vmem:[%s3 + $0xc8] sm:$0xff]
  %v2712 = vld [vmem:[%s3 + $0xd0] sm:$0xff]
  %v2713 = vld [vmem:[%s3 + $0xd8] sm:$0xff]
  %v2714 = vld [vmem:[%s3 + $0xe0] sm:$0xff]
  %v2715 = vld [vmem:[%s3 + $0xe8] sm:$0xff]
  %v2716 = vld [vmem:[%s3 + $0xf0] sm:$0xff]
  %v2717 = vld [vmem:[%s3 + $0xf8] sm:$0xff]
  %v2718 = vld [vmem:[%s3 + $0x100] sm:$0xff]
  %v2719 = vld [vmem:[%s3 + $0x108] sm:$0xff]
  %v2720 = vld [vmem:[%s3 + $0x110] sm:$0xff]
  %v2721 = vld [vmem:[%s3 + $0x118] sm:$0xff]
  %v2722 = vld [vmem:[%s3 + $0x120] sm:$0xff]
  %v2723 = vld [vmem:[%s3 + $0x128] sm:$0xff]
  %v2724 = vld [vmem:[%s3 + $0x130] sm:$0xff]
  %v2725 = vld [vmem:[%s3 + $0x138] sm:$0xff]
  %v2726 = vld [vmem:[%s3 + $0x140] sm:$0xff]
  %v2727 = vld [vmem:[%s3 + $0x148] sm:$0xff]
  %v2728 = vld [vmem:[%s3 + $0x150] sm:$0xff]
  %v2729 = vld [vmem:[%s3 + $0x158] sm:$0xff]
  %v2730 = vld [vmem:[%s3 + $0x160] sm:$0xff]
  %v2731 = vld [vmem:[%s3 + $0x168] sm:$0xff]
  %v2732 = vld [vmem:[%s3 + $0x170] sm:$0xff]
  %v2733 = vld [vmem:[%s3 + $0x178] sm:$0xff]
  %s2734 = scalar_lea.vmem %s3, 384
  %v2735 = vld [vmem:[%s2734] sm:$0xff]
  %v2736 = vld [vmem:[%s2734 + $0x8] sm:$0xff]
  %v2737 = vld [vmem:[%s2734 + $0x10] sm:$0xff]
  %v2738 = vld [vmem:[%s2734 + $0x18] sm:$0xff]
  %v2739 = vld [vmem:[%s2734 + $0x20] sm:$0xff]
  %v2740 = vld [vmem:[%s2734 + $0x28] sm:$0xff]
  %v2741 = vld [vmem:[%s2734 + $0x30] sm:$0xff]
  %v2742 = vld [vmem:[%s2734 + $0x38] sm:$0xff]
  %v2743 = vld [vmem:[%s2734 + $0x40] sm:$0xff]
  %v2744 = vld [vmem:[%s2734 + $0x48] sm:$0xff]
  %v2745 = vld [vmem:[%s2734 + $0x50] sm:$0xff]
  %v2746 = vld [vmem:[%s2734 + $0x58] sm:$0xff]
  %v2747 = vld [vmem:[%s2734 + $0x60] sm:$0xff]
  %v2748 = vld [vmem:[%s2734 + $0x68] sm:$0xff]
  %v2749 = vld [vmem:[%s2734 + $0x70] sm:$0xff]
  %v2750 = vld [vmem:[%s2734 + $0x78] sm:$0xff]
  %v2751 = vld [vmem:[%s2734 + $0x80] sm:$0xff]
  %v2752 = vld [vmem:[%s2734 + $0x88] sm:$0xff]
  %v2753 = vld [vmem:[%s2734 + $0x90] sm:$0xff]
  %v2754 = vld [vmem:[%s2734 + $0x98] sm:$0xff]
  %v2755 = vld [vmem:[%s2734 + $0xa0] sm:$0xff]
  %v2756 = vld [vmem:[%s2734 + $0xa8] sm:$0xff]
  %v2757 = vld [vmem:[%s2734 + $0xb0] sm:$0xff]
  %v2758 = vld [vmem:[%s2734 + $0xb8] sm:$0xff]
  %v2759 = vld [vmem:[%s2734 + $0xc0] sm:$0xff]
  %v2760 = vld [vmem:[%s2734 + $0xc8] sm:$0xff]
  %v2761 = vld [vmem:[%s2734 + $0xd0] sm:$0xff]
  %v2762 = vld [vmem:[%s2734 + $0xd8] sm:$0xff]
  %v2763 = vld [vmem:[%s2734 + $0xe0] sm:$0xff]
  %v2764 = vld [vmem:[%s2734 + $0xe8] sm:$0xff]
  %v2765 = vld [vmem:[%s2734 + $0xf0] sm:$0xff]
  %v2766 = vld [vmem:[%s2734 + $0xf8] sm:$0xff]
  %v2767 = vld [vmem:[%s2734 + $0x100] sm:$0xff]
  %v2768 = vld [vmem:[%s2734 + $0x108] sm:$0xff]
  %v2769 = vld [vmem:[%s2734 + $0x110] sm:$0xff]
  %v2770 = vld [vmem:[%s2734 + $0x118] sm:$0xff]
  %v2771 = vld [vmem:[%s2734 + $0x120] sm:$0xff]
  %v2772 = vld [vmem:[%s2734 + $0x128] sm:$0xff]
  %v2773 = vld [vmem:[%s2734 + $0x130] sm:$0xff]
  %v2774 = vld [vmem:[%s2734 + $0x138] sm:$0xff]
  %v2775 = vld [vmem:[%s2734 + $0x140] sm:$0xff]
  %v2776 = vld [vmem:[%s2734 + $0x148] sm:$0xff]
  %v2777 = vld [vmem:[%s2734 + $0x150] sm:$0xff]
  %v2778 = vld [vmem:[%s2734 + $0x158] sm:$0xff]
  %v2779 = vld [vmem:[%s2734 + $0x160] sm:$0xff]
  %v2780 = vld [vmem:[%s2734 + $0x168] sm:$0xff]
  %v2781 = vld [vmem:[%s2734 + $0x170] sm:$0xff]
  %v2782 = vld [vmem:[%s2734 + $0x178] sm:$0xff]
  %vm2783 = vcmask 523264
  %v2785 = vsel %vm2783, %v2601, 0
  %v2788 = vsel %vm2783, %v2607, 0
  %2790 = vmatprep.subr.mxu0 %v2736
  %2791 = vmatpush1.msra.mxu0 %v2735
  %2792 = vmatprep.subr.mxu0 %v2738
  %2793 = vmatpush1.msra.mxu0 %v2737
  %2794 = vmatprep.subr.mxu0 %v2740
  %2795 = vmatpush1.msra.mxu0 %v2739
  %2796 = vmatprep.subr.mxu0 %v2742
  %2797 = vmatpush1.msra.mxu0 %v2741
  %2798 = vmatprep.subr.mxu0 %v2744
  %2799 = vmatpush1.msra.mxu0 %v2743
  %2800 = vmatprep.subr.mxu0 %v2746
  %2801 = vmatpush1.msra.mxu0 %v2745
  %2802 = vmatprep.subr.mxu0 %v2748
  %2803 = vmatpush1.msra.mxu0 %v2747
  %2804 = vmatprep.subr.mxu0 %v2750
  %2805 = vmatpush1.msra.mxu0 %v2749
  %2806 = vmatprep.subr.mxu0 %v2752
  %2807 = vmatpush1.msra.mxu0 %v2751
  %2808 = vmatprep.subr.mxu0 %v2754
  %2809 = vmatpush1.msra.mxu0 %v2753
  %2810 = vmatprep.subr.mxu0 %v2756
  %2811 = vmatpush1.msra.mxu0 %v2755
  %2812 = vmatprep.subr.mxu0 %v2758
  %2813 = vmatpush1.msra.mxu0 %v2757
  %2814 = vmatprep.subr.mxu0 %v2760
  %2815 = vmatpush1.msra.mxu0 %v2759
  %2816 = vmatprep.subr.mxu0 %v2762
  %2817 = vmatpush1.msra.mxu0 %v2761
  %2818 = vmatprep.subr.mxu0 %v2764
  %2819 = vmatpush1.msra.mxu0 %v2763
  %2820 = vmatprep.subr.mxu0 %v2766
  %2821 = vmatpush1.msra.mxu0 %v2765
  %2822 = vmatprep.subr.mxu0 %v2768
  %2823 = vmatpush1.msra.mxu0 %v2767
  %2824 = vmatprep.subr.mxu0 %v2770
  %2825 = vmatpush1.msra.mxu0 %v2769
  %2826 = vmatprep.subr.mxu0 %v2772
  %2827 = vmatpush1.msra.mxu0 %v2771
  %2828 = vmatprep.subr.mxu0 %v2774
  %2829 = vmatpush1.msra.mxu0 %v2773
  %2830 = vmatprep.subr.mxu0 %v2776
  %2831 = vmatpush1.msra.mxu0 %v2775
  %2832 = vmatprep.subr.mxu0 %v2778
  %2833 = vmatpush1.msra.mxu0 %v2777
  %2834 = vmatprep.subr.mxu0 %v2780
  %2835 = vmatpush1.msra.mxu0 %v2779
  %2836 = vmatprep.subr.mxu0 %v2782
  %2837 = vmatpush1.msra.mxu0 %v2781
  %2838 = vmatprep.subr.mxu0 0.0
  %2839 = vmatpush1.msra.mxu0 0.0
  %2840 = vmatprep.subr.mxu0 0.0
  %2841 = vmatpush1.msra.mxu0 0.0
  %2842 = vmatprep.subr.mxu0 0.0
  %2843 = vmatpush1.msra.mxu0 0.0
  %2844 = vmatprep.subr.mxu0 0.0
  %2845 = vmatpush1.msra.mxu0 0.0
  %2846 = vmatprep.subr.mxu0 0.0
  %2847 = vmatpush1.msra.mxu0 0.0
  %2848 = vmatprep.subr.mxu0 0.0
  %2849 = vmatpush1.msra.mxu0 0.0
  %2850 = vmatprep.subr.mxu0 0.0
  %2851 = vmatpush1.msra.mxu0 0.0
  %2852 = vmatprep.subr.mxu0 0.0
  %2853 = vmatpush1.msra.mxu0 0.0
  %2854 = vmatprep.mubr.f32.mxu0 %v2785
  %2855 = vmatmul.mubr.f32.gmra.mrb[0].mxu0 %v2599
  %v2856 = vpop.f32.mrb[0].mxu0
  %v2857 = vadd.f32 0.0, %v2856
  %v2858 = vpop.f32.mrb[0].mxu0
  %v2859 = vadd.f32 0.0, %v2858
  %2860 = vmatprep.mubr.f32.mxu0 %v2788
  %2861 = vmatmul.mubr.f32.gmra.mrb[0].mxu0 %v2605
  %v2862 = vpop.f32.mrb[0].mxu0
  %v2863 = vadd.f32 0.0, %v2862
  %v2864 = vpop.f32.mrb[0].mxu0
  %v2865 = vadd.f32 0.0, %v2864
  %2866 = vdwg.mxu0
  %v2868 = vsel %vm2783, %v2448, 0
  %v2871 = vsel %vm2783, %v2454, 0
  %2873 = vmatprep.subr.mxu0 %v2687
  %2874 = vmatpush1.msra.mxu0 %v2686
  %2875 = vmatprep.subr.mxu0 %v2689
  %2876 = vmatpush1.msra.mxu0 %v2688
  %2877 = vmatprep.subr.mxu0 %v2691
  %2878 = vmatpush1.msra.mxu0 %v2690
  %2879 = vmatprep.subr.mxu0 %v2693
  %2880 = vmatpush1.msra.mxu0 %v2692
  %2881 = vmatprep.subr.mxu0 %v2695
  %2882 = vmatpush1.msra.mxu0 %v2694
  %2883 = vmatprep.subr.mxu0 %v2697
  %2884 = vmatpush1.msra.mxu0 %v2696
  %2885 = vmatprep.subr.mxu0 %v2699
  %2886 = vmatpush1.msra.mxu0 %v2698
  %2887 = vmatprep.subr.mxu0 %v2701
  %2888 = vmatpush1.msra.mxu0 %v2700
  %2889 = vmatprep.subr.mxu0 %v2703
  %2890 = vmatpush1.msra.mxu0 %v2702
  %2891 = vmatprep.subr.mxu0 %v2705
  %2892 = vmatpush1.msra.mxu0 %v2704
  %2893 = vmatprep.subr.mxu0 %v2707
  %2894 = vmatpush1.msra.mxu0 %v2706
  %2895 = vmatprep.subr.mxu0 %v2709
  %2896 = vmatpush1.msra.mxu0 %v2708
  %2897 = vmatprep.subr.mxu0 %v2711
  %2898 = vmatpush1.msra.mxu0 %v2710
  %2899 = vmatprep.subr.mxu0 %v2713
  %2900 = vmatpush1.msra.mxu0 %v2712
  %2901 = vmatprep.subr.mxu0 %v2715
  %2902 = vmatpush1.msra.mxu0 %v2714
  %2903 = vmatprep.subr.mxu0 %v2717
  %2904 = vmatpush1.msra.mxu0 %v2716
  %2905 = vmatprep.subr.mxu0 %v2719
  %2906 = vmatpush1.msra.mxu0 %v2718
  %2907 = vmatprep.subr.mxu0 %v2721
  %2908 = vmatpush1.msra.mxu0 %v2720
  %2909 = vmatprep.subr.mxu0 %v2723
  %2910 = vmatpush1.msra.mxu0 %v2722
  %2911 = vmatprep.subr.mxu0 %v2725
  %2912 = vmatpush1.msra.mxu0 %v2724
  %2913 = vmatprep.subr.mxu0 %v2727
  %2914 = vmatpush1.msra.mxu0 %v2726
  %2915 = vmatprep.subr.mxu0 %v2729
  %2916 = vmatpush1.msra.mxu0 %v2728
  %2917 = vmatprep.subr.mxu0 %v2731
  %2918 = vmatpush1.msra.mxu0 %v2730
  %2919 = vmatprep.subr.mxu0 %v2733
  %2920 = vmatpush1.msra.mxu0 %v2732
  %2921 = vmatprep.subr.mxu0 0.0
  %2922 = vmatpush1.msra.mxu0 0.0
  %2923 = vmatprep.subr.mxu0 0.0
  %2924 = vmatpush1.msra.mxu0 0.0
  %2925 = vmatprep.subr.mxu0 0.0
  %2926 = vmatpush1.msra.mxu0 0.0
  %2927 = vmatprep.subr.mxu0 0.0
  %2928 = vmatpush1.msra.mxu0 0.0
  %2929 = vmatprep.subr.mxu0 0.0
  %2930 = vmatpush1.msra.mxu0 0.0
  %2931 = vmatprep.subr.mxu0 0.0
  %2932 = vmatpush1.msra.mxu0 0.0
  %2933 = vmatprep.subr.mxu0 0.0
  %2934 = vmatpush1.msra.mxu0 0.0
  %2935 = vmatprep.subr.mxu0 0.0
  %2936 = vmatpush1.msra.mxu0 0.0
  %2937 = vmatprep.mubr.f32.mxu0 %v2868
  %2938 = vmatmul.mubr.f32.gmra.mrb[0].mxu0 %v2446
  %v2939 = vpop.f32.mrb[0].mxu0
  %v2940 = vadd.f32 %v2857, %v2939
  %v2941 = vpop.f32.mrb[0].mxu0
  %v2942 = vadd.f32 %v2859, %v2941
  %2943 = vmatprep.mubr.f32.mxu0 %v2871
  %2944 = vmatmul.mubr.f32.gmra.mrb[0].mxu0 %v2452
  %v2945 = vpop.f32.mrb[0].mxu0
  %v2946 = vadd.f32 %v2863, %v2945
  %v2947 = vpop.f32.mrb[0].mxu0
  %v2948 = vadd.f32 %v2865, %v2947
  %2949 = vdwg.mxu0
  %s2950 = scalar_lea.vmem %s3, 768
  %v2951 = vld [vmem:[%s2950] sm:$0xff]
  %v2952 = vld [vmem:[%s2950 + $0x8] sm:$0xff]
  %v2953 = vld [vmem:[%s2950 + $0x10] sm:$0xff]
  %v2954 = vld [vmem:[%s2950 + $0x18] sm:$0xff]
  %v2955 = vld [vmem:[%s2950 + $0x20] sm:$0xff]
  %v2956 = vld [vmem:[%s2950 + $0x28] sm:$0xff]
  %v2957 = vld [vmem:[%s2950 + $0x30] sm:$0xff]
  %v2958 = vld [vmem:[%s2950 + $0x38] sm:$0xff]
  %v2959 = vld [vmem:[%s2950 + $0x40] sm:$0xff]
  %v2960 = vld [vmem:[%s2950 + $0x48] sm:$0xff]
  %v2961 = vld [vmem:[%s2950 + $0x50] sm:$0xff]
  %v2962 = vld [vmem:[%s2950 + $0x58] sm:$0xff]
  %v2963 = vld [vmem:[%s2950 + $0x60] sm:$0xff]
  %v2964 = vld [vmem:[%s2950 + $0x68] sm:$0xff]
  %v2965 = vld [vmem:[%s2950 + $0x70] sm:$0xff]
  %v2966 = vld [vmem:[%s2950 + $0x78] sm:$0xff]
  %v2967 = vld [vmem:[%s2950 + $0x80] sm:$0xff]
  %v2968 = vld [vmem:[%s2950 + $0x88] sm:$0xff]
  %v2969 = vld [vmem:[%s2950 + $0x90] sm:$0xff]
  %v2970 = vld [vmem:[%s2950 + $0x98] sm:$0xff]
  %v2971 = vld [vmem:[%s2950 + $0xa0] sm:$0xff]
  %v2972 = vld [vmem:[%s2950 + $0xa8] sm:$0xff]
  %v2973 = vld [vmem:[%s2950 + $0xb0] sm:$0xff]
  %v2974 = vld [vmem:[%s2950 + $0xb8] sm:$0xff]
  %v2975 = vld [vmem:[%s2950 + $0xc0] sm:$0xff]
  %v2976 = vld [vmem:[%s2950 + $0xc8] sm:$0xff]
  %v2977 = vld [vmem:[%s2950 + $0xd0] sm:$0xff]
  %v2978 = vld [vmem:[%s2950 + $0xd8] sm:$0xff]
  %v2979 = vld [vmem:[%s2950 + $0xe0] sm:$0xff]
  %v2980 = vld [vmem:[%s2950 + $0xe8] sm:$0xff]
  %v2981 = vld [vmem:[%s2950 + $0xf0] sm:$0xff]
  %v2982 = vld [vmem:[%s2950 + $0xf8] sm:$0xff]
  %v2983 = vld [vmem:[%s2950 + $0x100] sm:$0xff]
  %v2984 = vld [vmem:[%s2950 + $0x108] sm:$0xff]
  %v2985 = vld [vmem:[%s2950 + $0x110] sm:$0xff]
  %v2986 = vld [vmem:[%s2950 + $0x118] sm:$0xff]
  %v2987 = vld [vmem:[%s2950 + $0x120] sm:$0xff]
  %v2988 = vld [vmem:[%s2950 + $0x128] sm:$0xff]
  %v2989 = vld [vmem:[%s2950 + $0x130] sm:$0xff]
  %v2990 = vld [vmem:[%s2950 + $0x138] sm:$0xff]
  %v2991 = vld [vmem:[%s2950 + $0x140] sm:$0xff]
  %v2992 = vld [vmem:[%s2950 + $0x148] sm:$0xff]
  %v2993 = vld [vmem:[%s2950 + $0x150] sm:$0xff]
  %v2994 = vld [vmem:[%s2950 + $0x158] sm:$0xff]
  %v2995 = vld [vmem:[%s2950 + $0x160] sm:$0xff]
  %v2996 = vld [vmem:[%s2950 + $0x168] sm:$0xff]
  %v2997 = vld [vmem:[%s2950 + $0x170] sm:$0xff]
  %v2998 = vld [vmem:[%s2950 + $0x178] sm:$0xff]
  %v3000 = vsel %vm2783, %v2678, 0
  %v3003 = vsel %vm2783, %v2684, 0
  %3005 = vmatprep.subr.mxu0 %v2952
  %3006 = vmatpush1.msra.mxu0 %v2951
  %3007 = vmatprep.subr.mxu0 %v2954
  %3008 = vmatpush1.msra.mxu0 %v2953
  %3009 = vmatprep.subr.mxu0 %v2956
  %3010 = vmatpush1.msra.mxu0 %v2955
  %3011 = vmatprep.subr.mxu0 %v2958
  %3012 = vmatpush1.msra.mxu0 %v2957
  %3013 = vmatprep.subr.mxu0 %v2960
  %3014 = vmatpush1.msra.mxu0 %v2959
  %3015 = vmatprep.subr.mxu0 %v2962
  %3016 = vmatpush1.msra.mxu0 %v2961
  %3017 = vmatprep.subr.mxu0 %v2964
  %3018 = vmatpush1.msra.mxu0 %v2963
  %3019 = vmatprep.subr.mxu0 %v2966
  %3020 = vmatpush1.msra.mxu0 %v2965
  %3021 = vmatprep.subr.mxu0 %v2968
  %3022 = vmatpush1.msra.mxu0 %v2967
  %3023 = vmatprep.subr.mxu0 %v2970
  %3024 = vmatpush1.msra.mxu0 %v2969
  %3025 = vmatprep.subr.mxu0 %v2972
  %3026 = vmatpush1.msra.mxu0 %v2971
  %3027 = vmatprep.subr.mxu0 %v2974
  %3028 = vmatpush1.msra.mxu0 %v2973
  %3029 = vmatprep.subr.mxu0 %v2976
  %3030 = vmatpush1.msra.mxu0 %v2975
  %3031 = vmatprep.subr.mxu0 %v2978
  %3032 = vmatpush1.msra.mxu0 %v2977
  %3033 = vmatprep.subr.mxu0 %v2980
  %3034 = vmatpush1.msra.mxu0 %v2979
  %3035 = vmatprep.subr.mxu0 %v2982
  %3036 = vmatpush1.msra.mxu0 %v2981
  %3037 = vmatprep.subr.mxu0 %v2984
  %3038 = vmatpush1.msra.mxu0 %v2983
  %3039 = vmatprep.subr.mxu0 %v2986
  %3040 = vmatpush1.msra.mxu0 %v2985
  %3041 = vmatprep.subr.mxu0 %v2988
  %3042 = vmatpush1.msra.mxu0 %v2987
  %3043 = vmatprep.subr.mxu0 %v2990
  %3044 = vmatpush1.msra.mxu0 %v2989
  %3045 = vmatprep.subr.mxu0 %v2992
  %3046 = vmatpush1.msra.mxu0 %v2991
  %3047 = vmatprep.subr.mxu0 %v2994
  %3048 = vmatpush1.msra.mxu0 %v2993
  %3049 = vmatprep.subr.mxu0 %v2996
  %3050 = vmatpush1.msra.mxu0 %v2995
  %3051 = vmatprep.subr.mxu0 %v2998
  %3052 = vmatpush1.msra.mxu0 %v2997
  %3053 = vmatprep.subr.mxu0 0.0
  %3054 = vmatpush1.msra.mxu0 0.0
  %3055 = vmatprep.subr.mxu0 0.0
  %3056 = vmatpush1.msra.mxu0 0.0
  %3057 = vmatprep.subr.mxu0 0.0
  %3058 = vmatpush1.msra.mxu0 0.0
  %3059 = vmatprep.subr.mxu0 0.0
  %3060 = vmatpush1.msra.mxu0 0.0
  %3061 = vmatprep.subr.mxu0 0.0
  %3062 = vmatpush1.msra.mxu0 0.0
  %3063 = vmatprep.subr.mxu0 0.0
  %3064 = vmatpush1.msra.mxu0 0.0
  %3065 = vmatprep.subr.mxu0 0.0
  %3066 = vmatpush1.msra.mxu0 0.0
  %3067 = vmatprep.subr.mxu0 0.0
  %3068 = vmatpush1.msra.mxu0 0.0
  %3069 = vmatprep.mubr.f32.mxu0 %v3000
  %3070 = vmatmul.mubr.f32.gmra.mrb[0].mxu0 %v2676
  %v3071 = vpop.f32.mrb[0].mxu0
  %v3072 = vadd.f32 0.0, %v3071
  %v3073 = vpop.f32.mrb[0].mxu0
  %v3074 = vadd.f32 0.0, %v3073
  %3075 = vmatprep.mubr.f32.mxu0 %v3003
  %3076 = vmatmul.mubr.f32.gmra.mrb[0].mxu0 %v2682
  %v3077 = vpop.f32.mrb[0].mxu0
  %v3078 = vadd.f32 0.0, %v3077
  %v3079 = vpop.f32.mrb[0].mxu0
  %v3080 = vadd.f32 0.0, %v3079
  %3081 = vdwg.mxu0
  %v3082 = vadd.f32 %v2940, %v3072
  %v3083 = vadd.f32 %v2942, %v3074
  %v3084 = vadd.f32 %v2946, %v3078
  %v3085 = vadd.f32 %v2948, %v3080
  %v3087 = vlaneseq
  %v3088 = vshrl.u32 %v3087, 7
  %v3089 = vsub.s32 0, %v3088
  %v3090 = vrot.slane %v2457, %v3089
  %v3091 = vlaneseq
  %v3092 = vshrl.u32 %v3091, 7
  %v3093 = vsub.s32 1, %v3092
  %v3094 = vrot.slane %v2457, %v3093
  %v3097 = vadd.f32 %v3082, %v3090
  %v3098 = vadd.f32 %v3083, %v3094
  %v3099 = vadd.f32 %v3084, %v3090
  %v3100 = vadd.f32 %v3085, %v3094
  %v3101 = vmax.f32 %v3097, 0.0
  %v3102 = vmax.f32 %v3098, 0.0
  %v3103 = vmax.f32 %v3099, 0.0
  %v3104 = vmax.f32 %v3100, 0.0
  %3105 = vmatprep.subr.mxu0 %v3102
  %3106 = vmatpush1.msra.mxu0 %v3101
  %3107 = vmatprep.subr.mxu0 %v3104
  %3108 = vmatpush1.msra.mxu0 %v3103
  %3109 = vmatprep.subr.mxu0 0.0
  %3110 = vmatpush1.msra.mxu0 0.0
  %3111 = vmatprep.subr.mxu0 0.0
  %3112 = vmatpush1.msra.mxu0 0.0
  %3113 = vmatprep.subr.mxu0 0.0
  %3114 = vmatpush1.msra.mxu0 0.0
  %3115 = vmatprep.subr.mxu0 0.0
  %3116 = vmatpush1.msra.mxu0 0.0
  %3117 = vmatprep.subr.mxu0 0.0
  %3118 = vmatpush1.msra.mxu0 0.0
  %3119 = vmatprep.subr.mxu0 0.0
  %3120 = vmatpush1.msra.mxu0 0.0
  %3121 = vmatprep.subr.mxu0 0.0
  %3122 = vmatpush1.msra.mxu0 0.0
  %3123 = vmatprep.subr.mxu0 0.0
  %3124 = vmatpush1.msra.mxu0 0.0
  %3125 = vmatprep.subr.mxu0 0.0
  %3126 = vmatpush1.msra.mxu0 0.0
  %3127 = vmatprep.subr.mxu0 0.0
  %3128 = vmatpush1.msra.mxu0 0.0
  %3129 = vmatprep.subr.mxu0 0.0
  %3130 = vmatpush1.msra.mxu0 0.0
  %3131 = vmatprep.subr.mxu0 0.0
  %3132 = vmatpush1.msra.mxu0 0.0
  %3133 = vmatprep.subr.mxu0 0.0
  %3134 = vmatpush1.msra.mxu0 0.0
  %3135 = vmatprep.subr.mxu0 0.0
  %3136 = vmatpush1.msra.mxu0 0.0
  %3137 = vmatprep.subr.mxu0 0.0
  %3138 = vmatpush1.msra.mxu0 0.0
  %3139 = vmatprep.subr.mxu0 0.0
  %3140 = vmatpush1.msra.mxu0 0.0
  %3141 = vmatprep.subr.mxu0 0.0
  %3142 = vmatpush1.msra.mxu0 0.0
  %3143 = vmatprep.subr.mxu0 0.0
  %3144 = vmatpush1.msra.mxu0 0.0
  %3145 = vmatprep.subr.mxu0 0.0
  %3146 = vmatpush1.msra.mxu0 0.0
  %3147 = vmatprep.subr.mxu0 0.0
  %3148 = vmatpush1.msra.mxu0 0.0
  %3149 = vmatprep.subr.mxu0 0.0
  %3150 = vmatpush1.msra.mxu0 0.0
  %3151 = vmatprep.subr.mxu0 0.0
  %3152 = vmatpush1.msra.mxu0 0.0
  %3153 = vmatprep.subr.mxu0 0.0
  %3154 = vmatpush1.msra.mxu0 0.0
  %3155 = vmatprep.subr.mxu0 0.0
  %3156 = vmatpush1.msra.mxu0 0.0
  %3157 = vmatprep.subr.mxu0 0.0
  %3158 = vmatpush1.msra.mxu0 0.0
  %3159 = vmatprep.subr.mxu0 0.0
  %3160 = vmatpush1.msra.mxu0 0.0
  %3161 = vmatprep.subr.mxu0 0.0
  %3162 = vmatpush1.msra.mxu0 0.0
  %3163 = vmatprep.subr.mxu0 0.0
  %3164 = vmatpush1.msra.mxu0 0.0
  %3165 = vmatprep.subr.mxu0 0.0
  %3166 = vmatpush1.msra.mxu0 0.0
  %3167 = vmatprep.subr.mxu0 0.0
  %3168 = vmatpush1.msra.mxu0 0.0
  %3169 = vmatprep.mubr.f32.mxu0 0.0
  %3170 = vmatmul.mubr.f32.gmra.mrb[0].mxu0 %v2527
  %v3171 = vpop.f32.mrb[0].mxu0
  %v3172 = vadd.f32 0.0, %v3171
  %v3173 = vpop.f32.mrb[0].mxu0
  %v3174 = vadd.f32 0.0, %v3173
  %3175 = vmatprep.mubr.f32.mxu0 0.0
  %3176 = vmatmul.mubr.f32.gmra.mrb[0].mxu0 %v2530
  %v3177 = vpop.f32.mrb[0].mxu0
  %v3178 = vadd.f32 0.0, %v3177
  %v3179 = vpop.f32.mrb[0].mxu0
  %v3180 = vadd.f32 0.0, %v3179
  %3181 = vdwg.mxu0
  %v3182 = vmax.f32 %v3101, %v3172
  %v3183 = vmax.f32 %v3102, %v3174
  %v3184 = vmax.f32 %v3103, %v3178
  %v3185 = vmax.f32 %v3104, %v3180
  %3186 = vmatprep.subr.mxu0 %v2462
  %3187 = vmatpush1.msra.mxu0 %v2461
  %3188 = vmatprep.subr.mxu0 %v2464
  %3189 = vmatpush1.msra.mxu0 %v2463
  %3190 = vmatprep.subr.mxu0 %v2466
  %3191 = vmatpush1.msra.mxu0 %v2465
  %3192 = vmatprep.subr.mxu0 %v2468
  %3193 = vmatpush1.msra.mxu0 %v2467
  %3194 = vmatprep.subr.mxu0 %v2470
  %3195 = vmatpush1.msra.mxu0 %v2469
  %3196 = vmatprep.subr.mxu0 %v2472
  %3197 = vmatpush1.msra.mxu0 %v2471
  %3198 = vmatprep.subr.mxu0 %v2474
  %3199 = vmatpush1.msra.mxu0 %v2473
  %3200 = vmatprep.subr.mxu0 %v2476
  %3201 = vmatpush1.msra.mxu0 %v2475
  %3202 = vmatprep.subr.mxu0 %v2478
  %3203 = vmatpush1.msra.mxu0 %v2477
  %3204 = vmatprep.subr.mxu0 %v2480
  %3205 = vmatpush1.msra.mxu0 %v2479
  %3206 = vmatprep.subr.mxu0 %v2482
  %3207 = vmatpush1.msra.mxu0 %v2481
  %3208 = vmatprep.subr.mxu0 %v2484
  %3209 = vmatpush1.msra.mxu0 %v2483
  %3210 = vmatprep.subr.mxu0 %v2486
  %3211 = vmatpush1.msra.mxu0 %v2485
  %3212 = vmatprep.subr.mxu0 %v2488
  %3213 = vmatpush1.msra.mxu0 %v2487
  %3214 = vmatprep.subr.mxu0 %v2490
  %3215 = vmatpush1.msra.mxu0 %v2489
  %3216 = vmatprep.subr.mxu0 %v2492
  %3217 = vmatpush1.msra.mxu0 %v2491
  %3218 = vmatprep.subr.mxu0 %v2494
  %3219 = vmatpush1.msra.mxu0 %v2493
  %3220 = vmatprep.subr.mxu0 %v2496
  %3221 = vmatpush1.msra.mxu0 %v2495
  %3222 = vmatprep.subr.mxu0 %v2498
  %3223 = vmatpush1.msra.mxu0 %v2497
  %3224 = vmatprep.subr.mxu0 %v2500
  %3225 = vmatpush1.msra.mxu0 %v2499
  %3226 = vmatprep.subr.mxu0 %v2502
  %3227 = vmatpush1.msra.mxu0 %v2501
  %3228 = vmatprep.subr.mxu0 %v2504
  %3229 = vmatpush1.msra.mxu0 %v2503
  %3230 = vmatprep.subr.mxu0 %v2506
  %3231 = vmatpush1.msra.mxu0 %v2505
  %3232 = vmatprep.subr.mxu0 %v2508
  %3233 = vmatpush1.msra.mxu0 %v2507
  %3234 = vmatprep.subr.mxu0 %v2510
  %3235 = vmatpush1.msra.mxu0 %v2509
  %3236 = vmatprep.subr.mxu0 %v2512
  %3237 = vmatpush1.msra.mxu0 %v2511
  %3238 = vmatprep.subr.mxu0 %v2514
  %3239 = vmatpush1.msra.mxu0 %v2513
  %3240 = vmatprep.subr.mxu0 %v2516
  %3241 = vmatpush1.msra.mxu0 %v2515
  %3242 = vmatprep.subr.mxu0 %v2518
  %3243 = vmatpush1.msra.mxu0 %v2517
  %3244 = vmatprep.subr.mxu0 %v2520
  %3245 = vmatpush1.msra.mxu0 %v2519
  %3246 = vmatprep.subr.mxu0 %v2522
  %3247 = vmatpush1.msra.mxu0 %v2521
  %3248 = vmatprep.subr.mxu0 %v2524
  %3249 = vmatpush1.msra.mxu0 %v2523
  %3250 = vmatprep.mubr.f32.mxu0 %v3183
  %3251 = vmatmul.mubr.f32.gmra.mrb[0].mxu0 %v3182
  %v3252 = vpop.f32.mrb[0].mxu0
  %v3253 = vadd.f32 0.0, %v3252
  %v3254 = vpop.f32.mrb[0].mxu0
  %v3255 = vadd.f32 0.0, %v3254
  %3256 = vmatprep.mubr.f32.mxu0 %v3185
  %3257 = vmatmul.mubr.f32.gmra.mrb[0].mxu0 %v3184
  %v3258 = vpop.f32.mrb[0].mxu0
  %v3259 = vadd.f32 0.0, %v3258
  %v3260 = vpop.f32.mrb[0].mxu0
  %v3261 = vadd.f32 0.0, %v3260
  %3262 = vdwg.mxu0
  %v3263 = vmax.f32 %v3182, %v3253
  %v3264 = vmax.f32 %v3183, %v3255
  %v3265 = vmax.f32 %v3184, %v3259
  %v3266 = vmax.f32 %v3185, %v3261
  %v3267 = vld [vmem:[%s13] sm:$0x3]
  %v3269 = vsel %vm2525, %v3267, 0
  %3271 = vmatprep.subr.mxu0 %v3264
  %3272 = vmatpush1.msra.mxu0 %v3263
  %3273 = vmatprep.subr.mxu0 %v3266
  %3274 = vmatpush1.msra.mxu0 %v3265
  %3275 = vmatprep.subr.mxu0 0.0
  %3276 = vmatpush1.msra.mxu0 0.0
  %3277 = vmatprep.subr.mxu0 0.0
  %3278 = vmatpush1.msra.mxu0 0.0
  %3279 = vmatprep.subr.mxu0 0.0
  %3280 = vmatpush1.msra.mxu0 0.0
  %3281 = vmatprep.subr.mxu0 0.0
  %3282 = vmatpush1.msra.mxu0 0.0
  %3283 = vmatprep.subr.mxu0 0.0
  %3284 = vmatpush1.msra.mxu0 0.0
  %3285 = vmatprep.subr.mxu0 0.0
  %3286 = vmatpush1.msra.mxu0 0.0
  %3287 = vmatprep.subr.mxu0 0.0
  %3288 = vmatpush1.msra.mxu0 0.0
  %3289 = vmatprep.subr.mxu0 0.0
  %3290 = vmatpush1.msra.mxu0 0.0
  %3291 = vmatprep.subr.mxu0 0.0
  %3292 = vmatpush1.msra.mxu0 0.0
  %3293 = vmatprep.subr.mxu0 0.0
  %3294 = vmatpush1.msra.mxu0 0.0
  %3295 = vmatprep.subr.mxu0 0.0
  %3296 = vmatpush1.msra.mxu0 0.0
  %3297 = vmatprep.subr.mxu0 0.0
  %3298 = vmatpush1.msra.mxu0 0.0
  %3299 = vmatprep.subr.mxu0 0.0
  %3300 = vmatpush1.msra.mxu0 0.0
  %3301 = vmatprep.subr.mxu0 0.0
  %3302 = vmatpush1.msra.mxu0 0.0
  %3303 = vmatprep.subr.mxu0 0.0
  %3304 = vmatpush1.msra.mxu0 0.0
  %3305 = vmatprep.subr.mxu0 0.0
  %3306 = vmatpush1.msra.mxu0 0.0
  %3307 = vmatprep.subr.mxu0 0.0
  %3308 = vmatpush1.msra.mxu0 0.0
  %3309 = vmatprep.subr.mxu0 0.0
  %3310 = vmatpush1.msra.mxu0 0.0
  %3311 = vmatprep.subr.mxu0 0.0
  %3312 = vmatpush1.msra.mxu0 0.0
  %3313 = vmatprep.subr.mxu0 0.0
  %3314 = vmatpush1.msra.mxu0 0.0
  %3315 = vmatprep.subr.mxu0 0.0
  %3316 = vmatpush1.msra.mxu0 0.0
  %3317 = vmatprep.subr.mxu0 0.0
  %3318 = vmatpush1.msra.mxu0 0.0
  %3319 = vmatprep.subr.mxu0 0.0
  %3320 = vmatpush1.msra.mxu0 0.0
  %3321 = vmatprep.subr.mxu0 0.0
  %3322 = vmatpush1.msra.mxu0 0.0
  %3323 = vmatprep.subr.mxu0 0.0
  %3324 = vmatpush1.msra.mxu0 0.0
  %3325 = vmatprep.subr.mxu0 0.0
  %3326 = vmatpush1.msra.mxu0 0.0
  %3327 = vmatprep.subr.mxu0 0.0
  %3328 = vmatpush1.msra.mxu0 0.0
  %3329 = vmatprep.subr.mxu0 0.0
  %3330 = vmatpush1.msra.mxu0 0.0
  %3331 = vmatprep.subr.mxu0 0.0
  %3332 = vmatpush1.msra.mxu0 0.0
  %3333 = vmatprep.subr.mxu0 0.0
  %3334 = vmatpush1.msra.mxu0 0.0
  %3335 = vmatprep.mubr.f32.mxu0 0.0
  %3336 = vmatmul.mubr.f32.gmra.mrb[0].mxu0 %v3269
  %v3337 = vpop.f32.mrb[0].mxu0
  %v3338 = vadd.f32 0.0, %v3337
  %v3339 = vpop.f32.mrb[0].mxu0
  %v3340 = vadd.f32 0.0, %v3339
  %3341 = vdwg.mxu0
  %v3342 = vld [vmem:[%s14] sm:$0xff]
  %v3343 = vld [vmem:[%s14 + $0x8] sm:$0xff]
  %v3344 = vld [vmem:[%s14 + $0x10] sm:$0xff]
  %v3345 = vld [vmem:[%s14 + $0x18] sm:$0xff]
  %v3346 = vld [vmem:[%s14 + $0x20] sm:$0xff]
  %v3347 = vld [vmem:[%s14 + $0x28] sm:$0xff]
  %v3348 = vld [vmem:[%s14 + $0x30] sm:$0xff]
  %v3349 = vld [vmem:[%s14 + $0x38] sm:$0xff]
  %v3350 = vld [vmem:[%s14 + $0x40] sm:$0xff]
  %v3351 = vld [vmem:[%s14 + $0x48] sm:$0xff]
  %v3352 = vld [vmem:[%s14 + $0x50] sm:$0xff]
  %v3353 = vld [vmem:[%s14 + $0x58] sm:$0xff]
  %v3354 = vld [vmem:[%s14 + $0x60] sm:$0xff]
  %v3355 = vld [vmem:[%s14 + $0x68] sm:$0xff]
  %v3356 = vld [vmem:[%s14 + $0x70] sm:$0xff]
  %v3357 = vld [vmem:[%s14 + $0x78] sm:$0xff]
  %v3358 = vld [vmem:[%s14 + $0x80] sm:$0xff]
  %v3359 = vld [vmem:[%s14 + $0x88] sm:$0xff]
  %v3360 = vld [vmem:[%s14 + $0x90] sm:$0xff]
  %v3361 = vld [vmem:[%s14 + $0x98] sm:$0xff]
  %v3362 = vld [vmem:[%s14 + $0xa0] sm:$0xff]
  %v3363 = vld [vmem:[%s14 + $0xa8] sm:$0xff]
  %v3364 = vld [vmem:[%s14 + $0xb0] sm:$0xff]
  %v3365 = vld [vmem:[%s14 + $0xb8] sm:$0xff]
  %v3366 = vld [vmem:[%s14 + $0xc0] sm:$0xff]
  %v3367 = vld [vmem:[%s14 + $0xc8] sm:$0xff]
  %v3368 = vld [vmem:[%s14 + $0xd0] sm:$0xff]
  %v3369 = vld [vmem:[%s14 + $0xd8] sm:$0xff]
  %v3370 = vld [vmem:[%s14 + $0xe0] sm:$0xff]
  %v3371 = vld [vmem:[%s14 + $0xe8] sm:$0xff]
  %v3372 = vld [vmem:[%s14 + $0xf0] sm:$0xff]
  %v3373 = vld [vmem:[%s14 + $0xf8] sm:$0xff]
  %s3374 = scalar_lea.vmem %s13, 2
  %v3375 = vld [vmem:[%s3374] sm:$0x3]
  %v3377 = vsel %vm2525, %v3375, 0
  %3379 = vmatprep.subr.mxu0 %v3264
  %3380 = vmatpush1.msra.mxu0 %v3263
  %3381 = vmatprep.subr.mxu0 %v3266
  %3382 = vmatpush1.msra.mxu0 %v3265
  %3383 = vmatprep.subr.mxu0 0.0
  %3384 = vmatpush1.msra.mxu0 0.0
  %3385 = vmatprep.subr.mxu0 0.0
  %3386 = vmatpush1.msra.mxu0 0.0
  %3387 = vmatprep.subr.mxu0 0.0
  %3388 = vmatpush1.msra.mxu0 0.0
  %3389 = vmatprep.subr.mxu0 0.0
  %3390 = vmatpush1.msra.mxu0 0.0
  %3391 = vmatprep.subr.mxu0 0.0
  %3392 = vmatpush1.msra.mxu0 0.0
  %3393 = vmatprep.subr.mxu0 0.0
  %3394 = vmatpush1.msra.mxu0 0.0
  %3395 = vmatprep.subr.mxu0 0.0
  %3396 = vmatpush1.msra.mxu0 0.0
  %3397 = vmatprep.subr.mxu0 0.0
  %3398 = vmatpush1.msra.mxu0 0.0
  %3399 = vmatprep.subr.mxu0 0.0
  %3400 = vmatpush1.msra.mxu0 0.0
  %3401 = vmatprep.subr.mxu0 0.0
  %3402 = vmatpush1.msra.mxu0 0.0
  %3403 = vmatprep.subr.mxu0 0.0
  %3404 = vmatpush1.msra.mxu0 0.0
  %3405 = vmatprep.subr.mxu0 0.0
  %3406 = vmatpush1.msra.mxu0 0.0
  %3407 = vmatprep.subr.mxu0 0.0
  %3408 = vmatpush1.msra.mxu0 0.0
  %3409 = vmatprep.subr.mxu0 0.0
  %3410 = vmatpush1.msra.mxu0 0.0
  %3411 = vmatprep.subr.mxu0 0.0
  %3412 = vmatpush1.msra.mxu0 0.0
  %3413 = vmatprep.subr.mxu0 0.0
  %3414 = vmatpush1.msra.mxu0 0.0
  %3415 = vmatprep.subr.mxu0 0.0
  %3416 = vmatpush1.msra.mxu0 0.0
  %3417 = vmatprep.subr.mxu0 0.0
  %3418 = vmatpush1.msra.mxu0 0.0
  %3419 = vmatprep.subr.mxu0 0.0
  %3420 = vmatpush1.msra.mxu0 0.0
  %3421 = vmatprep.subr.mxu0 0.0
  %3422 = vmatpush1.msra.mxu0 0.0
  %3423 = vmatprep.subr.mxu0 0.0
  %3424 = vmatpush1.msra.mxu0 0.0
  %3425 = vmatprep.subr.mxu0 0.0
  %3426 = vmatpush1.msra.mxu0 0.0
  %3427 = vmatprep.subr.mxu0 0.0
  %3428 = vmatpush1.msra.mxu0 0.0
  %3429 = vmatprep.subr.mxu0 0.0
  %3430 = vmatpush1.msra.mxu0 0.0
  %3431 = vmatprep.subr.mxu0 0.0
  %3432 = vmatpush1.msra.mxu0 0.0
  %3433 = vmatprep.subr.mxu0 0.0
  %3434 = vmatpush1.msra.mxu0 0.0
  %3435 = vmatprep.subr.mxu0 0.0
  %3436 = vmatpush1.msra.mxu0 0.0
  %3437 = vmatprep.subr.mxu0 0.0
  %3438 = vmatpush1.msra.mxu0 0.0
  %3439 = vmatprep.subr.mxu0 0.0
  %3440 = vmatpush1.msra.mxu0 0.0
  %3441 = vmatprep.subr.mxu0 0.0
  %3442 = vmatpush1.msra.mxu0 0.0
  %3443 = vmatprep.mubr.f32.mxu0 0.0
  %3444 = vmatmul.mubr.f32.gmra.mrb[0].mxu0 %v3377
  %v3445 = vpop.f32.mrb[0].mxu0
  %v3446 = vadd.f32 0.0, %v3445
  %v3447 = vpop.f32.mrb[0].mxu0
  %v3448 = vadd.f32 0.0, %v3447
  %3449 = vdwg.mxu0
  %s3450 = scalar_lea.vmem %s14, 256
  %v3451 = vld [vmem:[%s3450] sm:$0xff]
  %v3452 = vld [vmem:[%s3450 + $0x8] sm:$0xff]
  %v3453 = vld [vmem:[%s3450 + $0x10] sm:$0xff]
  %v3454 = vld [vmem:[%s3450 + $0x18] sm:$0xff]
  %v3455 = vld [vmem:[%s3450 + $0x20] sm:$0xff]
  %v3456 = vld [vmem:[%s3450 + $0x28] sm:$0xff]
  %v3457 = vld [vmem:[%s3450 + $0x30] sm:$0xff]
  %v3458 = vld [vmem:[%s3450 + $0x38] sm:$0xff]
  %v3459 = vld [vmem:[%s3450 + $0x40] sm:$0xff]
  %v3460 = vld [vmem:[%s3450 + $0x48] sm:$0xff]
  %v3461 = vld [vmem:[%s3450 + $0x50] sm:$0xff]
  %v3462 = vld [vmem:[%s3450 + $0x58] sm:$0xff]
  %v3463 = vld [vmem:[%s3450 + $0x60] sm:$0xff]
  %v3464 = vld [vmem:[%s3450 + $0x68] sm:$0xff]
  %v3465 = vld [vmem:[%s3450 + $0x70] sm:$0xff]
  %v3466 = vld [vmem:[%s3450 + $0x78] sm:$0xff]
  %v3467 = vld [vmem:[%s3450 + $0x80] sm:$0xff]
  %v3468 = vld [vmem:[%s3450 + $0x88] sm:$0xff]
  %v3469 = vld [vmem:[%s3450 + $0x90] sm:$0xff]
  %v3470 = vld [vmem:[%s3450 + $0x98] sm:$0xff]
  %v3471 = vld [vmem:[%s3450 + $0xa0] sm:$0xff]
  %v3472 = vld [vmem:[%s3450 + $0xa8] sm:$0xff]
  %v3473 = vld [vmem:[%s3450 + $0xb0] sm:$0xff]
  %v3474 = vld [vmem:[%s3450 + $0xb8] sm:$0xff]
  %v3475 = vld [vmem:[%s3450 + $0xc0] sm:$0xff]
  %v3476 = vld [vmem:[%s3450 + $0xc8] sm:$0xff]
  %v3477 = vld [vmem:[%s3450 + $0xd0] sm:$0xff]
  %v3478 = vld [vmem:[%s3450 + $0xd8] sm:$0xff]
  %v3479 = vld [vmem:[%s3450 + $0xe0] sm:$0xff]
  %v3480 = vld [vmem:[%s3450 + $0xe8] sm:$0xff]
  %v3481 = vld [vmem:[%s3450 + $0xf0] sm:$0xff]
  %v3482 = vld [vmem:[%s3450 + $0xf8] sm:$0xff]
  %3483 = vmatprep.subr.mxu0 0.0
  %3484 = vmatpush1.msra.mxu0 %v3451
  %3485 = vmatprep.subr.mxu0 0.0
  %3486 = vmatpush1.msra.mxu0 %v3452
  %3487 = vmatprep.subr.mxu0 0.0
  %3488 = vmatpush1.msra.mxu0 %v3453
  %3489 = vmatprep.subr.mxu0 0.0
  %3490 = vmatpush1.msra.mxu0 %v3454
  %3491 = vmatprep.subr.mxu0 0.0
  %3492 = vmatpush1.msra.mxu0 %v3455
  %3493 = vmatprep.subr.mxu0 0.0
  %3494 = vmatpush1.msra.mxu0 %v3456
  %3495 = vmatprep.subr.mxu0 0.0
  %3496 = vmatpush1.msra.mxu0 %v3457
  %3497 = vmatprep.subr.mxu0 0.0
  %3498 = vmatpush1.msra.mxu0 %v3458
  %3499 = vmatprep.subr.mxu0 0.0
  %3500 = vmatpush1.msra.mxu0 %v3459
  %3501 = vmatprep.subr.mxu0 0.0
  %3502 = vmatpush1.msra.mxu0 %v3460
  %3503 = vmatprep.subr.mxu0 0.0
  %3504 = vmatpush1.msra.mxu0 %v3461
  %3505 = vmatprep.subr.mxu0 0.0
  %3506 = vmatpush1.msra.mxu0 %v3462
  %3507 = vmatprep.subr.mxu0 0.0
  %3508 = vmatpush1.msra.mxu0 %v3463
  %3509 = vmatprep.subr.mxu0 0.0
  %3510 = vmatpush1.msra.mxu0 %v3464
  %3511 = vmatprep.subr.mxu0 0.0
  %3512 = vmatpush1.msra.mxu0 %v3465
  %3513 = vmatprep.subr.mxu0 0.0
  %3514 = vmatpush1.msra.mxu0 %v3466
  %3515 = vmatprep.subr.mxu0 0.0
  %3516 = vmatpush1.msra.mxu0 %v3467
  %3517 = vmatprep.subr.mxu0 0.0
  %3518 = vmatpush1.msra.mxu0 %v3468
  %3519 = vmatprep.subr.mxu0 0.0
  %3520 = vmatpush1.msra.mxu0 %v3469
  %3521 = vmatprep.subr.mxu0 0.0
  %3522 = vmatpush1.msra.mxu0 %v3470
  %3523 = vmatprep.subr.mxu0 0.0
  %3524 = vmatpush1.msra.mxu0 %v3471
  %3525 = vmatprep.subr.mxu0 0.0
  %3526 = vmatpush1.msra.mxu0 %v3472
  %3527 = vmatprep.subr.mxu0 0.0
  %3528 = vmatpush1.msra.mxu0 %v3473
  %3529 = vmatprep.subr.mxu0 0.0
  %3530 = vmatpush1.msra.mxu0 %v3474
  %3531 = vmatprep.subr.mxu0 0.0
  %3532 = vmatpush1.msra.mxu0 %v3475
  %3533 = vmatprep.subr.mxu0 0.0
  %3534 = vmatpush1.msra.mxu0 %v3476
  %3535 = vmatprep.subr.mxu0 0.0
  %3536 = vmatpush1.msra.mxu0 %v3477
  %3537 = vmatprep.subr.mxu0 0.0
  %3538 = vmatpush1.msra.mxu0 %v3478
  %3539 = vmatprep.subr.mxu0 0.0
  %3540 = vmatpush1.msra.mxu0 %v3479
  %3541 = vmatprep.subr.mxu0 0.0
  %3542 = vmatpush1.msra.mxu0 %v3480
  %3543 = vmatprep.subr.mxu0 0.0
  %3544 = vmatpush1.msra.mxu0 %v3481
  %3545 = vmatprep.subr.mxu0 0.0
  %3546 = vmatpush1.msra.mxu0 %v3482
  %3547 = vmatprep.mubr.f32.mxu0 %v3448
  %3548 = vmatmul.mubr.f32.gmra.mrb[0].mxu0 %v3446
  %v3549 = vpop.f32.mrb[0].mxu0
  %v3550 = vadd.f32 0.0, %v3549
  %v3551 = vpop.f32.mrb[0].mxu0
  %3552 = vdwg.mxu0
  %3553 = vmatprep.subr.mxu0 0.0
  %3554 = vmatpush1.msra.mxu0 %v3342
  %3555 = vmatprep.subr.mxu0 0.0
  %3556 = vmatpush1.msra.mxu0 %v3343
  %3557 = vmatprep.subr.mxu0 0.0
  %3558 = vmatpush1.msra.mxu0 %v3344
  %3559 = vmatprep.subr.mxu0 0.0
  %3560 = vmatpush1.msra.mxu0 %v3345
  %3561 = vmatprep.subr.mxu0 0.0
  %3562 = vmatpush1.msra.mxu0 %v3346
  %3563 = vmatprep.subr.mxu0 0.0
  %3564 = vmatpush1.msra.mxu0 %v3347
  %3565 = vmatprep.subr.mxu0 0.0
  %3566 = vmatpush1.msra.mxu0 %v3348
  %3567 = vmatprep.subr.mxu0 0.0
  %3568 = vmatpush1.msra.mxu0 %v3349
  %3569 = vmatprep.subr.mxu0 0.0
  %3570 = vmatpush1.msra.mxu0 %v3350
  %3571 = vmatprep.subr.mxu0 0.0
  %3572 = vmatpush1.msra.mxu0 %v3351
  %3573 = vmatprep.subr.mxu0 0.0
  %3574 = vmatpush1.msra.mxu0 %v3352
  %3575 = vmatprep.subr.mxu0 0.0
  %3576 = vmatpush1.msra.mxu0 %v3353
  %3577 = vmatprep.subr.mxu0 0.0
  %3578 = vmatpush1.msra.mxu0 %v3354
  %3579 = vmatprep.subr.mxu0 0.0
  %3580 = vmatpush1.msra.mxu0 %v3355
  %3581 = vmatprep.subr.mxu0 0.0
  %3582 = vmatpush1.msra.mxu0 %v3356
  %3583 = vmatprep.subr.mxu0 0.0
  %3584 = vmatpush1.msra.mxu0 %v3357
  %3585 = vmatprep.subr.mxu0 0.0
  %3586 = vmatpush1.msra.mxu0 %v3358
  %3587 = vmatprep.subr.mxu0 0.0
  %3588 = vmatpush1.msra.mxu0 %v3359
  %3589 = vmatprep.subr.mxu0 0.0
  %3590 = vmatpush1.msra.mxu0 %v3360
  %3591 = vmatprep.subr.mxu0 0.0
  %3592 = vmatpush1.msra.mxu0 %v3361
  %3593 = vmatprep.subr.mxu0 0.0
  %3594 = vmatpush1.msra.mxu0 %v3362
  %3595 = vmatprep.subr.mxu0 0.0
  %3596 = vmatpush1.msra.mxu0 %v3363
  %3597 = vmatprep.subr.mxu0 0.0
  %3598 = vmatpush1.msra.mxu0 %v3364
  %3599 = vmatprep.subr.mxu0 0.0
  %3600 = vmatpush1.msra.mxu0 %v3365
  %3601 = vmatprep.subr.mxu0 0.0
  %3602 = vmatpush1.msra.mxu0 %v3366
  %3603 = vmatprep.subr.mxu0 0.0
  %3604 = vmatpush1.msra.mxu0 %v3367
  %3605 = vmatprep.subr.mxu0 0.0
  %3606 = vmatpush1.msra.mxu0 %v3368
  %3607 = vmatprep.subr.mxu0 0.0
  %3608 = vmatpush1.msra.mxu0 %v3369
  %3609 = vmatprep.subr.mxu0 0.0
  %3610 = vmatpush1.msra.mxu0 %v3370
  %3611 = vmatprep.subr.mxu0 0.0
  %3612 = vmatpush1.msra.mxu0 %v3371
  %3613 = vmatprep.subr.mxu0 0.0
  %3614 = vmatpush1.msra.mxu0 %v3372
  %3615 = vmatprep.subr.mxu0 0.0
  %3616 = vmatpush1.msra.mxu0 %v3373
  %3617 = vmatprep.mubr.f32.mxu0 %v3340
  %3618 = vmatmul.mubr.f32.gmra.mrb[0].mxu0 %v3338
  %v3619 = vpop.f32.mrb[0].mxu0
  %v3620 = vadd.f32 %v3550, %v3619
  %v3621 = vpop.f32.mrb[0].mxu0
  %3622 = vdwg.mxu0
  %v3623 = vld [vmem:[%s15] sm:$0x1]
  %v3625 = vlaneseq
  %v3626 = vshrl.u32 %v3625, 7
  %v3627 = vsub.s32 0, %v3626
  %v3628 = vrot.slane %v3623, %v3627
  %v3630 = vadd.f32 %v3620, %v3628
  %v3631 = vmax.f32 %v3630, 0.0
  %v3632 = vld [vmem:[%s16] sm:$0xff]
  %v3633 = vld [vmem:[%s16 + $0x8] sm:$0xff]
  %v3634 = vld [vmem:[%s16 + $0x10] sm:$0xff]
  %v3635 = vld [vmem:[%s16 + $0x18] sm:$0xff]
  %v3636 = vld [vmem:[%s16 + $0x20] sm:$0xff]
  %v3637 = vld [vmem:[%s16 + $0x28] sm:$0xff]
  %v3638 = vld [vmem:[%s16 + $0x30] sm:$0xff]
  %v3639 = vld [vmem:[%s16 + $0x38] sm:$0xff]
  %v3640 = vld [vmem:[%s16 + $0x40] sm:$0xff]
  %v3641 = vld [vmem:[%s16 + $0x48] sm:$0xff]
  %v3642 = vld [vmem:[%s16 + $0x50] sm:$0xff]
  %v3643 = vld [vmem:[%s16 + $0x58] sm:$0xff]
  %v3644 = vld [vmem:[%s16 + $0x60] sm:$0xff]
  %v3645 = vld [vmem:[%s16 + $0x68] sm:$0xff]
  %v3646 = vld [vmem:[%s16 + $0x70] sm:$0xff]
  %v3647 = vld [vmem:[%s16 + $0x78] sm:$0xff]
  %v3648 = vld [vmem:[%s16 + $0x80] sm:$0xff]
  %v3649 = vld [vmem:[%s16 + $0x88] sm:$0xff]
  %v3650 = vld [vmem:[%s16 + $0x90] sm:$0xff]
  %v3651 = vld [vmem:[%s16 + $0x98] sm:$0xff]
  %v3652 = vld [vmem:[%s16 + $0xa0] sm:$0xff]
  %v3653 = vld [vmem:[%s16 + $0xa8] sm:$0xff]
  %v3654 = vld [vmem:[%s16 + $0xb0] sm:$0xff]
  %v3655 = vld [vmem:[%s16 + $0xb8] sm:$0xff]
  %v3656 = vld [vmem:[%s16 + $0xc0] sm:$0xff]
  %v3657 = vld [vmem:[%s16 + $0xc8] sm:$0xff]
  %v3658 = vld [vmem:[%s16 + $0xd0] sm:$0xff]
  %v3659 = vld [vmem:[%s16 + $0xd8] sm:$0xff]
  %v3660 = vld [vmem:[%s16 + $0xe0] sm:$0xff]
  %v3661 = vld [vmem:[%s16 + $0xe8] sm:$0xff]
  %v3662 = vld [vmem:[%s16 + $0xf0] sm:$0xff]
  %v3663 = vld [vmem:[%s16 + $0xf8] sm:$0xff]
  %v3664 = vld [vmem:[%s16 + $0x100] sm:$0xff]
  %v3665 = vld [vmem:[%s16 + $0x108] sm:$0xff]
  %v3666 = vld [vmem:[%s16 + $0x110] sm:$0xff]
  %v3667 = vld [vmem:[%s16 + $0x118] sm:$0xff]
  %v3668 = vld [vmem:[%s16 + $0x120] sm:$0xff]
  %v3669 = vld [vmem:[%s16 + $0x128] sm:$0xff]
  %v3670 = vld [vmem:[%s16 + $0x130] sm:$0xff]
  %v3671 = vld [vmem:[%s16 + $0x138] sm:$0xff]
  %v3672 = vld [vmem:[%s16 + $0x140] sm:$0xff]
  %v3673 = vld [vmem:[%s16 + $0x148] sm:$0xff]
  %v3674 = vld [vmem:[%s16 + $0x150] sm:$0xff]
  %v3675 = vld [vmem:[%s16 + $0x158] sm:$0xff]
  %v3676 = vld [vmem:[%s16 + $0x160] sm:$0xff]
  %v3677 = vld [vmem:[%s16 + $0x168] sm:$0xff]
  %v3678 = vld [vmem:[%s16 + $0x170] sm:$0xff]
  %v3679 = vld [vmem:[%s16 + $0x178] sm:$0xff]
  %v3680 = vld [vmem:[%s16 + $0x180] sm:$0xff]
  %v3681 = vld [vmem:[%s16 + $0x188] sm:$0xff]
  %v3682 = vld [vmem:[%s16 + $0x190] sm:$0xff]
  %v3683 = vld [vmem:[%s16 + $0x198] sm:$0xff]
  %v3684 = vld [vmem:[%s16 + $0x1a0] sm:$0xff]
  %v3685 = vld [vmem:[%s16 + $0x1a8] sm:$0xff]
  %v3686 = vld [vmem:[%s16 + $0x1b0] sm:$0xff]
  %v3687 = vld [vmem:[%s16 + $0x1b8] sm:$0xff]
  %v3688 = vld [vmem:[%s16 + $0x1c0] sm:$0xff]
  %v3689 = vld [vmem:[%s16 + $0x1c8] sm:$0xff]
  %v3690 = vld [vmem:[%s16 + $0x1d0] sm:$0xff]
  %v3691 = vld [vmem:[%s16 + $0x1d8] sm:$0xff]
  %v3692 = vld [vmem:[%s16 + $0x1e0] sm:$0xff]
  %v3693 = vld [vmem:[%s16 + $0x1e8] sm:$0xff]
  %v3694 = vld [vmem:[%s16 + $0x1f0] sm:$0xff]
  %v3695 = vld [vmem:[%s16 + $0x1f8] sm:$0xff]
  %v3696 = vld [vmem:[%s16 + $0x200] sm:$0xff]
  %v3697 = vld [vmem:[%s16 + $0x208] sm:$0xff]
  %v3698 = vld [vmem:[%s16 + $0x210] sm:$0xff]
  %v3699 = vld [vmem:[%s16 + $0x218] sm:$0xff]
  %v3700 = vld [vmem:[%s16 + $0x220] sm:$0xff]
  %v3701 = vld [vmem:[%s16 + $0x228] sm:$0xff]
  %v3702 = vld [vmem:[%s16 + $0x230] sm:$0xff]
  %v3703 = vld [vmem:[%s16 + $0x238] sm:$0xff]
  %v3704 = vld [vmem:[%s16 + $0x240] sm:$0xff]
  %v3705 = vld [vmem:[%s16 + $0x248] sm:$0xff]
  %v3706 = vld [vmem:[%s16 + $0x250] sm:$0xff]
  %v3707 = vld [vmem:[%s16 + $0x258] sm:$0xff]
  %v3708 = vld [vmem:[%s16 + $0x260] sm:$0xff]
  %v3709 = vld [vmem:[%s16 + $0x268] sm:$0xff]
  %v3710 = vld [vmem:[%s16 + $0x270] sm:$0xff]
  %v3711 = vld [vmem:[%s16 + $0x278] sm:$0xff]
  %v3712 = vld [vmem:[%s16 + $0x280] sm:$0xff]
  %v3713 = vld [vmem:[%s16 + $0x288] sm:$0xff]
  %v3714 = vld [vmem:[%s16 + $0x290] sm:$0xff]
  %v3715 = vld [vmem:[%s16 + $0x298] sm:$0xff]
  %v3716 = vld [vmem:[%s16 + $0x2a0] sm:$0xff]
  %v3717 = vld [vmem:[%s16 + $0x2a8] sm:$0xff]
  %v3718 = vld [vmem:[%s16 + $0x2b0] sm:$0xff]
  %v3719 = vld [vmem:[%s16 + $0x2b8] sm:$0xff]
  %v3720 = vld [vmem:[%s16 + $0x2c0] sm:$0xff]
  %v3721 = vld [vmem:[%s16 + $0x2c8] sm:$0xff]
  %v3722 = vld [vmem:[%s16 + $0x2d0] sm:$0xff]
  %v3723 = vld [vmem:[%s16 + $0x2d8] sm:$0xff]
  %v3724 = vld [vmem:[%s16 + $0x2e0] sm:$0xff]
  %v3725 = vld [vmem:[%s16 + $0x2e8] sm:$0xff]
  %v3726 = vld [vmem:[%s16 + $0x2f0] sm:$0xff]
  %v3727 = vld [vmem:[%s16 + $0x2f8] sm:$0xff]
  %v3728 = vld [vmem:[%s17] sm:$0x3f]
  %v3730 = vlaneseq
  %v3731 = vshrl.u32 %v3730, 7
  %v3732 = vsub.s32 0, %v3731
  %v3733 = vrot.slane %v3728, %v3732
  %v3734 = vlaneseq
  %v3735 = vshrl.u32 %v3734, 7
  %v3736 = vsub.s32 1, %v3735
  %v3737 = vrot.slane %v3728, %v3736
  %v3738 = vlaneseq
  %v3739 = vshrl.u32 %v3738, 7
  %v3740 = vsub.s32 2, %v3739
  %v3741 = vrot.slane %v3728, %v3740
  %v3742 = vlaneseq
  %v3743 = vshrl.u32 %v3742, 7
  %v3744 = vsub.s32 3, %v3743
  %v3745 = vrot.slane %v3728, %v3744
  %v3746 = vlaneseq
  %v3747 = vshrl.u32 %v3746, 7
  %v3748 = vsub.s32 4, %v3747
  %v3749 = vrot.slane %v3728, %v3748
  %v3750 = vlaneseq
  %v3751 = vshrl.u32 %v3750, 7
  %v3752 = vsub.s32 5, %v3751
  %v3753 = vrot.slane %v3728, %v3752
  %3760 = vmatprep.subr.mxu0 %v3633
  %3761 = vmatpush1.msra.mxu0 %v3632
  %3762 = vmatprep.subr.mxu0 %v3639
  %3763 = vmatpush1.msra.mxu0 %v3638
  %3764 = vmatprep.subr.mxu0 %v3645
  %3765 = vmatpush1.msra.mxu0 %v3644
  %3766 = vmatprep.subr.mxu0 %v3651
  %3767 = vmatpush1.msra.mxu0 %v3650
  %3768 = vmatprep.subr.mxu0 %v3657
  %3769 = vmatpush1.msra.mxu0 %v3656
  %3770 = vmatprep.subr.mxu0 %v3663
  %3771 = vmatpush1.msra.mxu0 %v3662
  %3772 = vmatprep.subr.mxu0 %v3669
  %3773 = vmatpush1.msra.mxu0 %v3668
  %3774 = vmatprep.subr.mxu0 %v3675
  %3775 = vmatpush1.msra.mxu0 %v3674
  %3776 = vmatprep.subr.mxu0 %v3681
  %3777 = vmatpush1.msra.mxu0 %v3680
  %3778 = vmatprep.subr.mxu0 %v3687
  %3779 = vmatpush1.msra.mxu0 %v3686
  %3780 = vmatprep.subr.mxu0 %v3693
  %3781 = vmatpush1.msra.mxu0 %v3692
  %3782 = vmatprep.subr.mxu0 %v3699
  %3783 = vmatpush1.msra.mxu0 %v3698
  %3784 = vmatprep.subr.mxu0 %v3705
  %3785 = vmatpush1.msra.mxu0 %v3704
  %3786 = vmatprep.subr.mxu0 %v3711
  %3787 = vmatpush1.msra.mxu0 %v3710
  %3788 = vmatprep.subr.mxu0 %v3717
  %3789 = vmatpush1.msra.mxu0 %v3716
  %3790 = vmatprep.subr.mxu0 %v3723
  %3791 = vmatpush1.msra.mxu0 %v3722
  %3792 = vmatprep.subr.mxu0 0.0
  %3793 = vmatpush1.msra.mxu0 0.0
  %3794 = vmatprep.subr.mxu0 0.0
  %3795 = vmatpush1.msra.mxu0 0.0
  %3796 = vmatprep.subr.mxu0 0.0
  %3797 = vmatpush1.msra.mxu0 0.0
  %3798 = vmatprep.subr.mxu0 0.0
  %3799 = vmatpush1.msra.mxu0 0.0
  %3800 = vmatprep.subr.mxu0 0.0
  %3801 = vmatpush1.msra.mxu0 0.0
  %3802 = vmatprep.subr.mxu0 0.0
  %3803 = vmatpush1.msra.mxu0 0.0
  %3804 = vmatprep.subr.mxu0 0.0
  %3805 = vmatpush1.msra.mxu0 0.0
  %3806 = vmatprep.subr.mxu0 0.0
  %3807 = vmatpush1.msra.mxu0 0.0
  %3808 = vmatprep.subr.mxu0 0.0
  %3809 = vmatpush1.msra.mxu0 0.0
  %3810 = vmatprep.subr.mxu0 0.0
  %3811 = vmatpush1.msra.mxu0 0.0
  %3812 = vmatprep.subr.mxu0 0.0
  %3813 = vmatpush1.msra.mxu0 0.0
  %3814 = vmatprep.subr.mxu0 0.0
  %3815 = vmatpush1.msra.mxu0 0.0
  %3816 = vmatprep.subr.mxu0 0.0
  %3817 = vmatpush1.msra.mxu0 0.0
  %3818 = vmatprep.subr.mxu0 0.0
  %3819 = vmatpush1.msra.mxu0 0.0
  %3820 = vmatprep.subr.mxu0 0.0
  %3821 = vmatpush1.msra.mxu0 0.0
  %3822 = vmatprep.subr.mxu0 0.0
  %3823 = vmatpush1.msra.mxu0 0.0
  %3824 = vmatprep.mubr.f32.mxu0 0.0
  %3825 = vmatmul.mubr.f32.gmra.mrb[0].mxu0 %v3631
  %v3826 = vpop.f32.mrb[0].mxu0
  %v3827 = vadd.f32 %v3733, %v3826
  %v3828 = vpop.f32.mrb[0].mxu0
  %v3829 = vadd.f32 %v3737, %v3828
  %3830 = vdwg.mxu0
  %3831 = vmatprep.subr.mxu0 %v3635
  %3832 = vmatpush1.msra.mxu0 %v3634
  %3833 = vmatprep.subr.mxu0 %v3641
  %3834 = vmatpush1.msra.mxu0 %v3640
  %3835 = vmatprep.subr.mxu0 %v3647
  %3836 = vmatpush1.msra.mxu0 %v3646
  %3837 = vmatprep.subr.mxu0 %v3653
  %3838 = vmatpush1.msra.mxu0 %v3652
  %3839 = vmatprep.subr.mxu0 %v3659
  %3840 = vmatpush1.msra.mxu0 %v3658
  %3841 = vmatprep.subr.mxu0 %v3665
  %3842 = vmatpush1.msra.mxu0 %v3664
  %3843 = vmatprep.subr.mxu0 %v3671
  %3844 = vmatpush1.msra.mxu0 %v3670
  %3845 = vmatprep.subr.mxu0 %v3677
  %3846 = vmatpush1.msra.mxu0 %v3676
  %3847 = vmatprep.subr.mxu0 %v3683
  %3848 = vmatpush1.msra.mxu0 %v3682
  %3849 = vmatprep.subr.mxu0 %v3689
  %3850 = vmatpush1.msra.mxu0 %v3688
  %3851 = vmatprep.subr.mxu0 %v3695
  %3852 = vmatpush1.msra.mxu0 %v3694
  %3853 = vmatprep.subr.mxu0 %v3701
  %3854 = vmatpush1.msra.mxu0 %v3700
  %3855 = vmatprep.subr.mxu0 %v3707
  %3856 = vmatpush1.msra.mxu0 %v3706
  %3857 = vmatprep.subr.mxu0 %v3713
  %3858 = vmatpush1.msra.mxu0 %v3712
  %3859 = vmatprep.subr.mxu0 %v3719
  %3860 = vmatpush1.msra.mxu0 %v3718
  %3861 = vmatprep.subr.mxu0 %v3725
  %3862 = vmatpush1.msra.mxu0 %v3724
  %3863 = vmatprep.subr.mxu0 0.0
  %3864 = vmatpush1.msra.mxu0 0.0
  %3865 = vmatprep.subr.mxu0 0.0
  %3866 = vmatpush1.msra.mxu0 0.0
  %3867 = vmatprep.subr.mxu0 0.0
  %3868 = vmatpush1.msra.mxu0 0.0
  %3869 = vmatprep.subr.mxu0 0.0
  %3870 = vmatpush1.msra.mxu0 0.0
  %3871 = vmatprep.subr.mxu0 0.0
  %3872 = vmatpush1.msra.mxu0 0.0
  %3873 = vmatprep.subr.mxu0 0.0
  %3874 = vmatpush1.msra.mxu0 0.0
  %3875 = vmatprep.subr.mxu0 0.0
  %3876 = vmatpush1.msra.mxu0 0.0
  %3877 = vmatprep.subr.mxu0 0.0
  %3878 = vmatpush1.msra.mxu0 0.0
  %3879 = vmatprep.subr.mxu0 0.0
  %3880 = vmatpush1.msra.mxu0 0.0
  %3881 = vmatprep.subr.mxu0 0.0
  %3882 = vmatpush1.msra.mxu0 0.0
  %3883 = vmatprep.subr.mxu0 0.0
  %3884 = vmatpush1.msra.mxu0 0.0
  %3885 = vmatprep.subr.mxu0 0.0
  %3886 = vmatpush1.msra.mxu0 0.0
  %3887 = vmatprep.subr.mxu0 0.0
  %3888 = vmatpush1.msra.mxu0 0.0
  %3889 = vmatprep.subr.mxu0 0.0
  %3890 = vmatpush1.msra.mxu0 0.0
  %3891 = vmatprep.subr.mxu0 0.0
  %3892 = vmatpush1.msra.mxu0 0.0
  %3893 = vmatprep.subr.mxu0 0.0
  %3894 = vmatpush1.msra.mxu0 0.0
  %3895 = vmatprep.mubr.f32.mxu0 0.0
  %3896 = vmatmul.mubr.f32.gmra.mrb[0].mxu0 %v3631
  %v3897 = vpop.f32.mrb[0].mxu0
  %v3898 = vadd.f32 %v3741, %v3897
  %v3899 = vpop.f32.mrb[0].mxu0
  %v3900 = vadd.f32 %v3745, %v3899
  %3901 = vdwg.mxu0
  %3902 = vmatprep.subr.mxu0 %v3637
  %3903 = vmatpush1.msra.mxu0 %v3636
  %3904 = vmatprep.subr.mxu0 %v3643
  %3905 = vmatpush1.msra.mxu0 %v3642
  %3906 = vmatprep.subr.mxu0 %v3649
  %3907 = vmatpush1.msra.mxu0 %v3648
  %3908 = vmatprep.subr.mxu0 %v3655
  %3909 = vmatpush1.msra.mxu0 %v3654
  %3910 = vmatprep.subr.mxu0 %v3661
  %3911 = vmatpush1.msra.mxu0 %v3660
  %3912 = vmatprep.subr.mxu0 %v3667
  %3913 = vmatpush1.msra.mxu0 %v3666
  %3914 = vmatprep.subr.mxu0 %v3673
  %3915 = vmatpush1.msra.mxu0 %v3672
  %3916 = vmatprep.subr.mxu0 %v3679
  %3917 = vmatpush1.msra.mxu0 %v3678
  %3918 = vmatprep.subr.mxu0 %v3685
  %3919 = vmatpush1.msra.mxu0 %v3684
  %3920 = vmatprep.subr.mxu0 %v3691
  %3921 = vmatpush1.msra.mxu0 %v3690
  %3922 = vmatprep.subr.mxu0 %v3697
  %3923 = vmatpush1.msra.mxu0 %v3696
  %3924 = vmatprep.subr.mxu0 %v3703
  %3925 = vmatpush1.msra.mxu0 %v3702
  %3926 = vmatprep.subr.mxu0 %v3709
  %3927 = vmatpush1.msra.mxu0 %v3708
  %3928 = vmatprep.subr.mxu0 %v3715
  %3929 = vmatpush1.msra.mxu0 %v3714
  %3930 = vmatprep.subr.mxu0 %v3721
  %3931 = vmatpush1.msra.mxu0 %v3720
  %3932 = vmatprep.subr.mxu0 %v3727
  %3933 = vmatpush1.msra.mxu0 %v3726
  %3934 = vmatprep.subr.mxu0 0.0
  %3935 = vmatpush1.msra.mxu0 0.0
  %3936 = vmatprep.subr.mxu0 0.0
  %3937 = vmatpush1.msra.mxu0 0.0
  %3938 = vmatprep.subr.mxu0 0.0
  %3939 = vmatpush1.msra.mxu0 0.0
  %3940 = vmatprep.subr.mxu0 0.0
  %3941 = vmatpush1.msra.mxu0 0.0
  %3942 = vmatprep.subr.mxu0 0.0
  %3943 = vmatpush1.msra.mxu0 0.0
  %3944 = vmatprep.subr.mxu0 0.0
  %3945 = vmatpush1.msra.mxu0 0.0
  %3946 = vmatprep.subr.mxu0 0.0
  %3947 = vmatpush1.msra.mxu0 0.0
  %3948 = vmatprep.subr.mxu0 0.0
  %3949 = vmatpush1.msra.mxu0 0.0
  %3950 = vmatprep.subr.mxu0 0.0
  %3951 = vmatpush1.msra.mxu0 0.0
  %3952 = vmatprep.subr.mxu0 0.0
  %3953 = vmatpush1.msra.mxu0 0.0
  %3954 = vmatprep.subr.mxu0 0.0
  %3955 = vmatpush1.msra.mxu0 0.0
  %3956 = vmatprep.subr.mxu0 0.0
  %3957 = vmatpush1.msra.mxu0 0.0
  %3958 = vmatprep.subr.mxu0 0.0
  %3959 = vmatpush1.msra.mxu0 0.0
  %3960 = vmatprep.subr.mxu0 0.0
  %3961 = vmatpush1.msra.mxu0 0.0
  %3962 = vmatprep.subr.mxu0 0.0
  %3963 = vmatpush1.msra.mxu0 0.0
  %3964 = vmatprep.subr.mxu0 0.0
  %3965 = vmatpush1.msra.mxu0 0.0
  %3966 = vmatprep.mubr.f32.mxu0 0.0
  %3967 = vmatmul.mubr.f32.gmra.mrb[0].mxu0 %v3631
  %v3968 = vpop.f32.mrb[0].mxu0
  %v3969 = vadd.f32 %v3749, %v3968
  %v3970 = vpop.f32.mrb[0].mxu0
  %v3971 = vadd.f32 %v3753, %v3970
  %3972 = vdwg.mxu0
  %v3979 = vcombine.low %v3827, %v3829
  %v3980 = vcombine.low %v3898, %v3900
  %v3982 = vunpack.c.l.s4 1983009808
  %v3983 = vunpack.c.0.s8 %v3982
  %v3984 = vlaneseq
  %v3985 = vshrl.u32 %v3984, 7
  %v3986 = vsub.s32 %v3983, %v3985
  %v3987 = vrot.slane %v3979, %v3986
  %v3989 = vunpack.c.l.s4 1983009808
  %v3990 = vunpack.c.0.s8 %v3989
  %v3991 = vlaneseq
  %v3992 = vshrl.u32 %v3991, 7
  %v3993 = vsub.s32 %v3990, %v3992
  %v3994 = vrot.slane %v3980, %v3993
  %v3995 = vcombine.low %v3987, %v3994
  %v3996 = vcombine.low %v3969, %v3971
  %v3998 = vunpack.c.l.s4 1983009808
  %v3999 = vunpack.c.0.s8 %v3998
  %v4000 = vlaneseq
  %v4001 = vshrl.u32 %v4000, 7
  %v4002 = vsub.s32 %v3999, %v4001
  %v4003 = vrot.slane %v3996, %v4002
  %4006 = vst [vmem:[%s18] sm:$0xff] %v3995
  %4007 = vst [vmem:[%s18 + $0x8] sm:$0xf] %v4003
  // Predicated region
  $region74: #{simple_cnn_forward.1} parent=0 // pred_check
    _
  $region75: #{simple_cnn_forward.1} parent=0 // pred_check_branch
    %4009 = sbr.rel (0) target = $region77
  $region76: #{simple_cnn_forward.1} parent=0 // pred_region
    _
  $region77: #{simple_cnn_forward.1} parent=0 // pred_fallthru
    _
  // Predicated region
  $region78: #{simple_cnn_forward.1} parent=0 // pred_check
    _
  $region79: #{simple_cnn_forward.1} parent=0 // pred_check_branch
    %4011 = sbr.rel (0) target = $region81
  $region80: #{simple_cnn_forward.1} parent=0 // pred_region
    _
  $region81: #{simple_cnn_forward.1} parent=0 // pred_fallthru
    _

</llo_original>
